<compile_context>
chip_gen: v5e
topology: v5e:2x2
jax: 0.10.0
libtpu: 0.0.40
codegen_flags: <defaults>
</compile_context>

<pallas_src>
import functools

import jax
import jax.numpy as jnp
from jax.experimental import pallas as pl
from jax.experimental.pallas import tpu as pltpu


def _round_up(n, m):
    return ((n + m - 1) // m) * m


def lstm_agg_kernel(x_ref, wih_ref, whh_ref, b_ref, wlin_ref, blin_ref, out_ref):
    # x_ref:    (TB, T, F)   input tile (f32 or bf16)
    # wih_ref:  (F, 4H)      transposed W_ih (f32 or bf16)
    # whh_ref:  (H, 4H)      transposed W_hh (f32 or bf16)
    # b_ref:    (1, 4H)      b_ih + b_hh (f32)
    # wlin_ref: (H, 4)       transposed linear weight (f32)
    # blin_ref: (1, 4)       linear bias (f32)
    # out_ref:  (TB, F)      output tile (f32)
    TB, T, F = x_ref.shape
    H = F
    cdt = wih_ref.dtype  # MXU compute dtype

    # ---- hoisted input projection: one MXU call over all TB*T rows ---------
    x_flat = x_ref[...].reshape(TB * T, F).astype(cdt)
    gates_x = jnp.dot(x_flat, wih_ref[...], preferred_element_type=jnp.float32)
    gates_x = (gates_x + b_ref[...]).reshape(TB, T, 4 * H)

    # Static lane mask selecting the "g" (cell candidate) gate: tanh there,
    # sigmoid elsewhere.  Hoisted out of the loop (broadcasts are not CSE'd).
    lane = jax.lax.broadcasted_iota(jnp.int32, (TB, 4 * H), 1)
    g_mask = (lane >= 2 * H) & (lane < 3 * H)

    h = jnp.zeros((TB, H), jnp.float32)
    c = jnp.zeros((TB, H), jnp.float32)

    # T == 4 and static -> fully unrolled recurrence (PyTorch gate order i,f,g,o).
    for t in range(T):
        gates = gates_x[:, t, :] + jnp.dot(
            h.astype(cdt), whh_ref[...], preferred_element_type=jnp.float32)
        # Full-width nonlinearities (EUP slot is otherwise idle) + one blend.
        act = jnp.where(g_mask, jnp.tanh(gates), jax.nn.sigmoid(gates))
        i_g = act[:, 0 * H:1 * H]
        f_g = act[:, 1 * H:2 * H]
        g_g = act[:, 2 * H:3 * H]
        o_g = act[:, 3 * H:4 * H]
        c = f_g * c + i_g * g_g
        h = o_g * jnp.tanh(c)

    # ---- linear head + softmax over the 4 logits (kept in f32) -------------
    logits = jnp.dot(h, wlin_ref[...], preferred_element_type=jnp.float32) + blin_ref[...]
    m = jnp.max(logits, axis=1, keepdims=True)
    e = jnp.exp(logits - m)
    inv = pl.reciprocal(jnp.sum(e, axis=1, keepdims=True), approx=True)
    w = e * inv * (1.0 / T)  # fold the 1/T of the temporal mean into the weights

    # ---- weighted temporal mean; re-load x from VMEM (keeps vreg pressure
    # low across the recurrence; spare vld slots make these loads free) -------
    acc = jnp.zeros((TB, F), jnp.float32)
    for t in range(T):
        acc = acc + x_ref[:, t, :].astype(jnp.float32) * w[:, t:t + 1]
    out_ref[...] = acc.astype(out_ref.dtype)


@functools.partial(jax.jit, static_argnames=("tile_b", "use_bf16"))
def lstm_aggregation_weights(x, params, *, tile_b=8, use_bf16=False):
    """x: (B, T, F) float32.  params: dict of PyTorch-shaped parameters."""
    B, T, F = x.shape
    H = F
    assert T == 4, "module broadcasts (B, 4) softmax weights over time -> T must be 4"

    cdt = jnp.bfloat16 if use_bf16 else jnp.float32
    wih_t = params["weight_ih"].T.astype(cdt)                              # (F, 4H)
    whh_t = params["weight_hh"].T.astype(cdt)                              # (H, 4H)
    b = (params["bias_ih"] + params["bias_hh"]).reshape(1, -1).astype(jnp.float32)
    wlin_t = params["linear_w"].T.astype(jnp.float32)                      # (H, 4)
    blin = params["linear_b"].reshape(1, -1).astype(jnp.float32)           # (1, 4)
    x_in = x.astype(cdt)

    # ---- batch tiling (sublane-aligned); pad B, drop padded rows at the end.
    tile_b = _round_up(max(8, min(tile_b, _round_up(B, 8))), 8)
    pb = _round_up(B, tile_b)
    if pb != B:
        x_in = jnp.pad(x_in, ((0, pb - B), (0, 0), (0, 0)))
    grid = (pl.cdiv(pb, tile_b),)

    out = pl.pallas_call(
        lstm_agg_kernel,
        out_shape=jax.ShapeDtypeStruct((pb, F), jnp.float32),
        grid=grid,
        in_specs=[
            pl.BlockSpec((tile_b, T, F), lambda i: (i, 0, 0)),     # x tile
            pl.BlockSpec((F, 4 * H), lambda i: (0, 0)),            # W_ih^T (replicated)
            pl.BlockSpec((H, 4 * H), lambda i: (0, 0)),            # W_hh^T (replicated)
            pl.BlockSpec((1, 4 * H), lambda i: (0, 0)),            # fused bias
            pl.BlockSpec((H, 4), lambda i: (0, 0)),                # linear W^T
            pl.BlockSpec((1, 4), lambda i: (0, 0)),                # linear bias
        ],
        out_specs=pl.BlockSpec((tile_b, F), lambda i: (i, 0)),
        compiler_params=pltpu.CompilerParams(
            dimension_semantics=("parallel",),      # megacore-shard the batch axis
            vmem_limit_bytes=32 * 1024 * 1024,      # safe on v5e/v6e and v7x (64 MiB)
        ),
    )(x_in, wih_t, whh_t, b, wlin_t, blin)
    return out[:B]


def reference_forward(x, params):
    """Pure-JAX reference matching torch semantics exactly (f32 everywhere)."""
    B, T, F = x.shape
    H = F
    wih_t = params["weight_ih"].T
    whh_t = params["weight_hh"].T
    b = params["bias_ih"] + params["bias_hh"]
    h = jnp.zeros((B, H), jnp.float32)
    c = jnp.zeros((B, H), jnp.float32)
    for t in range(T):
        gates = x[:, t, :] @ wih_t + h @ whh_t + b
        i_g = jax.nn.sigmoid(gates[:, 0 * H:1 * H])
        f_g = jax.nn.sigmoid(gates[:, 1 * H:2 * H])
        g_g = jnp.tanh(gates[:, 2 * H:3 * H])
        o_g = jax.nn.sigmoid(gates[:, 3 * H:4 * H])
        c = f_g * c + i_g * g_g
        h = o_g * jnp.tanh(c)
    logits = h @ params["linear_w"].T + params["linear_b"]
    w = jax.nn.softmax(logits, axis=1)
    return jnp.mean(x * w[:, :, None], axis=1)


if __name__ == "__main__":
    # T must be 4 (the module broadcasts (B, 4) softmax weights over time).
    # F = 128 keeps gate slices vreg-aligned and the output store lane-dense.
    # B = 20 with tile_b = 8 exercises both the batch grid (3 steps) and tail padding.
    B, T, F = 20, 4, 128
    H = F

    key = jax.random.PRNGKey(0)
    ks = jax.random.split(key, 7)
    scale = 1.0 / (H ** 0.5)  # matches nn.LSTM's U(-1/sqrt(H), 1/sqrt(H)) init range
    params = {
        "weight_ih": jax.random.uniform(ks[0], (4 * H, F), jnp.float32, -scale, scale),
        "weight_hh": jax.random.uniform(ks[1], (4 * H, H), jnp.float32, -scale, scale),
        "bias_ih":   jax.random.uniform(ks[2], (4 * H,), jnp.float32, -scale, scale),
        "bias_hh":   jax.random.uniform(ks[3], (4 * H,), jnp.float32, -scale, scale),
        "linear_w":  jax.random.uniform(ks[4], (4, F), jnp.float32, -scale, scale),
        "linear_b":  jax.random.uniform(ks[5], (4,), jnp.float32, -scale, scale),
    }
    x = jax.random.normal(ks[6], (B, T, F), jnp.float32)

    ref = reference_forward(x, params)

    # f32 MXU path (tolerance covers the approx softmax reciprocal).
    out = jax.block_until_ready(lstm_aggregation_weights(x, params, tile_b=8))
    assert out.shape == (B, F)
    assert jnp.allclose(out, ref, atol=5e-3, rtol=5e-3), "f32 kernel mismatch vs reference"

    # bf16 MXU path (f32 accumulation / gate math / softmax), looser tolerance.
    out_bf16 = jax.block_until_ready(
        lstm_aggregation_weights(x, params, tile_b=8, use_bf16=True))
    assert out_bf16.shape == (B, F)
    assert jnp.allclose(out_bf16, ref, atol=5e-2, rtol=5e-2), "bf16 kernel mismatch vs reference"

    print("KERNEL_OK")
</pallas_src>

<mosaic_0001>
module attributes {stable_mosaic.version = 11 : i64} {
  func.func @lstm_agg_kernel(%arg0: i32, %arg1: memref<8x4x128xf32, #tpu.memory_space<vmem>>, %arg2: memref<128x512xf32, #tpu.memory_space<vmem>>, %arg3: memref<128x512xf32, #tpu.memory_space<vmem>>, %arg4: memref<1x512xf32, #tpu.memory_space<vmem>>, %arg5: memref<128x4xf32, #tpu.memory_space<vmem>>, %arg6: memref<1x4xf32, #tpu.memory_space<vmem>>, %arg7: memref<8x128xf32, #tpu.memory_space<vmem>>) attributes {dimension_semantics = [#tpu.dimension_semantics<parallel>], iteration_bounds = array<i64: 3>, scalar_prefetch = 0 : i64, scratch_operands = 0 : i64, tpu.core_type = #tpu.core_type<tc>, window_params = [{transform_indices = @transform_0, window_bounds = array<i64: 8, 4, 128>}, {pipeline_mode = #tpu.pipeline_mode<synchronous>, transform_indices = @transform_1, window_bounds = array<i64: 128, 512>}, {pipeline_mode = #tpu.pipeline_mode<synchronous>, transform_indices = @transform_2, window_bounds = array<i64: 128, 512>}, {pipeline_mode = #tpu.pipeline_mode<synchronous>, transform_indices = @transform_3, window_bounds = array<i64: 1, 512>}, {pipeline_mode = #tpu.pipeline_mode<synchronous>, transform_indices = @transform_4, window_bounds = array<i64: 128, 4>}, {pipeline_mode = #tpu.pipeline_mode<synchronous>, transform_indices = @transform_5, window_bounds = array<i64: 1, 4>}, {transform_indices = @transform_6, window_bounds = array<i64: 8, 128>}]} {
    %c0 = arith.constant 0 : index
    %c0_0 = arith.constant 0 : index
    %c0_1 = arith.constant 0 : index
    %0 = vector.load %arg1[%c0, %c0_0, %c0_1] : memref<8x4x128xf32, #tpu.memory_space<vmem>>, vector<8x4x128xf32>
    %1 = vector.shape_cast %0 : vector<8x4x128xf32> to vector<32x128xf32>
    %c0_2 = arith.constant 0 : index
    %c0_3 = arith.constant 0 : index
    %2 = vector.load %arg2[%c0_2, %c0_3] : memref<128x512xf32, #tpu.memory_space<vmem>>, vector<128x512xf32>
    %cst = arith.constant dense<0.000000e+00> : vector<32x512xf32>
    %3 = tpu.matmul %1, %2, %cst {dimension_numbers = #tpu.dot_dimension_numbers<[1], [0], [0], [1], [0, 0, 1, 1], [], []>} : vector<32x128xf32>, vector<128x512xf32>, vector<32x512xf32> -> vector<32x512xf32>
    %c0_4 = arith.constant 0 : index
    %c0_5 = arith.constant 0 : index
    %4 = vector.load %arg4[%c0_4, %c0_5] : memref<1x512xf32, #tpu.memory_space<vmem>>, vector<1x512xf32>
    %5 = vector.broadcast %4 : vector<1x512xf32> to vector<32x512xf32>
    %6 = arith.addf %3, %5 : vector<32x512xf32>
    %7 = vector.shape_cast %6 : vector<32x512xf32> to vector<8x4x512xf32>
    %8 = tpu.iota {dimensions = array<i32: 1>} : vector<8x512xi32>
    %c256_i32 = arith.constant 256 : i32
    %9 = vector.broadcast %c256_i32 : i32 to vector<8x512xi32>
    %10 = arith.cmpi sge, %8, %9 : vector<8x512xi32>
    %c384_i32 = arith.constant 384 : i32
    %11 = vector.broadcast %c384_i32 : i32 to vector<8x512xi32>
    %12 = arith.cmpi slt, %8, %11 : vector<8x512xi32>
    %13 = arith.andi %10, %12 : vector<8x512xi1>
    %cst_6 = arith.constant 0.000000e+00 : f32
    %14 = vector.broadcast %cst_6 : f32 to vector<8x128xf32>
    %cst_7 = arith.constant 0.000000e+00 : f32
    %15 = vector.broadcast %cst_7 : f32 to vector<8x128xf32>
    %16 = vector.extract_strided_slice %7 {offsets = [0, 0, 0], sizes = [8, 1, 512], strides = [1, 1, 1]} : vector<8x4x512xf32> to vector<8x1x512xf32>
    %17 = vector.shape_cast %16 : vector<8x1x512xf32> to vector<8x512xf32>
    %c0_8 = arith.constant 0 : index
    %c0_9 = arith.constant 0 : index
    %18 = vector.load %arg3[%c0_8, %c0_9] : memref<128x512xf32, #tpu.memory_space<vmem>>, vector<128x512xf32>
    %cst_10 = arith.constant dense<0.000000e+00> : vector<8x512xf32>
    %19 = tpu.matmul %14, %18, %cst_10 {dimension_numbers = #tpu.dot_dimension_numbers<[1], [0], [0], [1], [0, 0, 1, 1], [], []>} : vector<8x128xf32>, vector<128x512xf32>, vector<8x512xf32> -> vector<8x512xf32>
    %20 = arith.addf %17, %19 : vector<8x512xf32>
    %21 = math.tanh %20 : vector<8x512xf32>
    %22 = arith.negf %20 : vector<8x512xf32>
    %23 = math.exp %22 : vector<8x512xf32>
    %cst_11 = arith.constant 1.000000e+00 : f32
    %24 = vector.broadcast %cst_11 : f32 to vector<8x512xf32>
    %25 = arith.addf %24, %23 : vector<8x512xf32>
    %26 = arith.divf %24, %25 : vector<8x512xf32>
    %27 = arith.select %13, %21, %26 : vector<8x512xi1>, vector<8x512xf32>
    %28 = vector.extract_strided_slice %27 {offsets = [0, 0], sizes = [8, 128], strides = [1, 1]} : vector<8x512xf32> to vector<8x128xf32>
    %29 = vector.extract_strided_slice %27 {offsets = [0, 128], sizes = [8, 128], strides = [1, 1]} : vector<8x512xf32> to vector<8x128xf32>
    %30 = vector.extract_strided_slice %27 {offsets = [0, 256], sizes = [8, 128], strides = [1, 1]} : vector<8x512xf32> to vector<8x128xf32>
    %31 = vector.extract_strided_slice %27 {offsets = [0, 384], sizes = [8, 128], strides = [1, 1]} : vector<8x512xf32> to vector<8x128xf32>
    %32 = arith.mulf %29, %15 : vector<8x128xf32>
    %33 = arith.mulf %28, %30 : vector<8x128xf32>
    %34 = arith.addf %32, %33 : vector<8x128xf32>
    %35 = math.tanh %34 : vector<8x128xf32>
    %36 = arith.mulf %31, %35 : vector<8x128xf32>
    %37 = vector.extract_strided_slice %7 {offsets = [0, 1, 0], sizes = [8, 1, 512], strides = [1, 1, 1]} : vector<8x4x512xf32> to vector<8x1x512xf32>
    %38 = vector.shape_cast %37 : vector<8x1x512xf32> to vector<8x512xf32>
    %c0_12 = arith.constant 0 : index
    %c0_13 = arith.constant 0 : index
    %39 = vector.load %arg3[%c0_12, %c0_13] : memref<128x512xf32, #tpu.memory_space<vmem>>, vector<128x512xf32>
    %cst_14 = arith.constant dense<0.000000e+00> : vector<8x512xf32>
    %40 = tpu.matmul %36, %39, %cst_14 {dimension_numbers = #tpu.dot_dimension_numbers<[1], [0], [0], [1], [0, 0, 1, 1], [], []>} : vector<8x128xf32>, vector<128x512xf32>, vector<8x512xf32> -> vector<8x512xf32>
    %41 = arith.addf %38, %40 : vector<8x512xf32>
    %42 = math.tanh %41 : vector<8x512xf32>
    %43 = arith.negf %41 : vector<8x512xf32>
    %44 = math.exp %43 : vector<8x512xf32>
    %cst_15 = arith.constant 1.000000e+00 : f32
    %45 = vector.broadcast %cst_15 : f32 to vector<8x512xf32>
    %46 = arith.addf %45, %44 : vector<8x512xf32>
    %47 = arith.divf %45, %46 : vector<8x512xf32>
    %48 = arith.select %13, %42, %47 : vector<8x512xi1>, vector<8x512xf32>
    %49 = vector.extract_strided_slice %48 {offsets = [0, 0], sizes = [8, 128], strides = [1, 1]} : vector<8x512xf32> to vector<8x128xf32>
    %50 = vector.extract_strided_slice %48 {offsets = [0, 128], sizes = [8, 128], strides = [1, 1]} : vector<8x512xf32> to vector<8x128xf32>
    %51 = vector.extract_strided_slice %48 {offsets = [0, 256], sizes = [8, 128], strides = [1, 1]} : vector<8x512xf32> to vector<8x128xf32>
    %52 = vector.extract_strided_slice %48 {offsets = [0, 384], sizes = [8, 128], strides = [1, 1]} : vector<8x512xf32> to vector<8x128xf32>
    %53 = arith.mulf %50, %34 : vector<8x128xf32>
    %54 = arith.mulf %49, %51 : vector<8x128xf32>
    %55 = arith.addf %53, %54 : vector<8x128xf32>
    %56 = math.tanh %55 : vector<8x128xf32>
    %57 = arith.mulf %52, %56 : vector<8x128xf32>
    %58 = vector.extract_strided_slice %7 {offsets = [0, 2, 0], sizes = [8, 1, 512], strides = [1, 1, 1]} : vector<8x4x512xf32> to vector<8x1x512xf32>
    %59 = vector.shape_cast %58 : vector<8x1x512xf32> to vector<8x512xf32>
    %c0_16 = arith.constant 0 : index
    %c0_17 = arith.constant 0 : index
    %60 = vector.load %arg3[%c0_16, %c0_17] : memref<128x512xf32, #tpu.memory_space<vmem>>, vector<128x512xf32>
    %cst_18 = arith.constant dense<0.000000e+00> : vector<8x512xf32>
    %61 = tpu.matmul %57, %60, %cst_18 {dimension_numbers = #tpu.dot_dimension_numbers<[1], [0], [0], [1], [0, 0, 1, 1], [], []>} : vector<8x128xf32>, vector<128x512xf32>, vector<8x512xf32> -> vector<8x512xf32>
    %62 = arith.addf %59, %61 : vector<8x512xf32>
    %63 = math.tanh %62 : vector<8x512xf32>
    %64 = arith.negf %62 : vector<8x512xf32>
    %65 = math.exp %64 : vector<8x512xf32>
    %cst_19 = arith.constant 1.000000e+00 : f32
    %66 = vector.broadcast %cst_19 : f32 to vector<8x512xf32>
    %67 = arith.addf %66, %65 : vector<8x512xf32>
    %68 = arith.divf %66, %67 : vector<8x512xf32>
    %69 = arith.select %13, %63, %68 : vector<8x512xi1>, vector<8x512xf32>
    %70 = vector.extract_strided_slice %69 {offsets = [0, 0], sizes = [8, 128], strides = [1, 1]} : vector<8x512xf32> to vector<8x128xf32>
    %71 = vector.extract_strided_slice %69 {offsets = [0, 128], sizes = [8, 128], strides = [1, 1]} : vector<8x512xf32> to vector<8x128xf32>
    %72 = vector.extract_strided_slice %69 {offsets = [0, 256], sizes = [8, 128], strides = [1, 1]} : vector<8x512xf32> to vector<8x128xf32>
    %73 = vector.extract_strided_slice %69 {offsets = [0, 384], sizes = [8, 128], strides = [1, 1]} : vector<8x512xf32> to vector<8x128xf32>
    %74 = arith.mulf %71, %55 : vector<8x128xf32>
    %75 = arith.mulf %70, %72 : vector<8x128xf32>
    %76 = arith.addf %74, %75 : vector<8x128xf32>
    %77 = math.tanh %76 : vector<8x128xf32>
    %78 = arith.mulf %73, %77 : vector<8x128xf32>
    %79 = vector.extract_strided_slice %7 {offsets = [0, 3, 0], sizes = [8, 1, 512], strides = [1, 1, 1]} : vector<8x4x512xf32> to vector<8x1x512xf32>
    %80 = vector.shape_cast %79 : vector<8x1x512xf32> to vector<8x512xf32>
    %c0_20 = arith.constant 0 : index
    %c0_21 = arith.constant 0 : index
    %81 = vector.load %arg3[%c0_20, %c0_21] : memref<128x512xf32, #tpu.memory_space<vmem>>, vector<128x512xf32>
    %cst_22 = arith.constant dense<0.000000e+00> : vector<8x512xf32>
    %82 = tpu.matmul %78, %81, %cst_22 {dimension_numbers = #tpu.dot_dimension_numbers<[1], [0], [0], [1], [0, 0, 1, 1], [], []>} : vector<8x128xf32>, vector<128x512xf32>, vector<8x512xf32> -> vector<8x512xf32>
    %83 = arith.addf %80, %82 : vector<8x512xf32>
    %84 = math.tanh %83 : vector<8x512xf32>
    %85 = arith.negf %83 : vector<8x512xf32>
    %86 = math.exp %85 : vector<8x512xf32>
    %cst_23 = arith.constant 1.000000e+00 : f32
    %87 = vector.broadcast %cst_23 : f32 to vector<8x512xf32>
    %88 = arith.addf %87, %86 : vector<8x512xf32>
    %89 = arith.divf %87, %88 : vector<8x512xf32>
    %90 = arith.select %13, %84, %89 : vector<8x512xi1>, vector<8x512xf32>
    %91 = vector.extract_strided_slice %90 {offsets = [0, 0], sizes = [8, 128], strides = [1, 1]} : vector<8x512xf32> to vector<8x128xf32>
    %92 = vector.extract_strided_slice %90 {offsets = [0, 128], sizes = [8, 128], strides = [1, 1]} : vector<8x512xf32> to vector<8x128xf32>
    %93 = vector.extract_strided_slice %90 {offsets = [0, 256], sizes = [8, 128], strides = [1, 1]} : vector<8x512xf32> to vector<8x128xf32>
    %94 = vector.extract_strided_slice %90 {offsets = [0, 384], sizes = [8, 128], strides = [1, 1]} : vector<8x512xf32> to vector<8x128xf32>
    %95 = arith.mulf %92, %76 : vector<8x128xf32>
    %96 = arith.mulf %91, %93 : vector<8x128xf32>
    %97 = arith.addf %95, %96 : vector<8x128xf32>
    %98 = math.tanh %97 : vector<8x128xf32>
    %99 = arith.mulf %94, %98 : vector<8x128xf32>
    %c0_24 = arith.constant 0 : index
    %c0_25 = arith.constant 0 : index
    %100 = vector.load %arg5[%c0_24, %c0_25] : memref<128x4xf32, #tpu.memory_space<vmem>>, vector<128x4xf32>
    %cst_26 = arith.constant dense<0.000000e+00> : vector<8x4xf32>
    %101 = tpu.matmul %99, %100, %cst_26 {dimension_numbers = #tpu.dot_dimension_numbers<[1], [0], [0], [1], [0, 0, 1, 1], [], []>} : vector<8x128xf32>, vector<128x4xf32>, vector<8x4xf32> -> vector<8x4xf32>
    %c0_27 = arith.constant 0 : index
    %c0_28 = arith.constant 0 : index
    %102 = vector.load %arg6[%c0_27, %c0_28] : memref<1x4xf32, #tpu.memory_space<vmem>>, vector<1x4xf32>
    %103 = vector.broadcast %102 : vector<1x4xf32> to vector<8x4xf32>
    %104 = arith.addf %101, %103 : vector<8x4xf32>
    %cst_29 = arith.constant dense<0xFF800000> : vector<8xf32>
    %105 = vector.multi_reduction <maximumf>, %104, %cst_29 [1] : vector<8x4xf32> to vector<8xf32>
    %106 = vector.shape_cast %105 : vector<8xf32> to vector<8x1xf32>
    %107 = vector.broadcast %106 : vector<8x1xf32> to vector<8x4xf32>
    %108 = arith.subf %104, %107 : vector<8x4xf32>
    %109 = math.exp %108 : vector<8x4xf32>
    %cst_30 = arith.constant dense<0.000000e+00> : vector<8xf32>
    %110 = vector.multi_reduction <add>, %109, %cst_30 [1] : vector<8x4xf32> to vector<8xf32>
    %111 = vector.shape_cast %110 : vector<8xf32> to vector<8x1xf32>
    %112 = tpu.reciprocal %111 {approx = true} : vector<8x1xf32> -> vector<8x1xf32>
    %113 = vector.broadcast %112 : vector<8x1xf32> to vector<8x4xf32>
    %114 = arith.mulf %109, %113 : vector<8x4xf32>
    %cst_31 = arith.constant 2.500000e-01 : f32
    %115 = vector.broadcast %cst_31 : f32 to vector<8x4xf32>
    %116 = arith.mulf %114, %115 : vector<8x4xf32>
    %cst_32 = arith.constant 0.000000e+00 : f32
    %117 = vector.broadcast %cst_32 : f32 to vector<8x128xf32>
    %c0_33 = arith.constant 0 : index
    %c0_34 = arith.constant 0 : index
    %c0_35 = arith.constant 0 : index
    %118 = vector.load %arg1[%c0_33, %c0_34, %c0_35] : memref<8x4x128xf32, #tpu.memory_space<vmem>>, vector<8x1x128xf32>
    %119 = vector.shape_cast %118 : vector<8x1x128xf32> to vector<8x128xf32>
    %120 = vector.extract_strided_slice %116 {offsets = [0, 0], sizes = [8, 1], strides = [1, 1]} : vector<8x4xf32> to vector<8x1xf32>
    %121 = vector.broadcast %120 : vector<8x1xf32> to vector<8x128xf32>
    %122 = arith.mulf %119, %121 : vector<8x128xf32>
    %123 = arith.addf %117, %122 : vector<8x128xf32>
    %c0_36 = arith.constant 0 : index
    %c1 = arith.constant 1 : index
    %c0_37 = arith.constant 0 : index
    %124 = vector.load %arg1[%c0_36, %c1, %c0_37] : memref<8x4x128xf32, #tpu.memory_space<vmem>>, vector<8x1x128xf32>
    %125 = vector.shape_cast %124 : vector<8x1x128xf32> to vector<8x128xf32>
    %126 = vector.extract_strided_slice %116 {offsets = [0, 1], sizes = [8, 1], strides = [1, 1]} : vector<8x4xf32> to vector<8x1xf32>
    %127 = vector.broadcast %126 : vector<8x1xf32> to vector<8x128xf32>
    %128 = arith.mulf %125, %127 : vector<8x128xf32>
    %129 = arith.addf %123, %128 : vector<8x128xf32>
    %c0_38 = arith.constant 0 : index
    %c2 = arith.constant 2 : index
    %c0_39 = arith.constant 0 : index
    %130 = vector.load %arg1[%c0_38, %c2, %c0_39] : memref<8x4x128xf32, #tpu.memory_space<vmem>>, vector<8x1x128xf32>
    %131 = vector.shape_cast %130 : vector<8x1x128xf32> to vector<8x128xf32>
    %132 = vector.extract_strided_slice %116 {offsets = [0, 2], sizes = [8, 1], strides = [1, 1]} : vector<8x4xf32> to vector<8x1xf32>
    %133 = vector.broadcast %132 : vector<8x1xf32> to vector<8x128xf32>
    %134 = arith.mulf %131, %133 : vector<8x128xf32>
    %135 = arith.addf %129, %134 : vector<8x128xf32>
    %c0_40 = arith.constant 0 : index
    %c3 = arith.constant 3 : index
    %c0_41 = arith.constant 0 : index
    %136 = vector.load %arg1[%c0_40, %c3, %c0_41] : memref<8x4x128xf32, #tpu.memory_space<vmem>>, vector<8x1x128xf32>
    %137 = vector.shape_cast %136 : vector<8x1x128xf32> to vector<8x128xf32>
    %138 = vector.extract_strided_slice %116 {offsets = [0, 3], sizes = [8, 1], strides = [1, 1]} : vector<8x4xf32> to vector<8x1xf32>
    %139 = vector.broadcast %138 : vector<8x1xf32> to vector<8x128xf32>
    %140 = arith.mulf %137, %139 : vector<8x128xf32>
    %141 = arith.addf %135, %140 : vector<8x128xf32>
    %c0_42 = arith.constant 0 : index
    %c0_43 = arith.constant 0 : index
    %142 = vector.load %arg7[%c0_42, %c0_43] : memref<8x128xf32, #tpu.memory_space<vmem>>, vector<8x128xf32>
    tpu.vector_store %arg7[%c0_42, %c0_43], %141 {strides = array<i32>} : memref<8x128xf32, #tpu.memory_space<vmem>>, vector<8x128xf32>,
    return
  }
  func.func @transform_0(%arg0: i32) -> (i32, i32, i32) {
    %c0_i32 = arith.constant 0 : i32
    %c0_i32_0 = arith.constant 0 : i32
    %c0_i32_1 = arith.constant 0 : i32
    return %arg0, %c0_i32, %c0_i32_0 : i32, i32, i32
  }
  func.func @transform_1(%arg0: i32) -> (i32, i32) {
    %c0_i32 = arith.constant 0 : i32
    %c0_i32_0 = arith.constant 0 : i32
    %c0_i32_1 = arith.constant 0 : i32
    return %c0_i32, %c0_i32_0 : i32, i32
  }
  func.func @transform_2(%arg0: i32) -> (i32, i32) {
    %c0_i32 = arith.constant 0 : i32
    %c0_i32_0 = arith.constant 0 : i32
    %c0_i32_1 = arith.constant 0 : i32
    return %c0_i32, %c0_i32_0 : i32, i32
  }
  func.func @transform_3(%arg0: i32) -> (i32, i32) {
    %c0_i32 = arith.constant 0 : i32
    %c0_i32_0 = arith.constant 0 : i32
    %c0_i32_1 = arith.constant 0 : i32
    return %c0_i32, %c0_i32_0 : i32, i32
  }
  func.func @transform_4(%arg0: i32) -> (i32, i32) {
    %c0_i32 = arith.constant 0 : i32
    %c0_i32_0 = arith.constant 0 : i32
    %c0_i32_1 = arith.constant 0 : i32
    return %c0_i32, %c0_i32_0 : i32, i32
  }
  func.func @transform_5(%arg0: i32) -> (i32, i32) {
    %c0_i32 = arith.constant 0 : i32
    %c0_i32_0 = arith.constant 0 : i32
    %c0_i32_1 = arith.constant 0 : i32
    return %c0_i32, %c0_i32_0 : i32, i32
  }
  func.func @transform_6(%arg0: i32) -> (i32, i32) {
    %c0_i32 = arith.constant 0 : i32
    %c0_i32_0 = arith.constant 0 : i32
    return %arg0, %c0_i32 : i32, i32
  }
}

</mosaic_0001>

<llo_original>
// kernel: lstm_aggregation_weights.1
$region0: #{lstm_aggregation_weights.1}
  #allocation0 [shape = 'u32[]', space=smem, size = 0x4, offset = 0x4, fixed_abs, tag = 'smem constant byte address 0x4 - core index']
  #allocation1 [shape = 'u32[72,128]{1,0:T(1,128)}', space=vmem, size = 0x9000, scoped, tag = 'internal scratch']
  %s0 = inlined_call_operand.vmem [shape: f32[24,4,128], index: 0, kind: input, shape index: {}]
  %s1 = inlined_call_operand.vmem [shape: f32[128,512], index: 1, kind: input, shape index: {}]
  %s2 = inlined_call_operand.vmem [shape: f32[128,512], index: 2, kind: input, shape index: {}]
  %s3 = inlined_call_operand.vmem [shape: f32[1,512], index: 3, kind: input, shape index: {}]
  %s4 = inlined_call_operand.vmem [shape: f32[128,4], index: 4, kind: input, shape index: {}]
  %s5 = inlined_call_operand.vmem [shape: f32[1,4], index: 5, kind: input, shape index: {}]
  %s6 = inlined_call_operand.hbm [shape: f32[24,128], index: 6, kind: output, shape index: {}]
  %s7 = sld [smem:[#allocation0]]
  $region57: #{lstm_aggregation_weights.1} parent=0
    _
  %s9 = ssub.s32 1, %s7
  %s10 = scalar_select 0, %s9, %s7
  $region1: #{lstm_aggregation_weights.1} parent=0
    #allocation2 [shape = 'u8[8192]{0}', space=vmem, size = 0x2000, scoped, tag = 'output window, operand 0']
    #allocation3 [shape = 's32[2]{0}', space=sflag, size = 0x8, scoped, tag = 'scoped memory for lstm_aggregation_weights.1']
    %11 = vsyncpa [#allocation3], 0
    %s12 = scalar_lea.sflag [#allocation3], 1
    %13 = vsyncpa %s12, 0
    loop: start=0, step=1, limit=5
    $region2: #{lstm_aggregation_weights.1} parent=1 // loop_pre_header
      _
    $region3: #{lstm_aggregation_weights.1} parent=1 // loop_header
      %s15 = sphi 0, %s19
      %p16 = scmp.ge.s32.totalorder %s15, 5
      %s25 = sphi 0, %s27
      %s28 = sphi 0, %s25
      %s29 = sphi 0, %s28
      %s45 = sphi 0, %s29
      %s49 = sphi 0, %s49
      %s51 = sphi 0, %s49
      %s52 = sphi 0, %s51
      %s66 = sphi 0, %s52
      %s70 = sphi 0, %s70
      %s72 = sphi 0, %s70
      %s73 = sphi 0, %s72
      %s87 = sphi 0, %s73
      %s91 = sphi 0, %s91
      %s93 = sphi 0, %s91
      %s94 = sphi 0, %s93
      %s108 = sphi 0, %s94
      %s112 = sphi 0, %s112
      %s114 = sphi 0, %s112
      %s115 = sphi 0, %s114
      %s129 = sphi 0, %s115
      %s133 = sphi 0, %s133
      %s135 = sphi 0, %s133
      %s136 = sphi 0, %s135
      %s150 = sphi 0, %s136
      %s156 = sphi 0, %s158
      %s159 = sphi 0, %s156
      %s160 = sphi 0, %s159
      %s176 = sphi 0, %s160
    $region4: #{lstm_aggregation_weights.1} parent=1 // loop_header_branch
      %18 = sbr.rel (%p16) target = $region8
    $region5: #{lstm_aggregation_weights.1} parent=1 // loop_body
      %s20 = ssub.s32 %s15, 1
      %s21 = ssub.s32 %s15, 2
      %s22 = sadd.s32 %s15, 1
      %s23 = ssub.s32 %s15, %s22
      %p24 = scmp.eq.s32.totalorder %s23, 0
      %s26 = sadd.s32 %s25, 1
      %s27 = scalar_select %p24, %s25, %s26
      %p30 = pneg %p24
      %p31 = scmp.eq.s32.totalorder %s15, 2
      %p32 = por %p30, %p31
      %p33 = scmp.ne.s32.totalorder %s25, %s28
      %p34 = scmp.eq.s32.totalorder %s15, 0
      %p35 = por %p33, %p34
      %p36 = scmp.ne.s32.totalorder %s25, %s28
      %p37 = scmp.eq.s32.totalorder %s20, 2
      %p38 = por %p36, %p37
      %p39 = scmp.ne.s32.totalorder %s28, %s29
      %p40 = scmp.eq.s32.totalorder %s20, 0
      %p41 = por %p39, %p40
      %p42 = scmp.ne.s32.totalorder %s28, %s29
      %p43 = scmp.eq.s32.totalorder %s21, 2
      %p44 = por %p42, %p43
      %p46 = scmp.ne.s32.totalorder %s29, %s45
      %p47 = scmp.eq.s32.totalorder %s21, 0
      %p48 = por %p46, %p47
      %s50 = sadd.s32 %s49, 1
      %p53 = scmp.eq.s32.totalorder %s15, 2
      %p54 = scmp.ne.s32.totalorder %s49, %s51
      %p55 = scmp.eq.s32.totalorder %s15, 0
      %p56 = por %p54, %p55
      %p57 = scmp.ne.s32.totalorder %s49, %s51
      %p58 = scmp.eq.s32.totalorder %s20, 2
      %p59 = por %p57, %p58
      %p60 = scmp.ne.s32.totalorder %s51, %s52
      %p61 = scmp.eq.s32.totalorder %s20, 0
      %p62 = por %p60, %p61
      %p63 = scmp.ne.s32.totalorder %s51, %s52
      %p64 = scmp.eq.s32.totalorder %s21, 2
      %p65 = por %p63, %p64
      %p67 = scmp.ne.s32.totalorder %s52, %s66
      %p68 = scmp.eq.s32.totalorder %s21, 0
      %p69 = por %p67, %p68
      %s71 = sadd.s32 %s70, 1
      %p74 = scmp.eq.s32.totalorder %s15, 2
      %p75 = scmp.ne.s32.totalorder %s70, %s72
      %p76 = scmp.eq.s32.totalorder %s15, 0
      %p77 = por %p75, %p76
      %p78 = scmp.ne.s32.totalorder %s70, %s72
      %p79 = scmp.eq.s32.totalorder %s20, 2
      %p80 = por %p78, %p79
      %p81 = scmp.ne.s32.totalorder %s72, %s73
      %p82 = scmp.eq.s32.totalorder %s20, 0
      %p83 = por %p81, %p82
      %p84 = scmp.ne.s32.totalorder %s72, %s73
      %p85 = scmp.eq.s32.totalorder %s21, 2
      %p86 = por %p84, %p85
      %p88 = scmp.ne.s32.totalorder %s73, %s87
      %p89 = scmp.eq.s32.totalorder %s21, 0
      %p90 = por %p88, %p89
      %s92 = sadd.s32 %s91, 1
      %p95 = scmp.eq.s32.totalorder %s15, 2
      %p96 = scmp.ne.s32.totalorder %s91, %s93
      %p97 = scmp.eq.s32.totalorder %s15, 0
      %p98 = por %p96, %p97
      %p99 = scmp.ne.s32.totalorder %s91, %s93
      %p100 = scmp.eq.s32.totalorder %s20, 2
      %p101 = por %p99, %p100
      %p102 = scmp.ne.s32.totalorder %s93, %s94
      %p103 = scmp.eq.s32.totalorder %s20, 0
      %p104 = por %p102, %p103
      %p105 = scmp.ne.s32.totalorder %s93, %s94
      %p106 = scmp.eq.s32.totalorder %s21, 2
      %p107 = por %p105, %p106
      %p109 = scmp.ne.s32.totalorder %s94, %s108
      %p110 = scmp.eq.s32.totalorder %s21, 0
      %p111 = por %p109, %p110
      %s113 = sadd.s32 %s112, 1
      %p116 = scmp.eq.s32.totalorder %s15, 2
      %p117 = scmp.ne.s32.totalorder %s112, %s114
      %p118 = scmp.eq.s32.totalorder %s15, 0
      %p119 = por %p117, %p118
      %p120 = scmp.ne.s32.totalorder %s112, %s114
      %p121 = scmp.eq.s32.totalorder %s20, 2
      %p122 = por %p120, %p121
      %p123 = scmp.ne.s32.totalorder %s114, %s115
      %p124 = scmp.eq.s32.totalorder %s20, 0
      %p125 = por %p123, %p124
      %p126 = scmp.ne.s32.totalorder %s114, %s115
      %p127 = scmp.eq.s32.totalorder %s21, 2
      %p128 = por %p126, %p127
      %p130 = scmp.ne.s32.totalorder %s115, %s129
      %p131 = scmp.eq.s32.totalorder %s21, 0
      %p132 = por %p130, %p131
      %s134 = sadd.s32 %s133, 1
      %p137 = scmp.eq.s32.totalorder %s15, 2
      %p138 = scmp.ne.s32.totalorder %s133, %s135
      %p139 = scmp.eq.s32.totalorder %s15, 0
      %p140 = por %p138, %p139
      %p141 = scmp.ne.s32.totalorder %s133, %s135
      %p142 = scmp.eq.s32.totalorder %s20, 2
      %p143 = por %p141, %p142
      %p144 = scmp.ne.s32.totalorder %s135, %s136
      %p145 = scmp.eq.s32.totalorder %s20, 0
      %p146 = por %p144, %p145
      %p147 = scmp.ne.s32.totalorder %s135, %s136
      %p148 = scmp.eq.s32.totalorder %s21, 2
      %p149 = por %p147, %p148
      %p151 = scmp.ne.s32.totalorder %s136, %s150
      %p152 = scmp.eq.s32.totalorder %s21, 0
      %p153 = por %p151, %p152
      %s154 = ssub.s32 %s15, %s22
      %p155 = scmp.eq.s32.totalorder %s154, 0
      %s157 = sadd.s32 %s156, 1
      %s158 = scalar_select %p155, %s156, %s157
      %p161 = pneg %p155
      %p162 = scmp.eq.s32.totalorder %s15, 2
      %p163 = por %p161, %p162
      %p164 = scmp.ne.s32.totalorder %s156, %s159
      %p165 = scmp.eq.s32.totalorder %s15, 0
      %p166 = por %p164, %p165
      %p167 = scmp.ne.s32.totalorder %s156, %s159
      %p168 = scmp.eq.s32.totalorder %s20, 2
      %p169 = por %p167, %p168
      %p170 = scmp.ne.s32.totalorder %s159, %s160
      %p171 = scmp.eq.s32.totalorder %s20, 0
      %p172 = por %p170, %p171
      %p173 = scmp.ne.s32.totalorder %s159, %s160
      %p174 = scmp.eq.s32.totalorder %s21, 2
      %p175 = por %p173, %p174
      %p177 = scmp.ne.s32.totalorder %s160, %s176
      %p178 = scmp.eq.s32.totalorder %s21, 0
      %p179 = por %p177, %p178
      %p180 = scmp.le.s32.totalorder 1, %s15
      %p181 = scmp.lt.s32.totalorder %s15, 4
      %p182 = pnand %p180, %p181
      %p183 = pneg %p182
      // Predicated region
      $region9: #{lstm_aggregation_weights.1} parent=5 // pred_check
        _
      $region10: #{lstm_aggregation_weights.1} parent=5 // pred_check_branch
        %185 = sbr.rel (%p182) target = $region12
      $region11: #{lstm_aggregation_weights.1} parent=5 // pred_region
        %s186 = ssub.s32 %s15, 1
        // Predicated region
        $region13: #{lstm_aggregation_weights.1} parent=11 // pred_check
          %p187 = pneg %p62
        $region14: #{lstm_aggregation_weights.1} parent=11 // pred_check_branch
          %189 = sbr.rel (%p187) target = $region16
        $region15: #{lstm_aggregation_weights.1} parent=11 // pred_region
          _
        $region16: #{lstm_aggregation_weights.1} parent=11 // pred_fallthru
          _
        // Predicated region
        $region17: #{lstm_aggregation_weights.1} parent=11 // pred_check
          %p190 = pneg %p83
        $region18: #{lstm_aggregation_weights.1} parent=11 // pred_check_branch
          %192 = sbr.rel (%p190) target = $region20
        $region19: #{lstm_aggregation_weights.1} parent=11 // pred_region
          _
        $region20: #{lstm_aggregation_weights.1} parent=11 // pred_fallthru
          _
        // Predicated region
        $region21: #{lstm_aggregation_weights.1} parent=11 // pred_check
          %p193 = pneg %p104
        $region22: #{lstm_aggregation_weights.1} parent=11 // pred_check_branch
          %195 = sbr.rel (%p193) target = $region24
        $region23: #{lstm_aggregation_weights.1} parent=11 // pred_region
          _
        $region24: #{lstm_aggregation_weights.1} parent=11 // pred_fallthru
          _
        // Predicated region
        $region25: #{lstm_aggregation_weights.1} parent=11 // pred_check
          %p196 = pneg %p125
        $region26: #{lstm_aggregation_weights.1} parent=11 // pred_check_branch
          %198 = sbr.rel (%p196) target = $region28
        $region27: #{lstm_aggregation_weights.1} parent=11 // pred_region
          _
        $region28: #{lstm_aggregation_weights.1} parent=11 // pred_fallthru
          _
        // Predicated region
        $region29: #{lstm_aggregation_weights.1} parent=11 // pred_check
          %p199 = pneg %p146
        $region30: #{lstm_aggregation_weights.1} parent=11 // pred_check_branch
          %201 = sbr.rel (%p199) target = $region32
        $region31: #{lstm_aggregation_weights.1} parent=11 // pred_region
          _
        $region32: #{lstm_aggregation_weights.1} parent=11 // pred_fallthru
          _
      $region12: #{lstm_aggregation_weights.1} parent=5 // pred_fallthru
        _
      %p202 = scmp.lt.s32.totalorder %s15, 3
      // Predicated region
      $region33: #{lstm_aggregation_weights.1} parent=5 // pred_check
        %p203 = pneg %p202
      $region34: #{lstm_aggregation_weights.1} parent=5 // pred_check_branch
        %205 = sbr.rel (%p203) target = $region36
      $region35: #{lstm_aggregation_weights.1} parent=5 // pred_region
        // Predicated region
        $region37: #{lstm_aggregation_weights.1} parent=35 // pred_check
          %p206 = pneg %p35
        $region38: #{lstm_aggregation_weights.1} parent=35 // pred_check_branch
          %208 = sbr.rel (%p206) target = $region40
        $region39: #{lstm_aggregation_weights.1} parent=35 // pred_region
          %s209 = smul.u32 8, %s15
          %p210 = scmp.lt.s32.totalorder %s209, 23
          %s211 = scalar_select %p210, %s209, 23
          %s212 = smul.addr %s211, 4
          %s213 = scalar_lea.vmem %s0, %s212
          %s214 = smul.u32 8, %s15
        $region40: #{lstm_aggregation_weights.1} parent=35 // pred_fallthru
          _
      $region36: #{lstm_aggregation_weights.1} parent=5 // pred_fallthru
        _
      %p215 = scmp.le.s32.totalorder 1, %s15
      %p216 = scmp.lt.s32.totalorder %s15, 4
      %p217 = pnand %p215, %p216
      %p218 = pneg %p217
      // Predicated region
      $region41: #{lstm_aggregation_weights.1} parent=5 // pred_check
        _
      $region42: #{lstm_aggregation_weights.1} parent=5 // pred_check_branch
        %220 = sbr.rel (%p217) target = $region44
      $region43: #{lstm_aggregation_weights.1} parent=5 // pred_region
        %s221 = ssub.s32 %s15, 1
        %s222 = smul.u32 8, %s20
        %p223 = scmp.lt.s32.totalorder %s222, 23
        %s224 = scalar_select %p223, %s222, 23
        %s225 = smul.addr %s224, 4
        %s226 = scalar_lea.vmem %s0, %s225
        %p227 = pneg %p41
        %p228 = pneg %p38
        %p229 = pneg %p62
        %p230 = pneg %p59
        %p231 = pneg %p83
        %p232 = pneg %p80
        %p233 = pneg %p104
        %p234 = pneg %p101
        %p235 = pneg %p125
        %p236 = pneg %p122
        %p237 = pneg %p146
        %p238 = pneg %p143
        %p239 = pneg %p172
        %p240 = pneg %p169
        %s241 = sand.u32 %s159, 1
        %s242 = scalar_lea.sflag [#allocation3], %s241
        %s243 = sand.u32 %s159, 1
        %s244 = smul.addr %s243, 8
        %s245 = scalar_lea.vmem [#allocation2], %s244
        %s246 = smul.u32 8, %s20
        %p247 = scmp.lt.s32.totalorder %s246, 23
        %s248 = scalar_select %p247, %s246, 23
        %s249 = smul.addr %s248, 4
        %s250 = scalar_lea.vmem %s0, %s249
        %s251 = smul.u32 8, %s20
        %v252 = vld [vmem:[%s250] sm:$0xf]
        %v253 = vld [vmem:[%s250 + $0x4] sm:$0xf]
        %v254 = vld [vmem:[%s250 + $0x8] sm:$0xf]
        %v255 = vld [vmem:[%s250 + $0xc] sm:$0xf]
        %v256 = vld [vmem:[%s250 + $0x10] sm:$0xf]
        %v257 = vld [vmem:[%s250 + $0x14] sm:$0xf]
        %v258 = vld [vmem:[%s250 + $0x18] sm:$0xf]
        %v259 = vld [vmem:[%s250 + $0x1c] sm:$0xf]
        %v260 = vld [vmem:[%s1] sm:$0xff]
        %v261 = vld [vmem:[%s1 + $0x8] sm:$0xff]
        %v262 = vld [vmem:[%s1 + $0x10] sm:$0xff]
        %v263 = vld [vmem:[%s1 + $0x18] sm:$0xff]
        %v264 = vld [vmem:[%s1 + $0x20] sm:$0xff]
        %v265 = vld [vmem:[%s1 + $0x28] sm:$0xff]
        %v266 = vld [vmem:[%s1 + $0x30] sm:$0xff]
        %v267 = vld [vmem:[%s1 + $0x38] sm:$0xff]
        %v268 = vld [vmem:[%s1 + $0x40] sm:$0xff]
        %v269 = vld [vmem:[%s1 + $0x48] sm:$0xff]
        %v270 = vld [vmem:[%s1 + $0x50] sm:$0xff]
        %v271 = vld [vmem:[%s1 + $0x58] sm:$0xff]
        %v272 = vld [vmem:[%s1 + $0x60] sm:$0xff]
        %v273 = vld [vmem:[%s1 + $0x68] sm:$0xff]
        %v274 = vld [vmem:[%s1 + $0x70] sm:$0xff]
        %v275 = vld [vmem:[%s1 + $0x78] sm:$0xff]
        %v276 = vld [vmem:[%s1 + $0x80] sm:$0xff]
        %v277 = vld [vmem:[%s1 + $0x88] sm:$0xff]
        %v278 = vld [vmem:[%s1 + $0x90] sm:$0xff]
        %v279 = vld [vmem:[%s1 + $0x98] sm:$0xff]
        %v280 = vld [vmem:[%s1 + $0xa0] sm:$0xff]
        %v281 = vld [vmem:[%s1 + $0xa8] sm:$0xff]
        %v282 = vld [vmem:[%s1 + $0xb0] sm:$0xff]
        %v283 = vld [vmem:[%s1 + $0xb8] sm:$0xff]
        %v284 = vld [vmem:[%s1 + $0xc0] sm:$0xff]
        %v285 = vld [vmem:[%s1 + $0xc8] sm:$0xff]
        %v286 = vld [vmem:[%s1 + $0xd0] sm:$0xff]
        %v287 = vld [vmem:[%s1 + $0xd8] sm:$0xff]
        %v288 = vld [vmem:[%s1 + $0xe0] sm:$0xff]
        %v289 = vld [vmem:[%s1 + $0xe8] sm:$0xff]
        %v290 = vld [vmem:[%s1 + $0xf0] sm:$0xff]
        %v291 = vld [vmem:[%s1 + $0xf8] sm:$0xff]
        %v292 = vld [vmem:[%s1 + $0x100] sm:$0xff]
        %v293 = vld [vmem:[%s1 + $0x108] sm:$0xff]
        %v294 = vld [vmem:[%s1 + $0x110] sm:$0xff]
        %v295 = vld [vmem:[%s1 + $0x118] sm:$0xff]
        %v296 = vld [vmem:[%s1 + $0x120] sm:$0xff]
        %v297 = vld [vmem:[%s1 + $0x128] sm:$0xff]
        %v298 = vld [vmem:[%s1 + $0x130] sm:$0xff]
        %v299 = vld [vmem:[%s1 + $0x138] sm:$0xff]
        %v300 = vld [vmem:[%s1 + $0x140] sm:$0xff]
        %v301 = vld [vmem:[%s1 + $0x148] sm:$0xff]
        %v302 = vld [vmem:[%s1 + $0x150] sm:$0xff]
        %v303 = vld [vmem:[%s1 + $0x158] sm:$0xff]
        %v304 = vld [vmem:[%s1 + $0x160] sm:$0xff]
        %v305 = vld [vmem:[%s1 + $0x168] sm:$0xff]
        %v306 = vld [vmem:[%s1 + $0x170] sm:$0xff]
        %v307 = vld [vmem:[%s1 + $0x178] sm:$0xff]
        %v308 = vld [vmem:[%s1 + $0x180] sm:$0xff]
        %v309 = vld [vmem:[%s1 + $0x188] sm:$0xff]
        %v310 = vld [vmem:[%s1 + $0x190] sm:$0xff]
        %v311 = vld [vmem:[%s1 + $0x198] sm:$0xff]
        %v312 = vld [vmem:[%s1 + $0x1a0] sm:$0xff]
        %v313 = vld [vmem:[%s1 + $0x1a8] sm:$0xff]
        %v314 = vld [vmem:[%s1 + $0x1b0] sm:$0xff]
        %v315 = vld [vmem:[%s1 + $0x1b8] sm:$0xff]
        %v316 = vld [vmem:[%s1 + $0x1c0] sm:$0xff]
        %v317 = vld [vmem:[%s1 + $0x1c8] sm:$0xff]
        %v318 = vld [vmem:[%s1 + $0x1d0] sm:$0xff]
        %v319 = vld [vmem:[%s1 + $0x1d8] sm:$0xff]
        %v320 = vld [vmem:[%s1 + $0x1e0] sm:$0xff]
        %v321 = vld [vmem:[%s1 + $0x1e8] sm:$0xff]
        %v322 = vld [vmem:[%s1 + $0x1f0] sm:$0xff]
        %v323 = vld [vmem:[%s1 + $0x1f8] sm:$0xff]
        %v324 = vld [vmem:[%s3] sm:$0xf]
        %v326 = vperm.slane %v324, 0
        %v327 = vperm.slane %v324, 1
        %v328 = vperm.slane %v324, 2
        %v329 = vperm.slane %v324, 3
        %342 = vst [vmem:[#allocation1] ss:$2 sm:$0xff] %v252
        %s343 = scalar_lea.vmem [#allocation1], 1
        %344 = vst [vmem:[%s343] ss:$2 sm:$0xff] %v253
        %s345 = scalar_lea.vmem [#allocation1], 16
        %346 = vst [vmem:[%s345] ss:$2 sm:$0xff] %v254
        %s347 = scalar_lea.vmem [#allocation1], 17
        %348 = vst [vmem:[%s347] ss:$2 sm:$0xff] %v255
        %s349 = scalar_lea.vmem [#allocation1], 32
        %350 = vst [vmem:[%s349] ss:$2 sm:$0xff] %v256
        %s351 = scalar_lea.vmem [#allocation1], 33
        %352 = vst [vmem:[%s351] ss:$2 sm:$0xff] %v257
        %s353 = scalar_lea.vmem [#allocation1], 48
        %354 = vst [vmem:[%s353] ss:$2 sm:$0xff] %v258
        %s355 = scalar_lea.vmem [#allocation1], 49
        %356 = vst [vmem:[%s355] ss:$2 sm:$0xff] %v259
        %v357 = vld.sshfl [vmem:[#allocation1] sm:$0xff pattern:$0x75316420]
        %v358 = vld.sshfl [vmem:[#allocation1 + $0x10] sm:$0xff pattern:$0x75316420]
        %v359 = vld.sshfl [vmem:[#allocation1 + $0x20] sm:$0xff pattern:$0x75316420]
        %v360 = vld.sshfl [vmem:[#allocation1 + $0x30] sm:$0xff pattern:$0x75316420]
        %365 = vmatpush.msra.mxu0 %v320
        %366 = vmatpush.msra.mxu0 %v316
        %367 = vmatpush.msra.mxu0 %v312
        %368 = vmatpush.msra.mxu0 %v308
        %369 = vmatpush.msra.mxu0 %v304
        %370 = vmatpush.msra.mxu0 %v300
        %371 = vmatpush.msra.mxu0 %v296
        %372 = vmatpush.msra.mxu0 %v292
        %373 = vmatpush.msra.mxu0 %v288
        %374 = vmatpush.msra.mxu0 %v284
        %375 = vmatpush.msra.mxu0 %v280
        %376 = vmatpush.msra.mxu0 %v276
        %377 = vmatpush.msra.mxu0 %v272
        %378 = vmatpush.msra.mxu0 %v268
        %379 = vmatpush.msra.mxu0 %v264
        %380 = vmatpush.msra.mxu0 %v260
        %381 = vmatmul.f32.gmra.mxu0 %v357
        %v382 = vpop.f32.mrf.mxu0
        %v383 = vadd.f32 %v326, %v382
        %384 = vmatmul.f32.gmra.mxu0 %v358
        %v385 = vpop.f32.mrf.mxu0
        %v386 = vadd.f32 %v326, %v385
        %387 = vmatmul.f32.gmra.mxu0 %v359
        %v388 = vpop.f32.mrf.mxu0
        %v389 = vadd.f32 %v326, %v388
        %390 = vmatmul.f32.gmra.mxu0 %v360
        %v391 = vpop.f32.mrf.mxu0
        %v392 = vadd.f32 %v326, %v391
        %393 = vdwg.mxu0
        %394 = vmatpush.msra.mxu0 %v321
        %395 = vmatpush.msra.mxu0 %v317
        %396 = vmatpush.msra.mxu0 %v313
        %397 = vmatpush.msra.mxu0 %v309
        %398 = vmatpush.msra.mxu0 %v305
        %399 = vmatpush.msra.mxu0 %v301
        %400 = vmatpush.msra.mxu0 %v297
        %401 = vmatpush.msra.mxu0 %v293
        %402 = vmatpush.msra.mxu0 %v289
        %403 = vmatpush.msra.mxu0 %v285
        %404 = vmatpush.msra.mxu0 %v281
        %405 = vmatpush.msra.mxu0 %v277
        %406 = vmatpush.msra.mxu0 %v273
        %407 = vmatpush.msra.mxu0 %v269
        %408 = vmatpush.msra.mxu0 %v265
        %409 = vmatpush.msra.mxu0 %v261
        %410 = vmatmul.f32.gmra.mxu0 %v357
        %v411 = vpop.f32.mrf.mxu0
        %v412 = vadd.f32 %v327, %v411
        %413 = vmatmul.f32.gmra.mxu0 %v358
        %v414 = vpop.f32.mrf.mxu0
        %v415 = vadd.f32 %v327, %v414
        %416 = vmatmul.f32.gmra.mxu0 %v359
        %v417 = vpop.f32.mrf.mxu0
        %v418 = vadd.f32 %v327, %v417
        %419 = vmatmul.f32.gmra.mxu0 %v360
        %v420 = vpop.f32.mrf.mxu0
        %v421 = vadd.f32 %v327, %v420
        %422 = vdwg.mxu0
        %423 = vmatpush.msra.mxu0 %v322
        %424 = vmatpush.msra.mxu0 %v318
        %425 = vmatpush.msra.mxu0 %v314
        %426 = vmatpush.msra.mxu0 %v310
        %427 = vmatpush.msra.mxu0 %v306
        %428 = vmatpush.msra.mxu0 %v302
        %429 = vmatpush.msra.mxu0 %v298
        %430 = vmatpush.msra.mxu0 %v294
        %431 = vmatpush.msra.mxu0 %v290
        %432 = vmatpush.msra.mxu0 %v286
        %433 = vmatpush.msra.mxu0 %v282
        %434 = vmatpush.msra.mxu0 %v278
        %435 = vmatpush.msra.mxu0 %v274
        %436 = vmatpush.msra.mxu0 %v270
        %437 = vmatpush.msra.mxu0 %v266
        %438 = vmatpush.msra.mxu0 %v262
        %439 = vmatmul.f32.gmra.mxu0 %v357
        %v440 = vpop.f32.mrf.mxu0
        %v441 = vadd.f32 %v328, %v440
        %442 = vmatmul.f32.gmra.mxu0 %v358
        %v443 = vpop.f32.mrf.mxu0
        %v444 = vadd.f32 %v328, %v443
        %445 = vmatmul.f32.gmra.mxu0 %v359
        %v446 = vpop.f32.mrf.mxu0
        %v447 = vadd.f32 %v328, %v446
        %448 = vmatmul.f32.gmra.mxu0 %v360
        %v449 = vpop.f32.mrf.mxu0
        %v450 = vadd.f32 %v328, %v449
        %451 = vdwg.mxu0
        %452 = vmatpush.msra.mxu0 %v323
        %453 = vmatpush.msra.mxu0 %v319
        %454 = vmatpush.msra.mxu0 %v315
        %455 = vmatpush.msra.mxu0 %v311
        %456 = vmatpush.msra.mxu0 %v307
        %457 = vmatpush.msra.mxu0 %v303
        %458 = vmatpush.msra.mxu0 %v299
        %459 = vmatpush.msra.mxu0 %v295
        %460 = vmatpush.msra.mxu0 %v291
        %461 = vmatpush.msra.mxu0 %v287
        %462 = vmatpush.msra.mxu0 %v283
        %463 = vmatpush.msra.mxu0 %v279
        %464 = vmatpush.msra.mxu0 %v275
        %465 = vmatpush.msra.mxu0 %v271
        %466 = vmatpush.msra.mxu0 %v267
        %467 = vmatpush.msra.mxu0 %v263
        %468 = vmatmul.f32.gmra.mxu0 %v357
        %v469 = vpop.f32.mrf.mxu0
        %v470 = vadd.f32 %v329, %v469
        %471 = vmatmul.f32.gmra.mxu0 %v358
        %v472 = vpop.f32.mrf.mxu0
        %v473 = vadd.f32 %v329, %v472
        %474 = vmatmul.f32.gmra.mxu0 %v359
        %v475 = vpop.f32.mrf.mxu0
        %v476 = vadd.f32 %v329, %v475
        %477 = vmatmul.f32.gmra.mxu0 %v360
        %v478 = vpop.f32.mrf.mxu0
        %v479 = vadd.f32 %v329, %v478
        %480 = vdwg.mxu0
        %v497 = vrot.slane %v412, 4
        %v498 = vrot.slane %v470, 4
        %v499 = vrot.slane %v415, 4
        %v500 = vrot.slane %v473, 4
        %v501 = vrot.slane %v418, 4
        %v502 = vrot.slane %v476, 4
        %v503 = vrot.slane %v421, 4
        %v504 = vrot.slane %v479, 4
        %vm505 = vcmask 1043456
        %v506 = vsel %vm505, %v383, %v497
        %v507 = vsel %vm505, %v441, %v498
        %v508 = vsel %vm505, %v497, %v383
        %v509 = vrot.slane %v508, 4
        %v510 = vsel %vm505, %v498, %v441
        %v511 = vrot.slane %v510, 4
        %v512 = vsel %vm505, %v386, %v499
        %v513 = vsel %vm505, %v444, %v500
        %v514 = vsel %vm505, %v499, %v386
        %v515 = vrot.slane %v514, 4
        %v516 = vsel %vm505, %v500, %v444
        %v517 = vrot.slane %v516, 4
        %v518 = vsel %vm505, %v389, %v501
        %v519 = vsel %vm505, %v447, %v502
        %v520 = vsel %vm505, %v501, %v389
        %v521 = vrot.slane %v520, 4
        %v522 = vsel %vm505, %v502, %v447
        %v523 = vrot.slane %v522, 4
        %v524 = vsel %vm505, %v392, %v503
        %v525 = vsel %vm505, %v450, %v504
        %v526 = vsel %vm505, %v503, %v392
        %v527 = vrot.slane %v526, 4
        %v528 = vsel %vm505, %v504, %v450
        %v529 = vrot.slane %v528, 4
        %v546 = vlaneseq
        %v547 = vand.u32 %v546, 127
        %v548 = vadd.s32 %v547, 128
        %v549 = vadd.s32 %v547, 256
        %v550 = vadd.s32 %v547, 384
        %vm551 = vcmp.ge.s32.totalorder %v547, 256
        %vm552 = vcmp.ge.s32.totalorder %v548, 256
        %vm553 = vcmp.ge.s32.totalorder %v549, 256
        %vm554 = vcmp.ge.s32.totalorder %v550, 256
        %vm555 = vcmp.lt.s32.totalorder %v547, 384
        %vm556 = vcmp.lt.s32.totalorder %v548, 384
        %vm557 = vcmp.lt.s32.totalorder %v549, 384
        %vm558 = vcmp.lt.s32.totalorder %v550, 384
        %vm559 = vmand %vm551, %vm555
        %vm560 = vmand %vm552, %vm556
        %vm561 = vmand %vm553, %vm557
        %vm562 = vmand %vm554, %vm558
        %v563 = vld [vmem:[%s2] sm:$0xff]
        %v564 = vld [vmem:[%s2 + $0x8] sm:$0xff]
        %v565 = vld [vmem:[%s2 + $0x10] sm:$0xff]
        %v566 = vld [vmem:[%s2 + $0x18] sm:$0xff]
        %v567 = vld [vmem:[%s2 + $0x20] sm:$0xff]
        %v568 = vld [vmem:[%s2 + $0x28] sm:$0xff]
        %v569 = vld [vmem:[%s2 + $0x30] sm:$0xff]
        %v570 = vld [vmem:[%s2 + $0x38] sm:$0xff]
        %v571 = vld [vmem:[%s2 + $0x40] sm:$0xff]
        %v572 = vld [vmem:[%s2 + $0x48] sm:$0xff]
        %v573 = vld [vmem:[%s2 + $0x50] sm:$0xff]
        %v574 = vld [vmem:[%s2 + $0x58] sm:$0xff]
        %v575 = vld [vmem:[%s2 + $0x60] sm:$0xff]
        %v576 = vld [vmem:[%s2 + $0x68] sm:$0xff]
        %v577 = vld [vmem:[%s2 + $0x70] sm:$0xff]
        %v578 = vld [vmem:[%s2 + $0x78] sm:$0xff]
        %v579 = vld [vmem:[%s2 + $0x80] sm:$0xff]
        %v580 = vld [vmem:[%s2 + $0x88] sm:$0xff]
        %v581 = vld [vmem:[%s2 + $0x90] sm:$0xff]
        %v582 = vld [vmem:[%s2 + $0x98] sm:$0xff]
        %v583 = vld [vmem:[%s2 + $0xa0] sm:$0xff]
        %v584 = vld [vmem:[%s2 + $0xa8] sm:$0xff]
        %v585 = vld [vmem:[%s2 + $0xb0] sm:$0xff]
        %v586 = vld [vmem:[%s2 + $0xb8] sm:$0xff]
        %v587 = vld [vmem:[%s2 + $0xc0] sm:$0xff]
        %v588 = vld [vmem:[%s2 + $0xc8] sm:$0xff]
        %v589 = vld [vmem:[%s2 + $0xd0] sm:$0xff]
        %v590 = vld [vmem:[%s2 + $0xd8] sm:$0xff]
        %v591 = vld [vmem:[%s2 + $0xe0] sm:$0xff]
        %v592 = vld [vmem:[%s2 + $0xe8] sm:$0xff]
        %v593 = vld [vmem:[%s2 + $0xf0] sm:$0xff]
        %v594 = vld [vmem:[%s2 + $0xf8] sm:$0xff]
        %v595 = vld [vmem:[%s2 + $0x100] sm:$0xff]
        %v596 = vld [vmem:[%s2 + $0x108] sm:$0xff]
        %v597 = vld [vmem:[%s2 + $0x110] sm:$0xff]
        %v598 = vld [vmem:[%s2 + $0x118] sm:$0xff]
        %v599 = vld [vmem:[%s2 + $0x120] sm:$0xff]
        %v600 = vld [vmem:[%s2 + $0x128] sm:$0xff]
        %v601 = vld [vmem:[%s2 + $0x130] sm:$0xff]
        %v602 = vld [vmem:[%s2 + $0x138] sm:$0xff]
        %v603 = vld [vmem:[%s2 + $0x140] sm:$0xff]
        %v604 = vld [vmem:[%s2 + $0x148] sm:$0xff]
        %v605 = vld [vmem:[%s2 + $0x150] sm:$0xff]
        %v606 = vld [vmem:[%s2 + $0x158] sm:$0xff]
        %v607 = vld [vmem:[%s2 + $0x160] sm:$0xff]
        %v608 = vld [vmem:[%s2 + $0x168] sm:$0xff]
        %v609 = vld [vmem:[%s2 + $0x170] sm:$0xff]
        %v610 = vld [vmem:[%s2 + $0x178] sm:$0xff]
        %v611 = vld [vmem:[%s2 + $0x180] sm:$0xff]
        %v612 = vld [vmem:[%s2 + $0x188] sm:$0xff]
        %v613 = vld [vmem:[%s2 + $0x190] sm:$0xff]
        %v614 = vld [vmem:[%s2 + $0x198] sm:$0xff]
        %v615 = vld [vmem:[%s2 + $0x1a0] sm:$0xff]
        %v616 = vld [vmem:[%s2 + $0x1a8] sm:$0xff]
        %v617 = vld [vmem:[%s2 + $0x1b0] sm:$0xff]
        %v618 = vld [vmem:[%s2 + $0x1b8] sm:$0xff]
        %v619 = vld [vmem:[%s2 + $0x1c0] sm:$0xff]
        %v620 = vld [vmem:[%s2 + $0x1c8] sm:$0xff]
        %v621 = vld [vmem:[%s2 + $0x1d0] sm:$0xff]
        %v622 = vld [vmem:[%s2 + $0x1d8] sm:$0xff]
        %v623 = vld [vmem:[%s2 + $0x1e0] sm:$0xff]
        %v624 = vld [vmem:[%s2 + $0x1e8] sm:$0xff]
        %v625 = vld [vmem:[%s2 + $0x1f0] sm:$0xff]
        %v626 = vld [vmem:[%s2 + $0x1f8] sm:$0xff]
        %627 = vmatpush.msra.mxu0 %v623
        %628 = vmatpush.msra.mxu0 %v619
        %629 = vmatpush.msra.mxu0 %v615
        %630 = vmatpush.msra.mxu0 %v611
        %631 = vmatpush.msra.mxu0 %v607
        %632 = vmatpush.msra.mxu0 %v603
        %633 = vmatpush.msra.mxu0 %v599
        %634 = vmatpush.msra.mxu0 %v595
        %635 = vmatpush.msra.mxu0 %v591
        %636 = vmatpush.msra.mxu0 %v587
        %637 = vmatpush.msra.mxu0 %v583
        %638 = vmatpush.msra.mxu0 %v579
        %639 = vmatpush.msra.mxu0 %v575
        %640 = vmatpush.msra.mxu0 %v571
        %641 = vmatpush.msra.mxu0 %v567
        %642 = vmatpush.msra.mxu0 %v563
        %643 = vmatmul.f32.gmra.mxu0 0.0
        %v644 = vpop.f32.mrf.mxu0
        %v645 = vadd.f32 0.0, %v644
        %646 = vdwg.mxu0
        %647 = vmatpush.msra.mxu0 %v624
        %648 = vmatpush.msra.mxu0 %v620
        %649 = vmatpush.msra.mxu0 %v616
        %650 = vmatpush.msra.mxu0 %v612
        %651 = vmatpush.msra.mxu0 %v608
        %652 = vmatpush.msra.mxu0 %v604
        %653 = vmatpush.msra.mxu0 %v600
        %654 = vmatpush.msra.mxu0 %v596
        %655 = vmatpush.msra.mxu0 %v592
        %656 = vmatpush.msra.mxu0 %v588
        %657 = vmatpush.msra.mxu0 %v584
        %658 = vmatpush.msra.mxu0 %v580
        %659 = vmatpush.msra.mxu0 %v576
        %660 = vmatpush.msra.mxu0 %v572
        %661 = vmatpush.msra.mxu0 %v568
        %662 = vmatpush.msra.mxu0 %v564
        %663 = vmatmul.f32.gmra.mxu0 0.0
        %v664 = vpop.f32.mrf.mxu0
        %v665 = vadd.f32 0.0, %v664
        %666 = vdwg.mxu0
        %667 = vmatpush.msra.mxu0 %v625
        %668 = vmatpush.msra.mxu0 %v621
        %669 = vmatpush.msra.mxu0 %v617
        %670 = vmatpush.msra.mxu0 %v613
        %671 = vmatpush.msra.mxu0 %v609
        %672 = vmatpush.msra.mxu0 %v605
        %673 = vmatpush.msra.mxu0 %v601
        %674 = vmatpush.msra.mxu0 %v597
        %675 = vmatpush.msra.mxu0 %v593
        %676 = vmatpush.msra.mxu0 %v589
        %677 = vmatpush.msra.mxu0 %v585
        %678 = vmatpush.msra.mxu0 %v581
        %679 = vmatpush.msra.mxu0 %v577
        %680 = vmatpush.msra.mxu0 %v573
        %681 = vmatpush.msra.mxu0 %v569
        %682 = vmatpush.msra.mxu0 %v565
        %683 = vmatmul.f32.gmra.mxu0 0.0
        %v684 = vpop.f32.mrf.mxu0
        %v685 = vadd.f32 0.0, %v684
        %686 = vdwg.mxu0
        %687 = vmatpush.msra.mxu0 %v626
        %688 = vmatpush.msra.mxu0 %v622
        %689 = vmatpush.msra.mxu0 %v618
        %690 = vmatpush.msra.mxu0 %v614
        %691 = vmatpush.msra.mxu0 %v610
        %692 = vmatpush.msra.mxu0 %v606
        %693 = vmatpush.msra.mxu0 %v602
        %694 = vmatpush.msra.mxu0 %v598
        %695 = vmatpush.msra.mxu0 %v594
        %696 = vmatpush.msra.mxu0 %v590
        %697 = vmatpush.msra.mxu0 %v586
        %698 = vmatpush.msra.mxu0 %v582
        %699 = vmatpush.msra.mxu0 %v578
        %700 = vmatpush.msra.mxu0 %v574
        %701 = vmatpush.msra.mxu0 %v570
        %702 = vmatpush.msra.mxu0 %v566
        %703 = vmatmul.f32.gmra.mxu0 0.0
        %v704 = vpop.f32.mrf.mxu0
        %v705 = vadd.f32 0.0, %v704
        %706 = vdwg.mxu0
        %v711 = vrot.slane %v665, 4
        %v712 = vrot.slane %v705, 4
        %v713 = vsel %vm505, %v645, %v711
        %v714 = vsel %vm505, %v685, %v712
        %v715 = vsel %vm505, %v711, %v645
        %v716 = vrot.slane %v715, 4
        %v717 = vsel %vm505, %v712, %v685
        %v718 = vrot.slane %v717, 4
        %v719 = vrot.slane %v713, 1
        %v720 = vrot.slane %v714, 1
        %v721 = vrot.slane %v713, 2
        %v722 = vrot.slane %v714, 2
        %v723 = vrot.slane %v713, 3
        %v724 = vrot.slane %v714, 3
        %v725 = vrot.slane %v716, 1
        %v726 = vrot.slane %v718, 1
        %v727 = vrot.slane %v716, 2
        %v728 = vrot.slane %v718, 2
        %v729 = vrot.slane %v716, 3
        %v730 = vrot.slane %v718, 3
        %v747 = vadd.f32 %v506, %v713
        %v748 = vadd.f32 %v507, %v714
        %v749 = vadd.f32 %v509, %v719
        %v750 = vadd.f32 %v511, %v720
        %v751 = vadd.f32 %v512, %v721
        %v752 = vadd.f32 %v513, %v722
        %v753 = vadd.f32 %v515, %v723
        %v754 = vadd.f32 %v517, %v724
        %v755 = vadd.f32 %v518, %v716
        %v756 = vadd.f32 %v519, %v718
        %v757 = vadd.f32 %v521, %v725
        %v758 = vadd.f32 %v523, %v726
        %v759 = vadd.f32 %v524, %v727
        %v760 = vadd.f32 %v525, %v728
        %v761 = vadd.f32 %v527, %v729
        %v762 = vadd.f32 %v529, %v730
        %v763 = vtanh.pop %v747
        %v764 = vtanh.pop %v748
        %v765 = vtanh.pop %v749
        %v766 = vtanh.pop %v750
        %v767 = vtanh.pop %v751
        %v768 = vtanh.pop %v752
        %v769 = vtanh.pop %v753
        %v770 = vtanh.pop %v754
        %v771 = vtanh.pop %v755
        %v772 = vtanh.pop %v756
        %v773 = vtanh.pop %v757
        %v774 = vtanh.pop %v758
        %v775 = vtanh.pop %v759
        %v776 = vtanh.pop %v760
        %v777 = vtanh.pop %v761
        %v778 = vtanh.pop %v762
        %v779 = vxor.u32 %v747, 2147483648
        %v780 = vxor.u32 %v748, 2147483648
        %v781 = vxor.u32 %v749, 2147483648
        %v782 = vxor.u32 %v750, 2147483648
        %v783 = vxor.u32 %v751, 2147483648
        %v784 = vxor.u32 %v752, 2147483648
        %v785 = vxor.u32 %v753, 2147483648
        %v786 = vxor.u32 %v754, 2147483648
        %v787 = vxor.u32 %v755, 2147483648
        %v788 = vxor.u32 %v756, 2147483648
        %v789 = vxor.u32 %v757, 2147483648
        %v790 = vxor.u32 %v758, 2147483648
        %v791 = vxor.u32 %v759, 2147483648
        %v792 = vxor.u32 %v760, 2147483648
        %v793 = vxor.u32 %v761, 2147483648
        %v794 = vxor.u32 %v762, 2147483648
        %v795 = vmul.f32 %v779, 1.442695
        %v796 = vpow.pop %v795
        %v797 = vmul.f32 %v780, 1.442695
        %v798 = vpow.pop %v797
        %v799 = vmul.f32 %v781, 1.442695
        %v800 = vpow.pop %v799
        %v801 = vmul.f32 %v782, 1.442695
        %v802 = vpow.pop %v801
        %v803 = vmul.f32 %v783, 1.442695
        %v804 = vpow.pop %v803
        %v805 = vmul.f32 %v784, 1.442695
        %v806 = vpow.pop %v805
        %v807 = vmul.f32 %v785, 1.442695
        %v808 = vpow.pop %v807
        %v809 = vmul.f32 %v786, 1.442695
        %v810 = vpow.pop %v809
        %v811 = vmul.f32 %v787, 1.442695
        %v812 = vpow.pop %v811
        %v813 = vmul.f32 %v788, 1.442695
        %v814 = vpow.pop %v813
        %v815 = vmul.f32 %v789, 1.442695
        %v816 = vpow.pop %v815
        %v817 = vmul.f32 %v790, 1.442695
        %v818 = vpow.pop %v817
        %v819 = vmul.f32 %v791, 1.442695
        %v820 = vpow.pop %v819
        %v821 = vmul.f32 %v792, 1.442695
        %v822 = vpow.pop %v821
        %v823 = vmul.f32 %v793, 1.442695
        %v824 = vpow.pop %v823
        %v825 = vmul.f32 %v794, 1.442695
        %v826 = vpow.pop %v825
        %v827 = vadd.f32 %v796, 1.0
        %v828 = vadd.f32 %v798, 1.0
        %v829 = vadd.f32 %v800, 1.0
        %v830 = vadd.f32 %v802, 1.0
        %v831 = vadd.f32 %v804, 1.0
        %v832 = vadd.f32 %v806, 1.0
        %v833 = vadd.f32 %v808, 1.0
        %v834 = vadd.f32 %v810, 1.0
        %v835 = vadd.f32 %v812, 1.0
        %v836 = vadd.f32 %v814, 1.0
        %v837 = vadd.f32 %v816, 1.0
        %v838 = vadd.f32 %v818, 1.0
        %v839 = vadd.f32 %v820, 1.0
        %v840 = vadd.f32 %v822, 1.0
        %v841 = vadd.f32 %v824, 1.0
        %v842 = vadd.f32 %v826, 1.0
        %v843 = vrcp.pop %v827
        %v844 = vmul.f32 %v827, %v843
        %v845 = vsub.f32 1.0, %v844
        %v846 = vmul.f32 %v843, %v845
        %v847 = vadd.f32 %v843, %v846
        %vm848 = vweird.f32 %v827
        %vm849 = vweird.f32 %v843
        %vm850 = vmor %vm848, %vm849
        %v851 = vsel %vm850, %v843, %v847
        %v852 = vand.u32 2147483647, %v827
        %vm853 = vcmp.eq.f32.partialorder %v852, 8.507059e+37
        %v854 = vand.u32 %v827, 2147483648
        %v855 = vor.u32 1.1754944e-38, %v854
        %v856 = vsel %vm853, %v855, %v851
        %v857 = vmul.f32 1.0, %v856
        %v858 = vrcp.pop %v828
        %v859 = vmul.f32 %v828, %v858
        %v860 = vsub.f32 1.0, %v859
        %v861 = vmul.f32 %v858, %v860
        %v862 = vadd.f32 %v858, %v861
        %vm863 = vweird.f32 %v828
        %vm864 = vweird.f32 %v858
        %vm865 = vmor %vm863, %vm864
        %v866 = vsel %vm865, %v858, %v862
        %v867 = vand.u32 2147483647, %v828
        %vm868 = vcmp.eq.f32.partialorder %v867, 8.507059e+37
        %v869 = vand.u32 %v828, 2147483648
        %v870 = vor.u32 1.1754944e-38, %v869
        %v871 = vsel %vm868, %v870, %v866
        %v872 = vmul.f32 1.0, %v871
        %v873 = vrcp.pop %v829
        %v874 = vmul.f32 %v829, %v873
        %v875 = vsub.f32 1.0, %v874
        %v876 = vmul.f32 %v873, %v875
        %v877 = vadd.f32 %v873, %v876
        %vm878 = vweird.f32 %v829
        %vm879 = vweird.f32 %v873
        %vm880 = vmor %vm878, %vm879
        %v881 = vsel %vm880, %v873, %v877
        %v882 = vand.u32 2147483647, %v829
        %vm883 = vcmp.eq.f32.partialorder %v882, 8.507059e+37
        %v884 = vand.u32 %v829, 2147483648
        %v885 = vor.u32 1.1754944e-38, %v884
        %v886 = vsel %vm883, %v885, %v881
        %v887 = vmul.f32 1.0, %v886
        %v888 = vrcp.pop %v830
        %v889 = vmul.f32 %v830, %v888
        %v890 = vsub.f32 1.0, %v889
        %v891 = vmul.f32 %v888, %v890
        %v892 = vadd.f32 %v888, %v891
        %vm893 = vweird.f32 %v830
        %vm894 = vweird.f32 %v888
        %vm895 = vmor %vm893, %vm894
        %v896 = vsel %vm895, %v888, %v892
        %v897 = vand.u32 2147483647, %v830
        %vm898 = vcmp.eq.f32.partialorder %v897, 8.507059e+37
        %v899 = vand.u32 %v830, 2147483648
        %v900 = vor.u32 1.1754944e-38, %v899
        %v901 = vsel %vm898, %v900, %v896
        %v902 = vmul.f32 1.0, %v901
        %v903 = vrcp.pop %v831
        %v904 = vmul.f32 %v831, %v903
        %v905 = vsub.f32 1.0, %v904
        %v906 = vmul.f32 %v903, %v905
        %v907 = vadd.f32 %v903, %v906
        %vm908 = vweird.f32 %v831
        %vm909 = vweird.f32 %v903
        %vm910 = vmor %vm908, %vm909
        %v911 = vsel %vm910, %v903, %v907
        %v912 = vand.u32 2147483647, %v831
        %vm913 = vcmp.eq.f32.partialorder %v912, 8.507059e+37
        %v914 = vand.u32 %v831, 2147483648
        %v915 = vor.u32 1.1754944e-38, %v914
        %v916 = vsel %vm913, %v915, %v911
        %v917 = vmul.f32 1.0, %v916
        %v918 = vrcp.pop %v832
        %v919 = vmul.f32 %v832, %v918
        %v920 = vsub.f32 1.0, %v919
        %v921 = vmul.f32 %v918, %v920
        %v922 = vadd.f32 %v918, %v921
        %vm923 = vweird.f32 %v832
        %vm924 = vweird.f32 %v918
        %vm925 = vmor %vm923, %vm924
        %v926 = vsel %vm925, %v918, %v922
        %v927 = vand.u32 2147483647, %v832
        %vm928 = vcmp.eq.f32.partialorder %v927, 8.507059e+37
        %v929 = vand.u32 %v832, 2147483648
        %v930 = vor.u32 1.1754944e-38, %v929
        %v931 = vsel %vm928, %v930, %v926
        %v932 = vmul.f32 1.0, %v931
        %v933 = vrcp.pop %v833
        %v934 = vmul.f32 %v833, %v933
        %v935 = vsub.f32 1.0, %v934
        %v936 = vmul.f32 %v933, %v935
        %v937 = vadd.f32 %v933, %v936
        %vm938 = vweird.f32 %v833
        %vm939 = vweird.f32 %v933
        %vm940 = vmor %vm938, %vm939
        %v941 = vsel %vm940, %v933, %v937
        %v942 = vand.u32 2147483647, %v833
        %vm943 = vcmp.eq.f32.partialorder %v942, 8.507059e+37
        %v944 = vand.u32 %v833, 2147483648
        %v945 = vor.u32 1.1754944e-38, %v944
        %v946 = vsel %vm943, %v945, %v941
        %v947 = vmul.f32 1.0, %v946
        %v948 = vrcp.pop %v834
        %v949 = vmul.f32 %v834, %v948
        %v950 = vsub.f32 1.0, %v949
        %v951 = vmul.f32 %v948, %v950
        %v952 = vadd.f32 %v948, %v951
        %vm953 = vweird.f32 %v834
        %vm954 = vweird.f32 %v948
        %vm955 = vmor %vm953, %vm954
        %v956 = vsel %vm955, %v948, %v952
        %v957 = vand.u32 2147483647, %v834
        %vm958 = vcmp.eq.f32.partialorder %v957, 8.507059e+37
        %v959 = vand.u32 %v834, 2147483648
        %v960 = vor.u32 1.1754944e-38, %v959
        %v961 = vsel %vm958, %v960, %v956
        %v962 = vmul.f32 1.0, %v961
        %v963 = vrcp.pop %v835
        %v964 = vmul.f32 %v835, %v963
        %v965 = vsub.f32 1.0, %v964
        %v966 = vmul.f32 %v963, %v965
        %v967 = vadd.f32 %v963, %v966
        %vm968 = vweird.f32 %v835
        %vm969 = vweird.f32 %v963
        %vm970 = vmor %vm968, %vm969
        %v971 = vsel %vm970, %v963, %v967
        %v972 = vand.u32 2147483647, %v835
        %vm973 = vcmp.eq.f32.partialorder %v972, 8.507059e+37
        %v974 = vand.u32 %v835, 2147483648
        %v975 = vor.u32 1.1754944e-38, %v974
        %v976 = vsel %vm973, %v975, %v971
        %v977 = vmul.f32 1.0, %v976
        %v978 = vrcp.pop %v836
        %v979 = vmul.f32 %v836, %v978
        %v980 = vsub.f32 1.0, %v979
        %v981 = vmul.f32 %v978, %v980
        %v982 = vadd.f32 %v978, %v981
        %vm983 = vweird.f32 %v836
        %vm984 = vweird.f32 %v978
        %vm985 = vmor %vm983, %vm984
        %v986 = vsel %vm985, %v978, %v982
        %v987 = vand.u32 2147483647, %v836
        %vm988 = vcmp.eq.f32.partialorder %v987, 8.507059e+37
        %v989 = vand.u32 %v836, 2147483648
        %v990 = vor.u32 1.1754944e-38, %v989
        %v991 = vsel %vm988, %v990, %v986
        %v992 = vmul.f32 1.0, %v991
        %v993 = vrcp.pop %v837
        %v994 = vmul.f32 %v837, %v993
        %v995 = vsub.f32 1.0, %v994
        %v996 = vmul.f32 %v993, %v995
        %v997 = vadd.f32 %v993, %v996
        %vm998 = vweird.f32 %v837
        %vm999 = vweird.f32 %v993
        %vm1000 = vmor %vm998, %vm999
        %v1001 = vsel %vm1000, %v993, %v997
        %v1002 = vand.u32 2147483647, %v837
        %vm1003 = vcmp.eq.f32.partialorder %v1002, 8.507059e+37
        %v1004 = vand.u32 %v837, 2147483648
        %v1005 = vor.u32 1.1754944e-38, %v1004
        %v1006 = vsel %vm1003, %v1005, %v1001
        %v1007 = vmul.f32 1.0, %v1006
        %v1008 = vrcp.pop %v838
        %v1009 = vmul.f32 %v838, %v1008
        %v1010 = vsub.f32 1.0, %v1009
        %v1011 = vmul.f32 %v1008, %v1010
        %v1012 = vadd.f32 %v1008, %v1011
        %vm1013 = vweird.f32 %v838
        %vm1014 = vweird.f32 %v1008
        %vm1015 = vmor %vm1013, %vm1014
        %v1016 = vsel %vm1015, %v1008, %v1012
        %v1017 = vand.u32 2147483647, %v838
        %vm1018 = vcmp.eq.f32.partialorder %v1017, 8.507059e+37
        %v1019 = vand.u32 %v838, 2147483648
        %v1020 = vor.u32 1.1754944e-38, %v1019
        %v1021 = vsel %vm1018, %v1020, %v1016
        %v1022 = vmul.f32 1.0, %v1021
        %v1023 = vrcp.pop %v839
        %v1024 = vmul.f32 %v839, %v1023
        %v1025 = vsub.f32 1.0, %v1024
        %v1026 = vmul.f32 %v1023, %v1025
        %v1027 = vadd.f32 %v1023, %v1026
        %vm1028 = vweird.f32 %v839
        %vm1029 = vweird.f32 %v1023
        %vm1030 = vmor %vm1028, %vm1029
        %v1031 = vsel %vm1030, %v1023, %v1027
        %v1032 = vand.u32 2147483647, %v839
        %vm1033 = vcmp.eq.f32.partialorder %v1032, 8.507059e+37
        %v1034 = vand.u32 %v839, 2147483648
        %v1035 = vor.u32 1.1754944e-38, %v1034
        %v1036 = vsel %vm1033, %v1035, %v1031
        %v1037 = vmul.f32 1.0, %v1036
        %v1038 = vrcp.pop %v840
        %v1039 = vmul.f32 %v840, %v1038
        %v1040 = vsub.f32 1.0, %v1039
        %v1041 = vmul.f32 %v1038, %v1040
        %v1042 = vadd.f32 %v1038, %v1041
        %vm1043 = vweird.f32 %v840
        %vm1044 = vweird.f32 %v1038
        %vm1045 = vmor %vm1043, %vm1044
        %v1046 = vsel %vm1045, %v1038, %v1042
        %v1047 = vand.u32 2147483647, %v840
        %vm1048 = vcmp.eq.f32.partialorder %v1047, 8.507059e+37
        %v1049 = vand.u32 %v840, 2147483648
        %v1050 = vor.u32 1.1754944e-38, %v1049
        %v1051 = vsel %vm1048, %v1050, %v1046
        %v1052 = vmul.f32 1.0, %v1051
        %v1053 = vrcp.pop %v841
        %v1054 = vmul.f32 %v841, %v1053
        %v1055 = vsub.f32 1.0, %v1054
        %v1056 = vmul.f32 %v1053, %v1055
        %v1057 = vadd.f32 %v1053, %v1056
        %vm1058 = vweird.f32 %v841
        %vm1059 = vweird.f32 %v1053
        %vm1060 = vmor %vm1058, %vm1059
        %v1061 = vsel %vm1060, %v1053, %v1057
        %v1062 = vand.u32 2147483647, %v841
        %vm1063 = vcmp.eq.f32.partialorder %v1062, 8.507059e+37
        %v1064 = vand.u32 %v841, 2147483648
        %v1065 = vor.u32 1.1754944e-38, %v1064
        %v1066 = vsel %vm1063, %v1065, %v1061
        %v1067 = vmul.f32 1.0, %v1066
        %v1068 = vrcp.pop %v842
        %v1069 = vmul.f32 %v842, %v1068
        %v1070 = vsub.f32 1.0, %v1069
        %v1071 = vmul.f32 %v1068, %v1070
        %v1072 = vadd.f32 %v1068, %v1071
        %vm1073 = vweird.f32 %v842
        %vm1074 = vweird.f32 %v1068
        %vm1075 = vmor %vm1073, %vm1074
        %v1076 = vsel %vm1075, %v1068, %v1072
        %v1077 = vand.u32 2147483647, %v842
        %vm1078 = vcmp.eq.f32.partialorder %v1077, 8.507059e+37
        %v1079 = vand.u32 %v842, 2147483648
        %v1080 = vor.u32 1.1754944e-38, %v1079
        %v1081 = vsel %vm1078, %v1080, %v1076
        %v1082 = vmul.f32 1.0, %v1081
        %v1099 = vperm.slane %v763, 0
        %v1100 = vperm.slane %v763, 4
        %v1101 = vperm.slane %v764, 0
        %v1102 = vperm.slane %v764, 4
        %v1103 = vperm.slane %v765, 0
        %v1104 = vperm.slane %v765, 4
        %v1105 = vperm.slane %v766, 0
        %v1106 = vperm.slane %v766, 4
        %v1107 = vperm.slane %v767, 0
        %v1108 = vperm.slane %v767, 4
        %v1109 = vperm.slane %v768, 0
        %v1110 = vperm.slane %v768, 4
        %v1111 = vperm.slane %v769, 0
        %v1112 = vperm.slane %v769, 4
        %v1113 = vperm.slane %v770, 0
        %v1114 = vperm.slane %v770, 4
        %v1115 = vperm.slane %v771, 0
        %v1116 = vperm.slane %v771, 4
        %v1117 = vperm.slane %v772, 0
        %v1118 = vperm.slane %v772, 4
        %v1119 = vperm.slane %v773, 0
        %v1120 = vperm.slane %v773, 4
        %v1121 = vperm.slane %v774, 0
        %v1122 = vperm.slane %v774, 4
        %v1123 = vperm.slane %v775, 0
        %v1124 = vperm.slane %v775, 4
        %v1125 = vperm.slane %v776, 0
        %v1126 = vperm.slane %v776, 4
        %v1127 = vperm.slane %v777, 0
        %v1128 = vperm.slane %v777, 4
        %v1129 = vperm.slane %v778, 0
        %v1130 = vperm.slane %v778, 4
        %vm1131 = vcmask 1041409
        %v1132 = vsel %vm1131, %v1103, %v1099
        %vm1133 = vcmask 1042434
        %v1134 = vsel %vm1133, %v1107, %v1132
        %vm1135 = vcmask 1043459
        %v1136 = vsel %vm1135, %v1111, %v1134
        %vm1137 = vcmask 1044484
        %v1138 = vsel %vm1137, %v1115, %v1136
        %vm1139 = vcmask 1045509
        %v1140 = vsel %vm1139, %v1119, %v1138
        %vm1141 = vcmask 1046534
        %v1142 = vsel %vm1141, %v1123, %v1140
        %vm1143 = vcmask 1047559
        %v1144 = vsel %vm1143, %v1127, %v1142
        %v1145 = vsel %vm1131, %v1104, %v1100
        %v1146 = vsel %vm1133, %v1108, %v1145
        %v1147 = vsel %vm1135, %v1112, %v1146
        %v1148 = vsel %vm1137, %v1116, %v1147
        %v1149 = vsel %vm1139, %v1120, %v1148
        %v1150 = vsel %vm1141, %v1124, %v1149
        %v1151 = vsel %vm1143, %v1128, %v1150
        %v1152 = vsel %vm1131, %v1105, %v1101
        %v1153 = vsel %vm1133, %v1109, %v1152
        %v1154 = vsel %vm1135, %v1113, %v1153
        %v1155 = vsel %vm1137, %v1117, %v1154
        %v1156 = vsel %vm1139, %v1121, %v1155
        %v1157 = vsel %vm1141, %v1125, %v1156
        %v1158 = vsel %vm1143, %v1129, %v1157
        %v1159 = vsel %vm1131, %v1106, %v1102
        %v1160 = vsel %vm1133, %v1110, %v1159
        %v1161 = vsel %vm1135, %v1114, %v1160
        %v1162 = vsel %vm1137, %v1118, %v1161
        %v1163 = vsel %vm1139, %v1122, %v1162
        %v1164 = vsel %vm1141, %v1126, %v1163
        %v1165 = vsel %vm1143, %v1130, %v1164
        %v1186 = vperm.slane %v857, 0
        %v1187 = vperm.slane %v857, 4
        %v1188 = vperm.slane %v872, 0
        %v1189 = vperm.slane %v872, 4
        %v1190 = vperm.slane %v887, 0
        %v1191 = vperm.slane %v887, 4
        %v1192 = vperm.slane %v902, 0
        %v1193 = vperm.slane %v902, 4
        %v1194 = vperm.slane %v917, 0
        %v1195 = vperm.slane %v917, 4
        %v1196 = vperm.slane %v932, 0
        %v1197 = vperm.slane %v932, 4
        %v1198 = vperm.slane %v947, 0
        %v1199 = vperm.slane %v947, 4
        %v1200 = vperm.slane %v962, 0
        %v1201 = vperm.slane %v962, 4
        %v1202 = vperm.slane %v977, 0
        %v1203 = vperm.slane %v977, 4
        %v1204 = vperm.slane %v992, 0
        %v1205 = vperm.slane %v992, 4
        %v1206 = vperm.slane %v1007, 0
        %v1207 = vperm.slane %v1007, 4
        %v1208 = vperm.slane %v1022, 0
        %v1209 = vperm.slane %v1022, 4
        %v1210 = vperm.slane %v1037, 0
        %v1211 = vperm.slane %v1037, 4
        %v1212 = vperm.slane %v1052, 0
        %v1213 = vperm.slane %v1052, 4
        %v1214 = vperm.slane %v1067, 0
        %v1215 = vperm.slane %v1067, 4
        %v1216 = vperm.slane %v1082, 0
        %v1217 = vperm.slane %v1082, 4
        %v1218 = vsel %vm1131, %v1190, %v1186
        %v1219 = vsel %vm1133, %v1194, %v1218
        %v1220 = vsel %vm1135, %v1198, %v1219
        %v1221 = vsel %vm1137, %v1202, %v1220
        %v1222 = vsel %vm1139, %v1206, %v1221
        %v1223 = vsel %vm1141, %v1210, %v1222
        %v1224 = vsel %vm1143, %v1214, %v1223
        %v1225 = vsel %vm1131, %v1191, %v1187
        %v1226 = vsel %vm1133, %v1195, %v1225
        %v1227 = vsel %vm1135, %v1199, %v1226
        %v1228 = vsel %vm1137, %v1203, %v1227
        %v1229 = vsel %vm1139, %v1207, %v1228
        %v1230 = vsel %vm1141, %v1211, %v1229
        %v1231 = vsel %vm1143, %v1215, %v1230
        %v1232 = vsel %vm1131, %v1192, %v1188
        %v1233 = vsel %vm1133, %v1196, %v1232
        %v1234 = vsel %vm1135, %v1200, %v1233
        %v1235 = vsel %vm1137, %v1204, %v1234
        %v1236 = vsel %vm1139, %v1208, %v1235
        %v1237 = vsel %vm1141, %v1212, %v1236
        %v1238 = vsel %vm1143, %v1216, %v1237
        %v1239 = vsel %vm1131, %v1193, %v1189
        %v1240 = vsel %vm1133, %v1197, %v1239
        %v1241 = vsel %vm1135, %v1201, %v1240
        %v1242 = vsel %vm1137, %v1205, %v1241
        %v1243 = vsel %vm1139, %v1209, %v1242
        %v1244 = vsel %vm1141, %v1213, %v1243
        %v1245 = vsel %vm1143, %v1217, %v1244
        %v1250 = vsel %vm559, %v1144, %v1224
        %v1251 = vsel %vm560, %v1151, %v1231
        %v1252 = vsel %vm561, %v1158, %v1238
        %v1253 = vsel %vm562, %v1165, %v1245
        %v1254 = vmul.f32 %v1251, 0.0
        %v1255 = vmul.f32 %v1250, %v1252
        %v1256 = vadd.f32 %v1254, %v1255
        %v1257 = vtanh.pop %v1256
        %v1258 = vmul.f32 %v1253, %v1257
        %1259 = vmatpush.msra.mxu0 %v623
        %1260 = vmatpush.msra.mxu0 %v619
        %1261 = vmatpush.msra.mxu0 %v615
        %1262 = vmatpush.msra.mxu0 %v611
        %1263 = vmatpush.msra.mxu0 %v607
        %1264 = vmatpush.msra.mxu0 %v603
        %1265 = vmatpush.msra.mxu0 %v599
        %1266 = vmatpush.msra.mxu0 %v595
        %1267 = vmatpush.msra.mxu0 %v591
        %1268 = vmatpush.msra.mxu0 %v587
        %1269 = vmatpush.msra.mxu0 %v583
        %1270 = vmatpush.msra.mxu0 %v579
        %1271 = vmatpush.msra.mxu0 %v575
        %1272 = vmatpush.msra.mxu0 %v571
        %1273 = vmatpush.msra.mxu0 %v567
        %1274 = vmatpush.msra.mxu0 %v563
        %1275 = vmatmul.f32.gmra.mxu0 %v1258
        %v1276 = vpop.f32.mrf.mxu0
        %v1277 = vadd.f32 0.0, %v1276
        %1278 = vdwg.mxu0
        %1279 = vmatpush.msra.mxu0 %v624
        %1280 = vmatpush.msra.mxu0 %v620
        %1281 = vmatpush.msra.mxu0 %v616
        %1282 = vmatpush.msra.mxu0 %v612
        %1283 = vmatpush.msra.mxu0 %v608
        %1284 = vmatpush.msra.mxu0 %v604
        %1285 = vmatpush.msra.mxu0 %v600
        %1286 = vmatpush.msra.mxu0 %v596
        %1287 = vmatpush.msra.mxu0 %v592
        %1288 = vmatpush.msra.mxu0 %v588
        %1289 = vmatpush.msra.mxu0 %v584
        %1290 = vmatpush.msra.mxu0 %v580
        %1291 = vmatpush.msra.mxu0 %v576
        %1292 = vmatpush.msra.mxu0 %v572
        %1293 = vmatpush.msra.mxu0 %v568
        %1294 = vmatpush.msra.mxu0 %v564
        %1295 = vmatmul.f32.gmra.mxu0 %v1258
        %v1296 = vpop.f32.mrf.mxu0
        %v1297 = vadd.f32 0.0, %v1296
        %1298 = vdwg.mxu0
        %1299 = vmatpush.msra.mxu0 %v625
        %1300 = vmatpush.msra.mxu0 %v621
        %1301 = vmatpush.msra.mxu0 %v617
        %1302 = vmatpush.msra.mxu0 %v613
        %1303 = vmatpush.msra.mxu0 %v609
        %1304 = vmatpush.msra.mxu0 %v605
        %1305 = vmatpush.msra.mxu0 %v601
        %1306 = vmatpush.msra.mxu0 %v597
        %1307 = vmatpush.msra.mxu0 %v593
        %1308 = vmatpush.msra.mxu0 %v589
        %1309 = vmatpush.msra.mxu0 %v585
        %1310 = vmatpush.msra.mxu0 %v581
        %1311 = vmatpush.msra.mxu0 %v577
        %1312 = vmatpush.msra.mxu0 %v573
        %1313 = vmatpush.msra.mxu0 %v569
        %1314 = vmatpush.msra.mxu0 %v565
        %1315 = vmatmul.f32.gmra.mxu0 %v1258
        %v1316 = vpop.f32.mrf.mxu0
        %v1317 = vadd.f32 0.0, %v1316
        %1318 = vdwg.mxu0
        %1319 = vmatpush.msra.mxu0 %v626
        %1320 = vmatpush.msra.mxu0 %v622
        %1321 = vmatpush.msra.mxu0 %v618
        %1322 = vmatpush.msra.mxu0 %v614
        %1323 = vmatpush.msra.mxu0 %v610
        %1324 = vmatpush.msra.mxu0 %v606
        %1325 = vmatpush.msra.mxu0 %v602
        %1326 = vmatpush.msra.mxu0 %v598
        %1327 = vmatpush.msra.mxu0 %v594
        %1328 = vmatpush.msra.mxu0 %v590
        %1329 = vmatpush.msra.mxu0 %v586
        %1330 = vmatpush.msra.mxu0 %v582
        %1331 = vmatpush.msra.mxu0 %v578
        %1332 = vmatpush.msra.mxu0 %v574
        %1333 = vmatpush.msra.mxu0 %v570
        %1334 = vmatpush.msra.mxu0 %v566
        %1335 = vmatmul.f32.gmra.mxu0 %v1258
        %v1336 = vpop.f32.mrf.mxu0
        %v1337 = vadd.f32 0.0, %v1336
        %1338 = vdwg.mxu0
        %v1343 = vrot.slane %v1297, 4
        %v1344 = vrot.slane %v1337, 4
        %v1345 = vsel %vm505, %v1277, %v1343
        %v1346 = vsel %vm505, %v1317, %v1344
        %v1347 = vsel %vm505, %v1343, %v1277
        %v1348 = vrot.slane %v1347, 4
        %v1349 = vsel %vm505, %v1344, %v1317
        %v1350 = vrot.slane %v1349, 4
        %v1351 = vrot.slane %v1345, 7
        %v1352 = vrot.slane %v1346, 7
        %v1353 = vrot.slane %v1345, 1
        %v1354 = vrot.slane %v1346, 1
        %v1355 = vrot.slane %v1345, 2
        %v1356 = vrot.slane %v1346, 2
        %v1357 = vrot.slane %v1348, 7
        %v1358 = vrot.slane %v1350, 7
        %v1359 = vrot.slane %v1348, 1
        %v1360 = vrot.slane %v1350, 1
        %v1361 = vrot.slane %v1348, 2
        %v1362 = vrot.slane %v1350, 2
        %v1379 = vadd.f32 %v506, %v1351
        %v1380 = vadd.f32 %v507, %v1352
        %v1381 = vadd.f32 %v509, %v1345
        %v1382 = vadd.f32 %v511, %v1346
        %v1383 = vadd.f32 %v512, %v1353
        %v1384 = vadd.f32 %v513, %v1354
        %v1385 = vadd.f32 %v515, %v1355
        %v1386 = vadd.f32 %v517, %v1356
        %v1387 = vadd.f32 %v518, %v1357
        %v1388 = vadd.f32 %v519, %v1358
        %v1389 = vadd.f32 %v521, %v1348
        %v1390 = vadd.f32 %v523, %v1350
        %v1391 = vadd.f32 %v524, %v1359
        %v1392 = vadd.f32 %v525, %v1360
        %v1393 = vadd.f32 %v527, %v1361
        %v1394 = vadd.f32 %v529, %v1362
        %v1395 = vtanh.pop %v1379
        %v1396 = vtanh.pop %v1380
        %v1397 = vtanh.pop %v1381
        %v1398 = vtanh.pop %v1382
        %v1399 = vtanh.pop %v1383
        %v1400 = vtanh.pop %v1384
        %v1401 = vtanh.pop %v1385
        %v1402 = vtanh.pop %v1386
        %v1403 = vtanh.pop %v1387
        %v1404 = vtanh.pop %v1388
        %v1405 = vtanh.pop %v1389
        %v1406 = vtanh.pop %v1390
        %v1407 = vtanh.pop %v1391
        %v1408 = vtanh.pop %v1392
        %v1409 = vtanh.pop %v1393
        %v1410 = vtanh.pop %v1394
        %v1411 = vxor.u32 %v1379, 2147483648
        %v1412 = vxor.u32 %v1380, 2147483648
        %v1413 = vxor.u32 %v1381, 2147483648
        %v1414 = vxor.u32 %v1382, 2147483648
        %v1415 = vxor.u32 %v1383, 2147483648
        %v1416 = vxor.u32 %v1384, 2147483648
        %v1417 = vxor.u32 %v1385, 2147483648
        %v1418 = vxor.u32 %v1386, 2147483648
        %v1419 = vxor.u32 %v1387, 2147483648
        %v1420 = vxor.u32 %v1388, 2147483648
        %v1421 = vxor.u32 %v1389, 2147483648
        %v1422 = vxor.u32 %v1390, 2147483648
        %v1423 = vxor.u32 %v1391, 2147483648
        %v1424 = vxor.u32 %v1392, 2147483648
        %v1425 = vxor.u32 %v1393, 2147483648
        %v1426 = vxor.u32 %v1394, 2147483648
        %v1427 = vmul.f32 %v1411, 1.442695
        %v1428 = vpow.pop %v1427
        %v1429 = vmul.f32 %v1412, 1.442695
        %v1430 = vpow.pop %v1429
        %v1431 = vmul.f32 %v1413, 1.442695
        %v1432 = vpow.pop %v1431
        %v1433 = vmul.f32 %v1414, 1.442695
        %v1434 = vpow.pop %v1433
        %v1435 = vmul.f32 %v1415, 1.442695
        %v1436 = vpow.pop %v1435
        %v1437 = vmul.f32 %v1416, 1.442695
        %v1438 = vpow.pop %v1437
        %v1439 = vmul.f32 %v1417, 1.442695
        %v1440 = vpow.pop %v1439
        %v1441 = vmul.f32 %v1418, 1.442695
        %v1442 = vpow.pop %v1441
        %v1443 = vmul.f32 %v1419, 1.442695
        %v1444 = vpow.pop %v1443
        %v1445 = vmul.f32 %v1420, 1.442695
        %v1446 = vpow.pop %v1445
        %v1447 = vmul.f32 %v1421, 1.442695
        %v1448 = vpow.pop %v1447
        %v1449 = vmul.f32 %v1422, 1.442695
        %v1450 = vpow.pop %v1449
        %v1451 = vmul.f32 %v1423, 1.442695
        %v1452 = vpow.pop %v1451
        %v1453 = vmul.f32 %v1424, 1.442695
        %v1454 = vpow.pop %v1453
        %v1455 = vmul.f32 %v1425, 1.442695
        %v1456 = vpow.pop %v1455
        %v1457 = vmul.f32 %v1426, 1.442695
        %v1458 = vpow.pop %v1457
        %v1459 = vadd.f32 %v1428, 1.0
        %v1460 = vadd.f32 %v1430, 1.0
        %v1461 = vadd.f32 %v1432, 1.0
        %v1462 = vadd.f32 %v1434, 1.0
        %v1463 = vadd.f32 %v1436, 1.0
        %v1464 = vadd.f32 %v1438, 1.0
        %v1465 = vadd.f32 %v1440, 1.0
        %v1466 = vadd.f32 %v1442, 1.0
        %v1467 = vadd.f32 %v1444, 1.0
        %v1468 = vadd.f32 %v1446, 1.0
        %v1469 = vadd.f32 %v1448, 1.0
        %v1470 = vadd.f32 %v1450, 1.0
        %v1471 = vadd.f32 %v1452, 1.0
        %v1472 = vadd.f32 %v1454, 1.0
        %v1473 = vadd.f32 %v1456, 1.0
        %v1474 = vadd.f32 %v1458, 1.0
        %v1475 = vrcp.pop %v1459
        %v1476 = vmul.f32 %v1459, %v1475
        %v1477 = vsub.f32 1.0, %v1476
        %v1478 = vmul.f32 %v1475, %v1477
        %v1479 = vadd.f32 %v1475, %v1478
        %vm1480 = vweird.f32 %v1459
        %vm1481 = vweird.f32 %v1475
        %vm1482 = vmor %vm1480, %vm1481
        %v1483 = vsel %vm1482, %v1475, %v1479
        %v1484 = vand.u32 2147483647, %v1459
        %vm1485 = vcmp.eq.f32.partialorder %v1484, 8.507059e+37
        %v1486 = vand.u32 %v1459, 2147483648
        %v1487 = vor.u32 1.1754944e-38, %v1486
        %v1488 = vsel %vm1485, %v1487, %v1483
        %v1489 = vmul.f32 1.0, %v1488
        %v1490 = vrcp.pop %v1460
        %v1491 = vmul.f32 %v1460, %v1490
        %v1492 = vsub.f32 1.0, %v1491
        %v1493 = vmul.f32 %v1490, %v1492
        %v1494 = vadd.f32 %v1490, %v1493
        %vm1495 = vweird.f32 %v1460
        %vm1496 = vweird.f32 %v1490
        %vm1497 = vmor %vm1495, %vm1496
        %v1498 = vsel %vm1497, %v1490, %v1494
        %v1499 = vand.u32 2147483647, %v1460
        %vm1500 = vcmp.eq.f32.partialorder %v1499, 8.507059e+37
        %v1501 = vand.u32 %v1460, 2147483648
        %v1502 = vor.u32 1.1754944e-38, %v1501
        %v1503 = vsel %vm1500, %v1502, %v1498
        %v1504 = vmul.f32 1.0, %v1503
        %v1505 = vrcp.pop %v1461
        %v1506 = vmul.f32 %v1461, %v1505
        %v1507 = vsub.f32 1.0, %v1506
        %v1508 = vmul.f32 %v1505, %v1507
        %v1509 = vadd.f32 %v1505, %v1508
        %vm1510 = vweird.f32 %v1461
        %vm1511 = vweird.f32 %v1505
        %vm1512 = vmor %vm1510, %vm1511
        %v1513 = vsel %vm1512, %v1505, %v1509
        %v1514 = vand.u32 2147483647, %v1461
        %vm1515 = vcmp.eq.f32.partialorder %v1514, 8.507059e+37
        %v1516 = vand.u32 %v1461, 2147483648
        %v1517 = vor.u32 1.1754944e-38, %v1516
        %v1518 = vsel %vm1515, %v1517, %v1513
        %v1519 = vmul.f32 1.0, %v1518
        %v1520 = vrcp.pop %v1462
        %v1521 = vmul.f32 %v1462, %v1520
        %v1522 = vsub.f32 1.0, %v1521
        %v1523 = vmul.f32 %v1520, %v1522
        %v1524 = vadd.f32 %v1520, %v1523
        %vm1525 = vweird.f32 %v1462
        %vm1526 = vweird.f32 %v1520
        %vm1527 = vmor %vm1525, %vm1526
        %v1528 = vsel %vm1527, %v1520, %v1524
        %v1529 = vand.u32 2147483647, %v1462
        %vm1530 = vcmp.eq.f32.partialorder %v1529, 8.507059e+37
        %v1531 = vand.u32 %v1462, 2147483648
        %v1532 = vor.u32 1.1754944e-38, %v1531
        %v1533 = vsel %vm1530, %v1532, %v1528
        %v1534 = vmul.f32 1.0, %v1533
        %v1535 = vrcp.pop %v1463
        %v1536 = vmul.f32 %v1463, %v1535
        %v1537 = vsub.f32 1.0, %v1536
        %v1538 = vmul.f32 %v1535, %v1537
        %v1539 = vadd.f32 %v1535, %v1538
        %vm1540 = vweird.f32 %v1463
        %vm1541 = vweird.f32 %v1535
        %vm1542 = vmor %vm1540, %vm1541
        %v1543 = vsel %vm1542, %v1535, %v1539
        %v1544 = vand.u32 2147483647, %v1463
        %vm1545 = vcmp.eq.f32.partialorder %v1544, 8.507059e+37
        %v1546 = vand.u32 %v1463, 2147483648
        %v1547 = vor.u32 1.1754944e-38, %v1546
        %v1548 = vsel %vm1545, %v1547, %v1543
        %v1549 = vmul.f32 1.0, %v1548
        %v1550 = vrcp.pop %v1464
        %v1551 = vmul.f32 %v1464, %v1550
        %v1552 = vsub.f32 1.0, %v1551
        %v1553 = vmul.f32 %v1550, %v1552
        %v1554 = vadd.f32 %v1550, %v1553
        %vm1555 = vweird.f32 %v1464
        %vm1556 = vweird.f32 %v1550
        %vm1557 = vmor %vm1555, %vm1556
        %v1558 = vsel %vm1557, %v1550, %v1554
        %v1559 = vand.u32 2147483647, %v1464
        %vm1560 = vcmp.eq.f32.partialorder %v1559, 8.507059e+37
        %v1561 = vand.u32 %v1464, 2147483648
        %v1562 = vor.u32 1.1754944e-38, %v1561
        %v1563 = vsel %vm1560, %v1562, %v1558
        %v1564 = vmul.f32 1.0, %v1563
        %v1565 = vrcp.pop %v1465
        %v1566 = vmul.f32 %v1465, %v1565
        %v1567 = vsub.f32 1.0, %v1566
        %v1568 = vmul.f32 %v1565, %v1567
        %v1569 = vadd.f32 %v1565, %v1568
        %vm1570 = vweird.f32 %v1465
        %vm1571 = vweird.f32 %v1565
        %vm1572 = vmor %vm1570, %vm1571
        %v1573 = vsel %vm1572, %v1565, %v1569
        %v1574 = vand.u32 2147483647, %v1465
        %vm1575 = vcmp.eq.f32.partialorder %v1574, 8.507059e+37
        %v1576 = vand.u32 %v1465, 2147483648
        %v1577 = vor.u32 1.1754944e-38, %v1576
        %v1578 = vsel %vm1575, %v1577, %v1573
        %v1579 = vmul.f32 1.0, %v1578
        %v1580 = vrcp.pop %v1466
        %v1581 = vmul.f32 %v1466, %v1580
        %v1582 = vsub.f32 1.0, %v1581
        %v1583 = vmul.f32 %v1580, %v1582
        %v1584 = vadd.f32 %v1580, %v1583
        %vm1585 = vweird.f32 %v1466
        %vm1586 = vweird.f32 %v1580
        %vm1587 = vmor %vm1585, %vm1586
        %v1588 = vsel %vm1587, %v1580, %v1584
        %v1589 = vand.u32 2147483647, %v1466
        %vm1590 = vcmp.eq.f32.partialorder %v1589, 8.507059e+37
        %v1591 = vand.u32 %v1466, 2147483648
        %v1592 = vor.u32 1.1754944e-38, %v1591
        %v1593 = vsel %vm1590, %v1592, %v1588
        %v1594 = vmul.f32 1.0, %v1593
        %v1595 = vrcp.pop %v1467
        %v1596 = vmul.f32 %v1467, %v1595
        %v1597 = vsub.f32 1.0, %v1596
        %v1598 = vmul.f32 %v1595, %v1597
        %v1599 = vadd.f32 %v1595, %v1598
        %vm1600 = vweird.f32 %v1467
        %vm1601 = vweird.f32 %v1595
        %vm1602 = vmor %vm1600, %vm1601
        %v1603 = vsel %vm1602, %v1595, %v1599
        %v1604 = vand.u32 2147483647, %v1467
        %vm1605 = vcmp.eq.f32.partialorder %v1604, 8.507059e+37
        %v1606 = vand.u32 %v1467, 2147483648
        %v1607 = vor.u32 1.1754944e-38, %v1606
        %v1608 = vsel %vm1605, %v1607, %v1603
        %v1609 = vmul.f32 1.0, %v1608
        %v1610 = vrcp.pop %v1468
        %v1611 = vmul.f32 %v1468, %v1610
        %v1612 = vsub.f32 1.0, %v1611
        %v1613 = vmul.f32 %v1610, %v1612
        %v1614 = vadd.f32 %v1610, %v1613
        %vm1615 = vweird.f32 %v1468
        %vm1616 = vweird.f32 %v1610
        %vm1617 = vmor %vm1615, %vm1616
        %v1618 = vsel %vm1617, %v1610, %v1614
        %v1619 = vand.u32 2147483647, %v1468
        %vm1620 = vcmp.eq.f32.partialorder %v1619, 8.507059e+37
        %v1621 = vand.u32 %v1468, 2147483648
        %v1622 = vor.u32 1.1754944e-38, %v1621
        %v1623 = vsel %vm1620, %v1622, %v1618
        %v1624 = vmul.f32 1.0, %v1623
        %v1625 = vrcp.pop %v1469
        %v1626 = vmul.f32 %v1469, %v1625
        %v1627 = vsub.f32 1.0, %v1626
        %v1628 = vmul.f32 %v1625, %v1627
        %v1629 = vadd.f32 %v1625, %v1628
        %vm1630 = vweird.f32 %v1469
        %vm1631 = vweird.f32 %v1625
        %vm1632 = vmor %vm1630, %vm1631
        %v1633 = vsel %vm1632, %v1625, %v1629
        %v1634 = vand.u32 2147483647, %v1469
        %vm1635 = vcmp.eq.f32.partialorder %v1634, 8.507059e+37
        %v1636 = vand.u32 %v1469, 2147483648
        %v1637 = vor.u32 1.1754944e-38, %v1636
        %v1638 = vsel %vm1635, %v1637, %v1633
        %v1639 = vmul.f32 1.0, %v1638
        %v1640 = vrcp.pop %v1470
        %v1641 = vmul.f32 %v1470, %v1640
        %v1642 = vsub.f32 1.0, %v1641
        %v1643 = vmul.f32 %v1640, %v1642
        %v1644 = vadd.f32 %v1640, %v1643
        %vm1645 = vweird.f32 %v1470
        %vm1646 = vweird.f32 %v1640
        %vm1647 = vmor %vm1645, %vm1646
        %v1648 = vsel %vm1647, %v1640, %v1644
        %v1649 = vand.u32 2147483647, %v1470
        %vm1650 = vcmp.eq.f32.partialorder %v1649, 8.507059e+37
        %v1651 = vand.u32 %v1470, 2147483648
        %v1652 = vor.u32 1.1754944e-38, %v1651
        %v1653 = vsel %vm1650, %v1652, %v1648
        %v1654 = vmul.f32 1.0, %v1653
        %v1655 = vrcp.pop %v1471
        %v1656 = vmul.f32 %v1471, %v1655
        %v1657 = vsub.f32 1.0, %v1656
        %v1658 = vmul.f32 %v1655, %v1657
        %v1659 = vadd.f32 %v1655, %v1658
        %vm1660 = vweird.f32 %v1471
        %vm1661 = vweird.f32 %v1655
        %vm1662 = vmor %vm1660, %vm1661
        %v1663 = vsel %vm1662, %v1655, %v1659
        %v1664 = vand.u32 2147483647, %v1471
        %vm1665 = vcmp.eq.f32.partialorder %v1664, 8.507059e+37
        %v1666 = vand.u32 %v1471, 2147483648
        %v1667 = vor.u32 1.1754944e-38, %v1666
        %v1668 = vsel %vm1665, %v1667, %v1663
        %v1669 = vmul.f32 1.0, %v1668
        %v1670 = vrcp.pop %v1472
        %v1671 = vmul.f32 %v1472, %v1670
        %v1672 = vsub.f32 1.0, %v1671
        %v1673 = vmul.f32 %v1670, %v1672
        %v1674 = vadd.f32 %v1670, %v1673
        %vm1675 = vweird.f32 %v1472
        %vm1676 = vweird.f32 %v1670
        %vm1677 = vmor %vm1675, %vm1676
        %v1678 = vsel %vm1677, %v1670, %v1674
        %v1679 = vand.u32 2147483647, %v1472
        %vm1680 = vcmp.eq.f32.partialorder %v1679, 8.507059e+37
        %v1681 = vand.u32 %v1472, 2147483648
        %v1682 = vor.u32 1.1754944e-38, %v1681
        %v1683 = vsel %vm1680, %v1682, %v1678
        %v1684 = vmul.f32 1.0, %v1683
        %v1685 = vrcp.pop %v1473
        %v1686 = vmul.f32 %v1473, %v1685
        %v1687 = vsub.f32 1.0, %v1686
        %v1688 = vmul.f32 %v1685, %v1687
        %v1689 = vadd.f32 %v1685, %v1688
        %vm1690 = vweird.f32 %v1473
        %vm1691 = vweird.f32 %v1685
        %vm1692 = vmor %vm1690, %vm1691
        %v1693 = vsel %vm1692, %v1685, %v1689
        %v1694 = vand.u32 2147483647, %v1473
        %vm1695 = vcmp.eq.f32.partialorder %v1694, 8.507059e+37
        %v1696 = vand.u32 %v1473, 2147483648
        %v1697 = vor.u32 1.1754944e-38, %v1696
        %v1698 = vsel %vm1695, %v1697, %v1693
        %v1699 = vmul.f32 1.0, %v1698
        %v1700 = vrcp.pop %v1474
        %v1701 = vmul.f32 %v1474, %v1700
        %v1702 = vsub.f32 1.0, %v1701
        %v1703 = vmul.f32 %v1700, %v1702
        %v1704 = vadd.f32 %v1700, %v1703
        %vm1705 = vweird.f32 %v1474
        %vm1706 = vweird.f32 %v1700
        %vm1707 = vmor %vm1705, %vm1706
        %v1708 = vsel %vm1707, %v1700, %v1704
        %v1709 = vand.u32 2147483647, %v1474
        %vm1710 = vcmp.eq.f32.partialorder %v1709, 8.507059e+37
        %v1711 = vand.u32 %v1474, 2147483648
        %v1712 = vor.u32 1.1754944e-38, %v1711
        %v1713 = vsel %vm1710, %v1712, %v1708
        %v1714 = vmul.f32 1.0, %v1713
        %v1731 = vperm.slane %v1395, 1
        %v1732 = vperm.slane %v1395, 5
        %v1733 = vperm.slane %v1396, 1
        %v1734 = vperm.slane %v1396, 5
        %v1735 = vperm.slane %v1397, 1
        %v1736 = vperm.slane %v1397, 5
        %v1737 = vperm.slane %v1398, 1
        %v1738 = vperm.slane %v1398, 5
        %v1739 = vperm.slane %v1399, 1
        %v1740 = vperm.slane %v1399, 5
        %v1741 = vperm.slane %v1400, 1
        %v1742 = vperm.slane %v1400, 5
        %v1743 = vperm.slane %v1401, 1
        %v1744 = vperm.slane %v1401, 5
        %v1745 = vperm.slane %v1402, 1
        %v1746 = vperm.slane %v1402, 5
        %v1747 = vperm.slane %v1403, 1
        %v1748 = vperm.slane %v1403, 5
        %v1749 = vperm.slane %v1404, 1
        %v1750 = vperm.slane %v1404, 5
        %v1751 = vperm.slane %v1405, 1
        %v1752 = vperm.slane %v1405, 5
        %v1753 = vperm.slane %v1406, 1
        %v1754 = vperm.slane %v1406, 5
        %v1755 = vperm.slane %v1407, 1
        %v1756 = vperm.slane %v1407, 5
        %v1757 = vperm.slane %v1408, 1
        %v1758 = vperm.slane %v1408, 5
        %v1759 = vperm.slane %v1409, 1
        %v1760 = vperm.slane %v1409, 5
        %v1761 = vperm.slane %v1410, 1
        %v1762 = vperm.slane %v1410, 5
        %v1763 = vsel %vm1131, %v1735, %v1731
        %v1764 = vsel %vm1133, %v1739, %v1763
        %v1765 = vsel %vm1135, %v1743, %v1764
        %v1766 = vsel %vm1137, %v1747, %v1765
        %v1767 = vsel %vm1139, %v1751, %v1766
        %v1768 = vsel %vm1141, %v1755, %v1767
        %v1769 = vsel %vm1143, %v1759, %v1768
        %v1770 = vsel %vm1131, %v1736, %v1732
        %v1771 = vsel %vm1133, %v1740, %v1770
        %v1772 = vsel %vm1135, %v1744, %v1771
        %v1773 = vsel %vm1137, %v1748, %v1772
        %v1774 = vsel %vm1139, %v1752, %v1773
        %v1775 = vsel %vm1141, %v1756, %v1774
        %v1776 = vsel %vm1143, %v1760, %v1775
        %v1777 = vsel %vm1131, %v1737, %v1733
        %v1778 = vsel %vm1133, %v1741, %v1777
        %v1779 = vsel %vm1135, %v1745, %v1778
        %v1780 = vsel %vm1137, %v1749, %v1779
        %v1781 = vsel %vm1139, %v1753, %v1780
        %v1782 = vsel %vm1141, %v1757, %v1781
        %v1783 = vsel %vm1143, %v1761, %v1782
        %v1784 = vsel %vm1131, %v1738, %v1734
        %v1785 = vsel %vm1133, %v1742, %v1784
        %v1786 = vsel %vm1135, %v1746, %v1785
        %v1787 = vsel %vm1137, %v1750, %v1786
        %v1788 = vsel %vm1139, %v1754, %v1787
        %v1789 = vsel %vm1141, %v1758, %v1788
        %v1790 = vsel %vm1143, %v1762, %v1789
        %v1811 = vperm.slane %v1489, 1
        %v1812 = vperm.slane %v1489, 5
        %v1813 = vperm.slane %v1504, 1
        %v1814 = vperm.slane %v1504, 5
        %v1815 = vperm.slane %v1519, 1
        %v1816 = vperm.slane %v1519, 5
        %v1817 = vperm.slane %v1534, 1
        %v1818 = vperm.slane %v1534, 5
        %v1819 = vperm.slane %v1549, 1
        %v1820 = vperm.slane %v1549, 5
        %v1821 = vperm.slane %v1564, 1
        %v1822 = vperm.slane %v1564, 5
        %v1823 = vperm.slane %v1579, 1
        %v1824 = vperm.slane %v1579, 5
        %v1825 = vperm.slane %v1594, 1
        %v1826 = vperm.slane %v1594, 5
        %v1827 = vperm.slane %v1609, 1
        %v1828 = vperm.slane %v1609, 5
        %v1829 = vperm.slane %v1624, 1
        %v1830 = vperm.slane %v1624, 5
        %v1831 = vperm.slane %v1639, 1
        %v1832 = vperm.slane %v1639, 5
        %v1833 = vperm.slane %v1654, 1
        %v1834 = vperm.slane %v1654, 5
        %v1835 = vperm.slane %v1669, 1
        %v1836 = vperm.slane %v1669, 5
        %v1837 = vperm.slane %v1684, 1
        %v1838 = vperm.slane %v1684, 5
        %v1839 = vperm.slane %v1699, 1
        %v1840 = vperm.slane %v1699, 5
        %v1841 = vperm.slane %v1714, 1
        %v1842 = vperm.slane %v1714, 5
        %v1843 = vsel %vm1131, %v1815, %v1811
        %v1844 = vsel %vm1133, %v1819, %v1843
        %v1845 = vsel %vm1135, %v1823, %v1844
        %v1846 = vsel %vm1137, %v1827, %v1845
        %v1847 = vsel %vm1139, %v1831, %v1846
        %v1848 = vsel %vm1141, %v1835, %v1847
        %v1849 = vsel %vm1143, %v1839, %v1848
        %v1850 = vsel %vm1131, %v1816, %v1812
        %v1851 = vsel %vm1133, %v1820, %v1850
        %v1852 = vsel %vm1135, %v1824, %v1851
        %v1853 = vsel %vm1137, %v1828, %v1852
        %v1854 = vsel %vm1139, %v1832, %v1853
        %v1855 = vsel %vm1141, %v1836, %v1854
        %v1856 = vsel %vm1143, %v1840, %v1855
        %v1857 = vsel %vm1131, %v1817, %v1813
        %v1858 = vsel %vm1133, %v1821, %v1857
        %v1859 = vsel %vm1135, %v1825, %v1858
        %v1860 = vsel %vm1137, %v1829, %v1859
        %v1861 = vsel %vm1139, %v1833, %v1860
        %v1862 = vsel %vm1141, %v1837, %v1861
        %v1863 = vsel %vm1143, %v1841, %v1862
        %v1864 = vsel %vm1131, %v1818, %v1814
        %v1865 = vsel %vm1133, %v1822, %v1864
        %v1866 = vsel %vm1135, %v1826, %v1865
        %v1867 = vsel %vm1137, %v1830, %v1866
        %v1868 = vsel %vm1139, %v1834, %v1867
        %v1869 = vsel %vm1141, %v1838, %v1868
        %v1870 = vsel %vm1143, %v1842, %v1869
        %v1875 = vsel %vm559, %v1769, %v1849
        %v1876 = vsel %vm560, %v1776, %v1856
        %v1877 = vsel %vm561, %v1783, %v1863
        %v1878 = vsel %vm562, %v1790, %v1870
        %v1879 = vmul.f32 %v1876, %v1256
        %v1880 = vmul.f32 %v1875, %v1877
        %v1881 = vadd.f32 %v1879, %v1880
        %v1882 = vtanh.pop %v1881
        %v1883 = vmul.f32 %v1878, %v1882
        %1884 = vmatpush.msra.mxu0 %v623
        %1885 = vmatpush.msra.mxu0 %v619
        %1886 = vmatpush.msra.mxu0 %v615
        %1887 = vmatpush.msra.mxu0 %v611
        %1888 = vmatpush.msra.mxu0 %v607
        %1889 = vmatpush.msra.mxu0 %v603
        %1890 = vmatpush.msra.mxu0 %v599
        %1891 = vmatpush.msra.mxu0 %v595
        %1892 = vmatpush.msra.mxu0 %v591
        %1893 = vmatpush.msra.mxu0 %v587
        %1894 = vmatpush.msra.mxu0 %v583
        %1895 = vmatpush.msra.mxu0 %v579
        %1896 = vmatpush.msra.mxu0 %v575
        %1897 = vmatpush.msra.mxu0 %v571
        %1898 = vmatpush.msra.mxu0 %v567
        %1899 = vmatpush.msra.mxu0 %v563
        %1900 = vmatmul.f32.gmra.mxu0 %v1883
        %v1901 = vpop.f32.mrf.mxu0
        %v1902 = vadd.f32 0.0, %v1901
        %1903 = vdwg.mxu0
        %1904 = vmatpush.msra.mxu0 %v624
        %1905 = vmatpush.msra.mxu0 %v620
        %1906 = vmatpush.msra.mxu0 %v616
        %1907 = vmatpush.msra.mxu0 %v612
        %1908 = vmatpush.msra.mxu0 %v608
        %1909 = vmatpush.msra.mxu0 %v604
        %1910 = vmatpush.msra.mxu0 %v600
        %1911 = vmatpush.msra.mxu0 %v596
        %1912 = vmatpush.msra.mxu0 %v592
        %1913 = vmatpush.msra.mxu0 %v588
        %1914 = vmatpush.msra.mxu0 %v584
        %1915 = vmatpush.msra.mxu0 %v580
        %1916 = vmatpush.msra.mxu0 %v576
        %1917 = vmatpush.msra.mxu0 %v572
        %1918 = vmatpush.msra.mxu0 %v568
        %1919 = vmatpush.msra.mxu0 %v564
        %1920 = vmatmul.f32.gmra.mxu0 %v1883
        %v1921 = vpop.f32.mrf.mxu0
        %v1922 = vadd.f32 0.0, %v1921
        %1923 = vdwg.mxu0
        %1924 = vmatpush.msra.mxu0 %v625
        %1925 = vmatpush.msra.mxu0 %v621
        %1926 = vmatpush.msra.mxu0 %v617
        %1927 = vmatpush.msra.mxu0 %v613
        %1928 = vmatpush.msra.mxu0 %v609
        %1929 = vmatpush.msra.mxu0 %v605
        %1930 = vmatpush.msra.mxu0 %v601
        %1931 = vmatpush.msra.mxu0 %v597
        %1932 = vmatpush.msra.mxu0 %v593
        %1933 = vmatpush.msra.mxu0 %v589
        %1934 = vmatpush.msra.mxu0 %v585
        %1935 = vmatpush.msra.mxu0 %v581
        %1936 = vmatpush.msra.mxu0 %v577
        %1937 = vmatpush.msra.mxu0 %v573
        %1938 = vmatpush.msra.mxu0 %v569
        %1939 = vmatpush.msra.mxu0 %v565
        %1940 = vmatmul.f32.gmra.mxu0 %v1883
        %v1941 = vpop.f32.mrf.mxu0
        %v1942 = vadd.f32 0.0, %v1941
        %1943 = vdwg.mxu0
        %1944 = vmatpush.msra.mxu0 %v626
        %1945 = vmatpush.msra.mxu0 %v622
        %1946 = vmatpush.msra.mxu0 %v618
        %1947 = vmatpush.msra.mxu0 %v614
        %1948 = vmatpush.msra.mxu0 %v610
        %1949 = vmatpush.msra.mxu0 %v606
        %1950 = vmatpush.msra.mxu0 %v602
        %1951 = vmatpush.msra.mxu0 %v598
        %1952 = vmatpush.msra.mxu0 %v594
        %1953 = vmatpush.msra.mxu0 %v590
        %1954 = vmatpush.msra.mxu0 %v586
        %1955 = vmatpush.msra.mxu0 %v582
        %1956 = vmatpush.msra.mxu0 %v578
        %1957 = vmatpush.msra.mxu0 %v574
        %1958 = vmatpush.msra.mxu0 %v570
        %1959 = vmatpush.msra.mxu0 %v566
        %1960 = vmatmul.f32.gmra.mxu0 %v1883
        %v1961 = vpop.f32.mrf.mxu0
        %v1962 = vadd.f32 0.0, %v1961
        %1963 = vdwg.mxu0
        %v1968 = vrot.slane %v1922, 4
        %v1969 = vrot.slane %v1962, 4
        %v1970 = vsel %vm505, %v1902, %v1968
        %v1971 = vsel %vm505, %v1942, %v1969
        %v1972 = vsel %vm505, %v1968, %v1902
        %v1973 = vrot.slane %v1972, 4
        %v1974 = vsel %vm505, %v1969, %v1942
        %v1975 = vrot.slane %v1974, 4
        %v1976 = vrot.slane %v1970, 6
        %v1977 = vrot.slane %v1971, 6
        %v1978 = vrot.slane %v1970, 7
        %v1979 = vrot.slane %v1971, 7
        %v1980 = vrot.slane %v1970, 1
        %v1981 = vrot.slane %v1971, 1
        %v1982 = vrot.slane %v1973, 6
        %v1983 = vrot.slane %v1975, 6
        %v1984 = vrot.slane %v1973, 7
        %v1985 = vrot.slane %v1975, 7
        %v1986 = vrot.slane %v1973, 1
        %v1987 = vrot.slane %v1975, 1
        %v2004 = vadd.f32 %v506, %v1976
        %v2005 = vadd.f32 %v507, %v1977
        %v2006 = vadd.f32 %v509, %v1978
        %v2007 = vadd.f32 %v511, %v1979
        %v2008 = vadd.f32 %v512, %v1970
        %v2009 = vadd.f32 %v513, %v1971
        %v2010 = vadd.f32 %v515, %v1980
        %v2011 = vadd.f32 %v517, %v1981
        %v2012 = vadd.f32 %v518, %v1982
        %v2013 = vadd.f32 %v519, %v1983
        %v2014 = vadd.f32 %v521, %v1984
        %v2015 = vadd.f32 %v523, %v1985
        %v2016 = vadd.f32 %v524, %v1973
        %v2017 = vadd.f32 %v525, %v1975
        %v2018 = vadd.f32 %v527, %v1986
        %v2019 = vadd.f32 %v529, %v1987
        %v2020 = vtanh.pop %v2004
        %v2021 = vtanh.pop %v2005
        %v2022 = vtanh.pop %v2006
        %v2023 = vtanh.pop %v2007
        %v2024 = vtanh.pop %v2008
        %v2025 = vtanh.pop %v2009
        %v2026 = vtanh.pop %v2010
        %v2027 = vtanh.pop %v2011
        %v2028 = vtanh.pop %v2012
        %v2029 = vtanh.pop %v2013
        %v2030 = vtanh.pop %v2014
        %v2031 = vtanh.pop %v2015
        %v2032 = vtanh.pop %v2016
        %v2033 = vtanh.pop %v2017
        %v2034 = vtanh.pop %v2018
        %v2035 = vtanh.pop %v2019
        %v2036 = vxor.u32 %v2004, 2147483648
        %v2037 = vxor.u32 %v2005, 2147483648
        %v2038 = vxor.u32 %v2006, 2147483648
        %v2039 = vxor.u32 %v2007, 2147483648
        %v2040 = vxor.u32 %v2008, 2147483648
        %v2041 = vxor.u32 %v2009, 2147483648
        %v2042 = vxor.u32 %v2010, 2147483648
        %v2043 = vxor.u32 %v2011, 2147483648
        %v2044 = vxor.u32 %v2012, 2147483648
        %v2045 = vxor.u32 %v2013, 2147483648
        %v2046 = vxor.u32 %v2014, 2147483648
        %v2047 = vxor.u32 %v2015, 2147483648
        %v2048 = vxor.u32 %v2016, 2147483648
        %v2049 = vxor.u32 %v2017, 2147483648
        %v2050 = vxor.u32 %v2018, 2147483648
        %v2051 = vxor.u32 %v2019, 2147483648
        %v2052 = vmul.f32 %v2036, 1.442695
        %v2053 = vpow.pop %v2052
        %v2054 = vmul.f32 %v2037, 1.442695
        %v2055 = vpow.pop %v2054
        %v2056 = vmul.f32 %v2038, 1.442695
        %v2057 = vpow.pop %v2056
        %v2058 = vmul.f32 %v2039, 1.442695
        %v2059 = vpow.pop %v2058
        %v2060 = vmul.f32 %v2040, 1.442695
        %v2061 = vpow.pop %v2060
        %v2062 = vmul.f32 %v2041, 1.442695
        %v2063 = vpow.pop %v2062
        %v2064 = vmul.f32 %v2042, 1.442695
        %v2065 = vpow.pop %v2064
        %v2066 = vmul.f32 %v2043, 1.442695
        %v2067 = vpow.pop %v2066
        %v2068 = vmul.f32 %v2044, 1.442695
        %v2069 = vpow.pop %v2068
        %v2070 = vmul.f32 %v2045, 1.442695
        %v2071 = vpow.pop %v2070
        %v2072 = vmul.f32 %v2046, 1.442695
        %v2073 = vpow.pop %v2072
        %v2074 = vmul.f32 %v2047, 1.442695
        %v2075 = vpow.pop %v2074
        %v2076 = vmul.f32 %v2048, 1.442695
        %v2077 = vpow.pop %v2076
        %v2078 = vmul.f32 %v2049, 1.442695
        %v2079 = vpow.pop %v2078
        %v2080 = vmul.f32 %v2050, 1.442695
        %v2081 = vpow.pop %v2080
        %v2082 = vmul.f32 %v2051, 1.442695
        %v2083 = vpow.pop %v2082
        %v2084 = vadd.f32 %v2053, 1.0
        %v2085 = vadd.f32 %v2055, 1.0
        %v2086 = vadd.f32 %v2057, 1.0
        %v2087 = vadd.f32 %v2059, 1.0
        %v2088 = vadd.f32 %v2061, 1.0
        %v2089 = vadd.f32 %v2063, 1.0
        %v2090 = vadd.f32 %v2065, 1.0
        %v2091 = vadd.f32 %v2067, 1.0
        %v2092 = vadd.f32 %v2069, 1.0
        %v2093 = vadd.f32 %v2071, 1.0
        %v2094 = vadd.f32 %v2073, 1.0
        %v2095 = vadd.f32 %v2075, 1.0
        %v2096 = vadd.f32 %v2077, 1.0
        %v2097 = vadd.f32 %v2079, 1.0
        %v2098 = vadd.f32 %v2081, 1.0
        %v2099 = vadd.f32 %v2083, 1.0
        %v2100 = vrcp.pop %v2084
        %v2101 = vmul.f32 %v2084, %v2100
        %v2102 = vsub.f32 1.0, %v2101
        %v2103 = vmul.f32 %v2100, %v2102
        %v2104 = vadd.f32 %v2100, %v2103
        %vm2105 = vweird.f32 %v2084
        %vm2106 = vweird.f32 %v2100
        %vm2107 = vmor %vm2105, %vm2106
        %v2108 = vsel %vm2107, %v2100, %v2104
        %v2109 = vand.u32 2147483647, %v2084
        %vm2110 = vcmp.eq.f32.partialorder %v2109, 8.507059e+37
        %v2111 = vand.u32 %v2084, 2147483648
        %v2112 = vor.u32 1.1754944e-38, %v2111
        %v2113 = vsel %vm2110, %v2112, %v2108
        %v2114 = vmul.f32 1.0, %v2113
        %v2115 = vrcp.pop %v2085
        %v2116 = vmul.f32 %v2085, %v2115
        %v2117 = vsub.f32 1.0, %v2116
        %v2118 = vmul.f32 %v2115, %v2117
        %v2119 = vadd.f32 %v2115, %v2118
        %vm2120 = vweird.f32 %v2085
        %vm2121 = vweird.f32 %v2115
        %vm2122 = vmor %vm2120, %vm2121
        %v2123 = vsel %vm2122, %v2115, %v2119
        %v2124 = vand.u32 2147483647, %v2085
        %vm2125 = vcmp.eq.f32.partialorder %v2124, 8.507059e+37
        %v2126 = vand.u32 %v2085, 2147483648
        %v2127 = vor.u32 1.1754944e-38, %v2126
        %v2128 = vsel %vm2125, %v2127, %v2123
        %v2129 = vmul.f32 1.0, %v2128
        %v2130 = vrcp.pop %v2086
        %v2131 = vmul.f32 %v2086, %v2130
        %v2132 = vsub.f32 1.0, %v2131
        %v2133 = vmul.f32 %v2130, %v2132
        %v2134 = vadd.f32 %v2130, %v2133
        %vm2135 = vweird.f32 %v2086
        %vm2136 = vweird.f32 %v2130
        %vm2137 = vmor %vm2135, %vm2136
        %v2138 = vsel %vm2137, %v2130, %v2134
        %v2139 = vand.u32 2147483647, %v2086
        %vm2140 = vcmp.eq.f32.partialorder %v2139, 8.507059e+37
        %v2141 = vand.u32 %v2086, 2147483648
        %v2142 = vor.u32 1.1754944e-38, %v2141
        %v2143 = vsel %vm2140, %v2142, %v2138
        %v2144 = vmul.f32 1.0, %v2143
        %v2145 = vrcp.pop %v2087
        %v2146 = vmul.f32 %v2087, %v2145
        %v2147 = vsub.f32 1.0, %v2146
        %v2148 = vmul.f32 %v2145, %v2147
        %v2149 = vadd.f32 %v2145, %v2148
        %vm2150 = vweird.f32 %v2087
        %vm2151 = vweird.f32 %v2145
        %vm2152 = vmor %vm2150, %vm2151
        %v2153 = vsel %vm2152, %v2145, %v2149
        %v2154 = vand.u32 2147483647, %v2087
        %vm2155 = vcmp.eq.f32.partialorder %v2154, 8.507059e+37
        %v2156 = vand.u32 %v2087, 2147483648
        %v2157 = vor.u32 1.1754944e-38, %v2156
        %v2158 = vsel %vm2155, %v2157, %v2153
        %v2159 = vmul.f32 1.0, %v2158
        %v2160 = vrcp.pop %v2088
        %v2161 = vmul.f32 %v2088, %v2160
        %v2162 = vsub.f32 1.0, %v2161
        %v2163 = vmul.f32 %v2160, %v2162
        %v2164 = vadd.f32 %v2160, %v2163
        %vm2165 = vweird.f32 %v2088
        %vm2166 = vweird.f32 %v2160
        %vm2167 = vmor %vm2165, %vm2166
        %v2168 = vsel %vm2167, %v2160, %v2164
        %v2169 = vand.u32 2147483647, %v2088
        %vm2170 = vcmp.eq.f32.partialorder %v2169, 8.507059e+37
        %v2171 = vand.u32 %v2088, 2147483648
        %v2172 = vor.u32 1.1754944e-38, %v2171
        %v2173 = vsel %vm2170, %v2172, %v2168
        %v2174 = vmul.f32 1.0, %v2173
        %v2175 = vrcp.pop %v2089
        %v2176 = vmul.f32 %v2089, %v2175
        %v2177 = vsub.f32 1.0, %v2176
        %v2178 = vmul.f32 %v2175, %v2177
        %v2179 = vadd.f32 %v2175, %v2178
        %vm2180 = vweird.f32 %v2089
        %vm2181 = vweird.f32 %v2175
        %vm2182 = vmor %vm2180, %vm2181
        %v2183 = vsel %vm2182, %v2175, %v2179
        %v2184 = vand.u32 2147483647, %v2089
        %vm2185 = vcmp.eq.f32.partialorder %v2184, 8.507059e+37
        %v2186 = vand.u32 %v2089, 2147483648
        %v2187 = vor.u32 1.1754944e-38, %v2186
        %v2188 = vsel %vm2185, %v2187, %v2183
        %v2189 = vmul.f32 1.0, %v2188
        %v2190 = vrcp.pop %v2090
        %v2191 = vmul.f32 %v2090, %v2190
        %v2192 = vsub.f32 1.0, %v2191
        %v2193 = vmul.f32 %v2190, %v2192
        %v2194 = vadd.f32 %v2190, %v2193
        %vm2195 = vweird.f32 %v2090
        %vm2196 = vweird.f32 %v2190
        %vm2197 = vmor %vm2195, %vm2196
        %v2198 = vsel %vm2197, %v2190, %v2194
        %v2199 = vand.u32 2147483647, %v2090
        %vm2200 = vcmp.eq.f32.partialorder %v2199, 8.507059e+37
        %v2201 = vand.u32 %v2090, 2147483648
        %v2202 = vor.u32 1.1754944e-38, %v2201
        %v2203 = vsel %vm2200, %v2202, %v2198
        %v2204 = vmul.f32 1.0, %v2203
        %v2205 = vrcp.pop %v2091
        %v2206 = vmul.f32 %v2091, %v2205
        %v2207 = vsub.f32 1.0, %v2206
        %v2208 = vmul.f32 %v2205, %v2207
        %v2209 = vadd.f32 %v2205, %v2208
        %vm2210 = vweird.f32 %v2091
        %vm2211 = vweird.f32 %v2205
        %vm2212 = vmor %vm2210, %vm2211
        %v2213 = vsel %vm2212, %v2205, %v2209
        %v2214 = vand.u32 2147483647, %v2091
        %vm2215 = vcmp.eq.f32.partialorder %v2214, 8.507059e+37
        %v2216 = vand.u32 %v2091, 2147483648
        %v2217 = vor.u32 1.1754944e-38, %v2216
        %v2218 = vsel %vm2215, %v2217, %v2213
        %v2219 = vmul.f32 1.0, %v2218
        %v2220 = vrcp.pop %v2092
        %v2221 = vmul.f32 %v2092, %v2220
        %v2222 = vsub.f32 1.0, %v2221
        %v2223 = vmul.f32 %v2220, %v2222
        %v2224 = vadd.f32 %v2220, %v2223
        %vm2225 = vweird.f32 %v2092
        %vm2226 = vweird.f32 %v2220
        %vm2227 = vmor %vm2225, %vm2226
        %v2228 = vsel %vm2227, %v2220, %v2224
        %v2229 = vand.u32 2147483647, %v2092
        %vm2230 = vcmp.eq.f32.partialorder %v2229, 8.507059e+37
        %v2231 = vand.u32 %v2092, 2147483648
        %v2232 = vor.u32 1.1754944e-38, %v2231
        %v2233 = vsel %vm2230, %v2232, %v2228
        %v2234 = vmul.f32 1.0, %v2233
        %v2235 = vrcp.pop %v2093
        %v2236 = vmul.f32 %v2093, %v2235
        %v2237 = vsub.f32 1.0, %v2236
        %v2238 = vmul.f32 %v2235, %v2237
        %v2239 = vadd.f32 %v2235, %v2238
        %vm2240 = vweird.f32 %v2093
        %vm2241 = vweird.f32 %v2235
        %vm2242 = vmor %vm2240, %vm2241
        %v2243 = vsel %vm2242, %v2235, %v2239
        %v2244 = vand.u32 2147483647, %v2093
        %vm2245 = vcmp.eq.f32.partialorder %v2244, 8.507059e+37
        %v2246 = vand.u32 %v2093, 2147483648
        %v2247 = vor.u32 1.1754944e-38, %v2246
        %v2248 = vsel %vm2245, %v2247, %v2243
        %v2249 = vmul.f32 1.0, %v2248
        %v2250 = vrcp.pop %v2094
        %v2251 = vmul.f32 %v2094, %v2250
        %v2252 = vsub.f32 1.0, %v2251
        %v2253 = vmul.f32 %v2250, %v2252
        %v2254 = vadd.f32 %v2250, %v2253
        %vm2255 = vweird.f32 %v2094
        %vm2256 = vweird.f32 %v2250
        %vm2257 = vmor %vm2255, %vm2256
        %v2258 = vsel %vm2257, %v2250, %v2254
        %v2259 = vand.u32 2147483647, %v2094
        %vm2260 = vcmp.eq.f32.partialorder %v2259, 8.507059e+37
        %v2261 = vand.u32 %v2094, 2147483648
        %v2262 = vor.u32 1.1754944e-38, %v2261
        %v2263 = vsel %vm2260, %v2262, %v2258
        %v2264 = vmul.f32 1.0, %v2263
        %v2265 = vrcp.pop %v2095
        %v2266 = vmul.f32 %v2095, %v2265
        %v2267 = vsub.f32 1.0, %v2266
        %v2268 = vmul.f32 %v2265, %v2267
        %v2269 = vadd.f32 %v2265, %v2268
        %vm2270 = vweird.f32 %v2095
        %vm2271 = vweird.f32 %v2265
        %vm2272 = vmor %vm2270, %vm2271
        %v2273 = vsel %vm2272, %v2265, %v2269
        %v2274 = vand.u32 2147483647, %v2095
        %vm2275 = vcmp.eq.f32.partialorder %v2274, 8.507059e+37
        %v2276 = vand.u32 %v2095, 2147483648
        %v2277 = vor.u32 1.1754944e-38, %v2276
        %v2278 = vsel %vm2275, %v2277, %v2273
        %v2279 = vmul.f32 1.0, %v2278
        %v2280 = vrcp.pop %v2096
        %v2281 = vmul.f32 %v2096, %v2280
        %v2282 = vsub.f32 1.0, %v2281
        %v2283 = vmul.f32 %v2280, %v2282
        %v2284 = vadd.f32 %v2280, %v2283
        %vm2285 = vweird.f32 %v2096
        %vm2286 = vweird.f32 %v2280
        %vm2287 = vmor %vm2285, %vm2286
        %v2288 = vsel %vm2287, %v2280, %v2284
        %v2289 = vand.u32 2147483647, %v2096
        %vm2290 = vcmp.eq.f32.partialorder %v2289, 8.507059e+37
        %v2291 = vand.u32 %v2096, 2147483648
        %v2292 = vor.u32 1.1754944e-38, %v2291
        %v2293 = vsel %vm2290, %v2292, %v2288
        %v2294 = vmul.f32 1.0, %v2293
        %v2295 = vrcp.pop %v2097
        %v2296 = vmul.f32 %v2097, %v2295
        %v2297 = vsub.f32 1.0, %v2296
        %v2298 = vmul.f32 %v2295, %v2297
        %v2299 = vadd.f32 %v2295, %v2298
        %vm2300 = vweird.f32 %v2097
        %vm2301 = vweird.f32 %v2295
        %vm2302 = vmor %vm2300, %vm2301
        %v2303 = vsel %vm2302, %v2295, %v2299
        %v2304 = vand.u32 2147483647, %v2097
        %vm2305 = vcmp.eq.f32.partialorder %v2304, 8.507059e+37
        %v2306 = vand.u32 %v2097, 2147483648
        %v2307 = vor.u32 1.1754944e-38, %v2306
        %v2308 = vsel %vm2305, %v2307, %v2303
        %v2309 = vmul.f32 1.0, %v2308
        %v2310 = vrcp.pop %v2098
        %v2311 = vmul.f32 %v2098, %v2310
        %v2312 = vsub.f32 1.0, %v2311
        %v2313 = vmul.f32 %v2310, %v2312
        %v2314 = vadd.f32 %v2310, %v2313
        %vm2315 = vweird.f32 %v2098
        %vm2316 = vweird.f32 %v2310
        %vm2317 = vmor %vm2315, %vm2316
        %v2318 = vsel %vm2317, %v2310, %v2314
        %v2319 = vand.u32 2147483647, %v2098
        %vm2320 = vcmp.eq.f32.partialorder %v2319, 8.507059e+37
        %v2321 = vand.u32 %v2098, 2147483648
        %v2322 = vor.u32 1.1754944e-38, %v2321
        %v2323 = vsel %vm2320, %v2322, %v2318
        %v2324 = vmul.f32 1.0, %v2323
        %v2325 = vrcp.pop %v2099
        %v2326 = vmul.f32 %v2099, %v2325
        %v2327 = vsub.f32 1.0, %v2326
        %v2328 = vmul.f32 %v2325, %v2327
        %v2329 = vadd.f32 %v2325, %v2328
        %vm2330 = vweird.f32 %v2099
        %vm2331 = vweird.f32 %v2325
        %vm2332 = vmor %vm2330, %vm2331
        %v2333 = vsel %vm2332, %v2325, %v2329
        %v2334 = vand.u32 2147483647, %v2099
        %vm2335 = vcmp.eq.f32.partialorder %v2334, 8.507059e+37
        %v2336 = vand.u32 %v2099, 2147483648
        %v2337 = vor.u32 1.1754944e-38, %v2336
        %v2338 = vsel %vm2335, %v2337, %v2333
        %v2339 = vmul.f32 1.0, %v2338
        %v2356 = vperm.slane %v2020, 2
        %v2357 = vperm.slane %v2020, 6
        %v2358 = vperm.slane %v2021, 2
        %v2359 = vperm.slane %v2021, 6
        %v2360 = vperm.slane %v2022, 2
        %v2361 = vperm.slane %v2022, 6
        %v2362 = vperm.slane %v2023, 2
        %v2363 = vperm.slane %v2023, 6
        %v2364 = vperm.slane %v2024, 2
        %v2365 = vperm.slane %v2024, 6
        %v2366 = vperm.slane %v2025, 2
        %v2367 = vperm.slane %v2025, 6
        %v2368 = vperm.slane %v2026, 2
        %v2369 = vperm.slane %v2026, 6
        %v2370 = vperm.slane %v2027, 2
        %v2371 = vperm.slane %v2027, 6
        %v2372 = vperm.slane %v2028, 2
        %v2373 = vperm.slane %v2028, 6
        %v2374 = vperm.slane %v2029, 2
        %v2375 = vperm.slane %v2029, 6
        %v2376 = vperm.slane %v2030, 2
        %v2377 = vperm.slane %v2030, 6
        %v2378 = vperm.slane %v2031, 2
        %v2379 = vperm.slane %v2031, 6
        %v2380 = vperm.slane %v2032, 2
        %v2381 = vperm.slane %v2032, 6
        %v2382 = vperm.slane %v2033, 2
        %v2383 = vperm.slane %v2033, 6
        %v2384 = vperm.slane %v2034, 2
        %v2385 = vperm.slane %v2034, 6
        %v2386 = vperm.slane %v2035, 2
        %v2387 = vperm.slane %v2035, 6
        %v2388 = vsel %vm1131, %v2360, %v2356
        %v2389 = vsel %vm1133, %v2364, %v2388
        %v2390 = vsel %vm1135, %v2368, %v2389
        %v2391 = vsel %vm1137, %v2372, %v2390
        %v2392 = vsel %vm1139, %v2376, %v2391
        %v2393 = vsel %vm1141, %v2380, %v2392
        %v2394 = vsel %vm1143, %v2384, %v2393
        %v2395 = vsel %vm1131, %v2361, %v2357
        %v2396 = vsel %vm1133, %v2365, %v2395
        %v2397 = vsel %vm1135, %v2369, %v2396
        %v2398 = vsel %vm1137, %v2373, %v2397
        %v2399 = vsel %vm1139, %v2377, %v2398
        %v2400 = vsel %vm1141, %v2381, %v2399
        %v2401 = vsel %vm1143, %v2385, %v2400
        %v2402 = vsel %vm1131, %v2362, %v2358
        %v2403 = vsel %vm1133, %v2366, %v2402
        %v2404 = vsel %vm1135, %v2370, %v2403
        %v2405 = vsel %vm1137, %v2374, %v2404
        %v2406 = vsel %vm1139, %v2378, %v2405
        %v2407 = vsel %vm1141, %v2382, %v2406
        %v2408 = vsel %vm1143, %v2386, %v2407
        %v2409 = vsel %vm1131, %v2363, %v2359
        %v2410 = vsel %vm1133, %v2367, %v2409
        %v2411 = vsel %vm1135, %v2371, %v2410
        %v2412 = vsel %vm1137, %v2375, %v2411
        %v2413 = vsel %vm1139, %v2379, %v2412
        %v2414 = vsel %vm1141, %v2383, %v2413
        %v2415 = vsel %vm1143, %v2387, %v2414
        %v2436 = vperm.slane %v2114, 2
        %v2437 = vperm.slane %v2114, 6
        %v2438 = vperm.slane %v2129, 2
        %v2439 = vperm.slane %v2129, 6
        %v2440 = vperm.slane %v2144, 2
        %v2441 = vperm.slane %v2144, 6
        %v2442 = vperm.slane %v2159, 2
        %v2443 = vperm.slane %v2159, 6
        %v2444 = vperm.slane %v2174, 2
        %v2445 = vperm.slane %v2174, 6
        %v2446 = vperm.slane %v2189, 2
        %v2447 = vperm.slane %v2189, 6
        %v2448 = vperm.slane %v2204, 2
        %v2449 = vperm.slane %v2204, 6
        %v2450 = vperm.slane %v2219, 2
        %v2451 = vperm.slane %v2219, 6
        %v2452 = vperm.slane %v2234, 2
        %v2453 = vperm.slane %v2234, 6
        %v2454 = vperm.slane %v2249, 2
        %v2455 = vperm.slane %v2249, 6
        %v2456 = vperm.slane %v2264, 2
        %v2457 = vperm.slane %v2264, 6
        %v2458 = vperm.slane %v2279, 2
        %v2459 = vperm.slane %v2279, 6
        %v2460 = vperm.slane %v2294, 2
        %v2461 = vperm.slane %v2294, 6
        %v2462 = vperm.slane %v2309, 2
        %v2463 = vperm.slane %v2309, 6
        %v2464 = vperm.slane %v2324, 2
        %v2465 = vperm.slane %v2324, 6
        %v2466 = vperm.slane %v2339, 2
        %v2467 = vperm.slane %v2339, 6
        %v2468 = vsel %vm1131, %v2440, %v2436
        %v2469 = vsel %vm1133, %v2444, %v2468
        %v2470 = vsel %vm1135, %v2448, %v2469
        %v2471 = vsel %vm1137, %v2452, %v2470
        %v2472 = vsel %vm1139, %v2456, %v2471
        %v2473 = vsel %vm1141, %v2460, %v2472
        %v2474 = vsel %vm1143, %v2464, %v2473
        %v2475 = vsel %vm1131, %v2441, %v2437
        %v2476 = vsel %vm1133, %v2445, %v2475
        %v2477 = vsel %vm1135, %v2449, %v2476
        %v2478 = vsel %vm1137, %v2453, %v2477
        %v2479 = vsel %vm1139, %v2457, %v2478
        %v2480 = vsel %vm1141, %v2461, %v2479
        %v2481 = vsel %vm1143, %v2465, %v2480
        %v2482 = vsel %vm1131, %v2442, %v2438
        %v2483 = vsel %vm1133, %v2446, %v2482
        %v2484 = vsel %vm1135, %v2450, %v2483
        %v2485 = vsel %vm1137, %v2454, %v2484
        %v2486 = vsel %vm1139, %v2458, %v2485
        %v2487 = vsel %vm1141, %v2462, %v2486
        %v2488 = vsel %vm1143, %v2466, %v2487
        %v2489 = vsel %vm1131, %v2443, %v2439
        %v2490 = vsel %vm1133, %v2447, %v2489
        %v2491 = vsel %vm1135, %v2451, %v2490
        %v2492 = vsel %vm1137, %v2455, %v2491
        %v2493 = vsel %vm1139, %v2459, %v2492
        %v2494 = vsel %vm1141, %v2463, %v2493
        %v2495 = vsel %vm1143, %v2467, %v2494
        %v2500 = vsel %vm559, %v2394, %v2474
        %v2501 = vsel %vm560, %v2401, %v2481
        %v2502 = vsel %vm561, %v2408, %v2488
        %v2503 = vsel %vm562, %v2415, %v2495
        %v2504 = vmul.f32 %v2501, %v1881
        %v2505 = vmul.f32 %v2500, %v2502
        %v2506 = vadd.f32 %v2504, %v2505
        %v2507 = vtanh.pop %v2506
        %v2508 = vmul.f32 %v2503, %v2507
        %2509 = vmatpush.msra.mxu0 %v623
        %2510 = vmatpush.msra.mxu0 %v619
        %2511 = vmatpush.msra.mxu0 %v615
        %2512 = vmatpush.msra.mxu0 %v611
        %2513 = vmatpush.msra.mxu0 %v607
        %2514 = vmatpush.msra.mxu0 %v603
        %2515 = vmatpush.msra.mxu0 %v599
        %2516 = vmatpush.msra.mxu0 %v595
        %2517 = vmatpush.msra.mxu0 %v591
        %2518 = vmatpush.msra.mxu0 %v587
        %2519 = vmatpush.msra.mxu0 %v583
        %2520 = vmatpush.msra.mxu0 %v579
        %2521 = vmatpush.msra.mxu0 %v575
        %2522 = vmatpush.msra.mxu0 %v571
        %2523 = vmatpush.msra.mxu0 %v567
        %2524 = vmatpush.msra.mxu0 %v563
        %2525 = vmatmul.f32.gmra.mxu0 %v2508
        %v2526 = vpop.f32.mrf.mxu0
        %v2527 = vadd.f32 0.0, %v2526
        %2528 = vdwg.mxu0
        %2529 = vmatpush.msra.mxu0 %v624
        %2530 = vmatpush.msra.mxu0 %v620
        %2531 = vmatpush.msra.mxu0 %v616
        %2532 = vmatpush.msra.mxu0 %v612
        %2533 = vmatpush.msra.mxu0 %v608
        %2534 = vmatpush.msra.mxu0 %v604
        %2535 = vmatpush.msra.mxu0 %v600
        %2536 = vmatpush.msra.mxu0 %v596
        %2537 = vmatpush.msra.mxu0 %v592
        %2538 = vmatpush.msra.mxu0 %v588
        %2539 = vmatpush.msra.mxu0 %v584
        %2540 = vmatpush.msra.mxu0 %v580
        %2541 = vmatpush.msra.mxu0 %v576
        %2542 = vmatpush.msra.mxu0 %v572
        %2543 = vmatpush.msra.mxu0 %v568
        %2544 = vmatpush.msra.mxu0 %v564
        %2545 = vmatmul.f32.gmra.mxu0 %v2508
        %v2546 = vpop.f32.mrf.mxu0
        %v2547 = vadd.f32 0.0, %v2546
        %2548 = vdwg.mxu0
        %2549 = vmatpush.msra.mxu0 %v625
        %2550 = vmatpush.msra.mxu0 %v621
        %2551 = vmatpush.msra.mxu0 %v617
        %2552 = vmatpush.msra.mxu0 %v613
        %2553 = vmatpush.msra.mxu0 %v609
        %2554 = vmatpush.msra.mxu0 %v605
        %2555 = vmatpush.msra.mxu0 %v601
        %2556 = vmatpush.msra.mxu0 %v597
        %2557 = vmatpush.msra.mxu0 %v593
        %2558 = vmatpush.msra.mxu0 %v589
        %2559 = vmatpush.msra.mxu0 %v585
        %2560 = vmatpush.msra.mxu0 %v581
        %2561 = vmatpush.msra.mxu0 %v577
        %2562 = vmatpush.msra.mxu0 %v573
        %2563 = vmatpush.msra.mxu0 %v569
        %2564 = vmatpush.msra.mxu0 %v565
        %2565 = vmatmul.f32.gmra.mxu0 %v2508
        %v2566 = vpop.f32.mrf.mxu0
        %v2567 = vadd.f32 0.0, %v2566
        %2568 = vdwg.mxu0
        %2569 = vmatpush.msra.mxu0 %v626
        %2570 = vmatpush.msra.mxu0 %v622
        %2571 = vmatpush.msra.mxu0 %v618
        %2572 = vmatpush.msra.mxu0 %v614
        %2573 = vmatpush.msra.mxu0 %v610
        %2574 = vmatpush.msra.mxu0 %v606
        %2575 = vmatpush.msra.mxu0 %v602
        %2576 = vmatpush.msra.mxu0 %v598
        %2577 = vmatpush.msra.mxu0 %v594
        %2578 = vmatpush.msra.mxu0 %v590
        %2579 = vmatpush.msra.mxu0 %v586
        %2580 = vmatpush.msra.mxu0 %v582
        %2581 = vmatpush.msra.mxu0 %v578
        %2582 = vmatpush.msra.mxu0 %v574
        %2583 = vmatpush.msra.mxu0 %v570
        %2584 = vmatpush.msra.mxu0 %v566
        %2585 = vmatmul.f32.gmra.mxu0 %v2508
        %v2586 = vpop.f32.mrf.mxu0
        %v2587 = vadd.f32 0.0, %v2586
        %2588 = vdwg.mxu0
        %v2593 = vrot.slane %v2547, 4
        %v2594 = vrot.slane %v2587, 4
        %v2595 = vsel %vm505, %v2527, %v2593
        %v2596 = vsel %vm505, %v2567, %v2594
        %v2597 = vsel %vm505, %v2593, %v2527
        %v2598 = vrot.slane %v2597, 4
        %v2599 = vsel %vm505, %v2594, %v2567
        %v2600 = vrot.slane %v2599, 4
        %v2601 = vrot.slane %v2595, 5
        %v2602 = vrot.slane %v2596, 5
        %v2603 = vrot.slane %v2595, 6
        %v2604 = vrot.slane %v2596, 6
        %v2605 = vrot.slane %v2595, 7
        %v2606 = vrot.slane %v2596, 7
        %v2607 = vrot.slane %v2598, 5
        %v2608 = vrot.slane %v2600, 5
        %v2609 = vrot.slane %v2598, 6
        %v2610 = vrot.slane %v2600, 6
        %v2611 = vrot.slane %v2598, 7
        %v2612 = vrot.slane %v2600, 7
        %v2629 = vadd.f32 %v506, %v2601
        %v2630 = vadd.f32 %v507, %v2602
        %v2631 = vadd.f32 %v509, %v2603
        %v2632 = vadd.f32 %v511, %v2604
        %v2633 = vadd.f32 %v512, %v2605
        %v2634 = vadd.f32 %v513, %v2606
        %v2635 = vadd.f32 %v515, %v2595
        %v2636 = vadd.f32 %v517, %v2596
        %v2637 = vadd.f32 %v518, %v2607
        %v2638 = vadd.f32 %v519, %v2608
        %v2639 = vadd.f32 %v521, %v2609
        %v2640 = vadd.f32 %v523, %v2610
        %v2641 = vadd.f32 %v524, %v2611
        %v2642 = vadd.f32 %v525, %v2612
        %v2643 = vadd.f32 %v527, %v2598
        %v2644 = vadd.f32 %v529, %v2600
        %v2645 = vtanh.pop %v2629
        %v2646 = vtanh.pop %v2630
        %v2647 = vtanh.pop %v2631
        %v2648 = vtanh.pop %v2632
        %v2649 = vtanh.pop %v2633
        %v2650 = vtanh.pop %v2634
        %v2651 = vtanh.pop %v2635
        %v2652 = vtanh.pop %v2636
        %v2653 = vtanh.pop %v2637
        %v2654 = vtanh.pop %v2638
        %v2655 = vtanh.pop %v2639
        %v2656 = vtanh.pop %v2640
        %v2657 = vtanh.pop %v2641
        %v2658 = vtanh.pop %v2642
        %v2659 = vtanh.pop %v2643
        %v2660 = vtanh.pop %v2644
        %v2661 = vxor.u32 %v2629, 2147483648
        %v2662 = vxor.u32 %v2630, 2147483648
        %v2663 = vxor.u32 %v2631, 2147483648
        %v2664 = vxor.u32 %v2632, 2147483648
        %v2665 = vxor.u32 %v2633, 2147483648
        %v2666 = vxor.u32 %v2634, 2147483648
        %v2667 = vxor.u32 %v2635, 2147483648
        %v2668 = vxor.u32 %v2636, 2147483648
        %v2669 = vxor.u32 %v2637, 2147483648
        %v2670 = vxor.u32 %v2638, 2147483648
        %v2671 = vxor.u32 %v2639, 2147483648
        %v2672 = vxor.u32 %v2640, 2147483648
        %v2673 = vxor.u32 %v2641, 2147483648
        %v2674 = vxor.u32 %v2642, 2147483648
        %v2675 = vxor.u32 %v2643, 2147483648
        %v2676 = vxor.u32 %v2644, 2147483648
        %v2677 = vmul.f32 %v2661, 1.442695
        %v2678 = vpow.pop %v2677
        %v2679 = vmul.f32 %v2662, 1.442695
        %v2680 = vpow.pop %v2679
        %v2681 = vmul.f32 %v2663, 1.442695
        %v2682 = vpow.pop %v2681
        %v2683 = vmul.f32 %v2664, 1.442695
        %v2684 = vpow.pop %v2683
        %v2685 = vmul.f32 %v2665, 1.442695
        %v2686 = vpow.pop %v2685
        %v2687 = vmul.f32 %v2666, 1.442695
        %v2688 = vpow.pop %v2687
        %v2689 = vmul.f32 %v2667, 1.442695
        %v2690 = vpow.pop %v2689
        %v2691 = vmul.f32 %v2668, 1.442695
        %v2692 = vpow.pop %v2691
        %v2693 = vmul.f32 %v2669, 1.442695
        %v2694 = vpow.pop %v2693
        %v2695 = vmul.f32 %v2670, 1.442695
        %v2696 = vpow.pop %v2695
        %v2697 = vmul.f32 %v2671, 1.442695
        %v2698 = vpow.pop %v2697
        %v2699 = vmul.f32 %v2672, 1.442695
        %v2700 = vpow.pop %v2699
        %v2701 = vmul.f32 %v2673, 1.442695
        %v2702 = vpow.pop %v2701
        %v2703 = vmul.f32 %v2674, 1.442695
        %v2704 = vpow.pop %v2703
        %v2705 = vmul.f32 %v2675, 1.442695
        %v2706 = vpow.pop %v2705
        %v2707 = vmul.f32 %v2676, 1.442695
        %v2708 = vpow.pop %v2707
        %v2709 = vadd.f32 %v2678, 1.0
        %v2710 = vadd.f32 %v2680, 1.0
        %v2711 = vadd.f32 %v2682, 1.0
        %v2712 = vadd.f32 %v2684, 1.0
        %v2713 = vadd.f32 %v2686, 1.0
        %v2714 = vadd.f32 %v2688, 1.0
        %v2715 = vadd.f32 %v2690, 1.0
        %v2716 = vadd.f32 %v2692, 1.0
        %v2717 = vadd.f32 %v2694, 1.0
        %v2718 = vadd.f32 %v2696, 1.0
        %v2719 = vadd.f32 %v2698, 1.0
        %v2720 = vadd.f32 %v2700, 1.0
        %v2721 = vadd.f32 %v2702, 1.0
        %v2722 = vadd.f32 %v2704, 1.0
        %v2723 = vadd.f32 %v2706, 1.0
        %v2724 = vadd.f32 %v2708, 1.0
        %v2725 = vrcp.pop %v2709
        %v2726 = vmul.f32 %v2709, %v2725
        %v2727 = vsub.f32 1.0, %v2726
        %v2728 = vmul.f32 %v2725, %v2727
        %v2729 = vadd.f32 %v2725, %v2728
        %vm2730 = vweird.f32 %v2709
        %vm2731 = vweird.f32 %v2725
        %vm2732 = vmor %vm2730, %vm2731
        %v2733 = vsel %vm2732, %v2725, %v2729
        %v2734 = vand.u32 2147483647, %v2709
        %vm2735 = vcmp.eq.f32.partialorder %v2734, 8.507059e+37
        %v2736 = vand.u32 %v2709, 2147483648
        %v2737 = vor.u32 1.1754944e-38, %v2736
        %v2738 = vsel %vm2735, %v2737, %v2733
        %v2739 = vmul.f32 1.0, %v2738
        %v2740 = vrcp.pop %v2710
        %v2741 = vmul.f32 %v2710, %v2740
        %v2742 = vsub.f32 1.0, %v2741
        %v2743 = vmul.f32 %v2740, %v2742
        %v2744 = vadd.f32 %v2740, %v2743
        %vm2745 = vweird.f32 %v2710
        %vm2746 = vweird.f32 %v2740
        %vm2747 = vmor %vm2745, %vm2746
        %v2748 = vsel %vm2747, %v2740, %v2744
        %v2749 = vand.u32 2147483647, %v2710
        %vm2750 = vcmp.eq.f32.partialorder %v2749, 8.507059e+37
        %v2751 = vand.u32 %v2710, 2147483648
        %v2752 = vor.u32 1.1754944e-38, %v2751
        %v2753 = vsel %vm2750, %v2752, %v2748
        %v2754 = vmul.f32 1.0, %v2753
        %v2755 = vrcp.pop %v2711
        %v2756 = vmul.f32 %v2711, %v2755
        %v2757 = vsub.f32 1.0, %v2756
        %v2758 = vmul.f32 %v2755, %v2757
        %v2759 = vadd.f32 %v2755, %v2758
        %vm2760 = vweird.f32 %v2711
        %vm2761 = vweird.f32 %v2755
        %vm2762 = vmor %vm2760, %vm2761
        %v2763 = vsel %vm2762, %v2755, %v2759
        %v2764 = vand.u32 2147483647, %v2711
        %vm2765 = vcmp.eq.f32.partialorder %v2764, 8.507059e+37
        %v2766 = vand.u32 %v2711, 2147483648
        %v2767 = vor.u32 1.1754944e-38, %v2766
        %v2768 = vsel %vm2765, %v2767, %v2763
        %v2769 = vmul.f32 1.0, %v2768
        %v2770 = vrcp.pop %v2712
        %v2771 = vmul.f32 %v2712, %v2770
        %v2772 = vsub.f32 1.0, %v2771
        %v2773 = vmul.f32 %v2770, %v2772
        %v2774 = vadd.f32 %v2770, %v2773
        %vm2775 = vweird.f32 %v2712
        %vm2776 = vweird.f32 %v2770
        %vm2777 = vmor %vm2775, %vm2776
        %v2778 = vsel %vm2777, %v2770, %v2774
        %v2779 = vand.u32 2147483647, %v2712
        %vm2780 = vcmp.eq.f32.partialorder %v2779, 8.507059e+37
        %v2781 = vand.u32 %v2712, 2147483648
        %v2782 = vor.u32 1.1754944e-38, %v2781
        %v2783 = vsel %vm2780, %v2782, %v2778
        %v2784 = vmul.f32 1.0, %v2783
        %v2785 = vrcp.pop %v2713
        %v2786 = vmul.f32 %v2713, %v2785
        %v2787 = vsub.f32 1.0, %v2786
        %v2788 = vmul.f32 %v2785, %v2787
        %v2789 = vadd.f32 %v2785, %v2788
        %vm2790 = vweird.f32 %v2713
        %vm2791 = vweird.f32 %v2785
        %vm2792 = vmor %vm2790, %vm2791
        %v2793 = vsel %vm2792, %v2785, %v2789
        %v2794 = vand.u32 2147483647, %v2713
        %vm2795 = vcmp.eq.f32.partialorder %v2794, 8.507059e+37
        %v2796 = vand.u32 %v2713, 2147483648
        %v2797 = vor.u32 1.1754944e-38, %v2796
        %v2798 = vsel %vm2795, %v2797, %v2793
        %v2799 = vmul.f32 1.0, %v2798
        %v2800 = vrcp.pop %v2714
        %v2801 = vmul.f32 %v2714, %v2800
        %v2802 = vsub.f32 1.0, %v2801
        %v2803 = vmul.f32 %v2800, %v2802
        %v2804 = vadd.f32 %v2800, %v2803
        %vm2805 = vweird.f32 %v2714
        %vm2806 = vweird.f32 %v2800
        %vm2807 = vmor %vm2805, %vm2806
        %v2808 = vsel %vm2807, %v2800, %v2804
        %v2809 = vand.u32 2147483647, %v2714
        %vm2810 = vcmp.eq.f32.partialorder %v2809, 8.507059e+37
        %v2811 = vand.u32 %v2714, 2147483648
        %v2812 = vor.u32 1.1754944e-38, %v2811
        %v2813 = vsel %vm2810, %v2812, %v2808
        %v2814 = vmul.f32 1.0, %v2813
        %v2815 = vrcp.pop %v2715
        %v2816 = vmul.f32 %v2715, %v2815
        %v2817 = vsub.f32 1.0, %v2816
        %v2818 = vmul.f32 %v2815, %v2817
        %v2819 = vadd.f32 %v2815, %v2818
        %vm2820 = vweird.f32 %v2715
        %vm2821 = vweird.f32 %v2815
        %vm2822 = vmor %vm2820, %vm2821
        %v2823 = vsel %vm2822, %v2815, %v2819
        %v2824 = vand.u32 2147483647, %v2715
        %vm2825 = vcmp.eq.f32.partialorder %v2824, 8.507059e+37
        %v2826 = vand.u32 %v2715, 2147483648
        %v2827 = vor.u32 1.1754944e-38, %v2826
        %v2828 = vsel %vm2825, %v2827, %v2823
        %v2829 = vmul.f32 1.0, %v2828
        %v2830 = vrcp.pop %v2716
        %v2831 = vmul.f32 %v2716, %v2830
        %v2832 = vsub.f32 1.0, %v2831
        %v2833 = vmul.f32 %v2830, %v2832
        %v2834 = vadd.f32 %v2830, %v2833
        %vm2835 = vweird.f32 %v2716
        %vm2836 = vweird.f32 %v2830
        %vm2837 = vmor %vm2835, %vm2836
        %v2838 = vsel %vm2837, %v2830, %v2834
        %v2839 = vand.u32 2147483647, %v2716
        %vm2840 = vcmp.eq.f32.partialorder %v2839, 8.507059e+37
        %v2841 = vand.u32 %v2716, 2147483648
        %v2842 = vor.u32 1.1754944e-38, %v2841
        %v2843 = vsel %vm2840, %v2842, %v2838
        %v2844 = vmul.f32 1.0, %v2843
        %v2845 = vrcp.pop %v2717
        %v2846 = vmul.f32 %v2717, %v2845
        %v2847 = vsub.f32 1.0, %v2846
        %v2848 = vmul.f32 %v2845, %v2847
        %v2849 = vadd.f32 %v2845, %v2848
        %vm2850 = vweird.f32 %v2717
        %vm2851 = vweird.f32 %v2845
        %vm2852 = vmor %vm2850, %vm2851
        %v2853 = vsel %vm2852, %v2845, %v2849
        %v2854 = vand.u32 2147483647, %v2717
        %vm2855 = vcmp.eq.f32.partialorder %v2854, 8.507059e+37
        %v2856 = vand.u32 %v2717, 2147483648
        %v2857 = vor.u32 1.1754944e-38, %v2856
        %v2858 = vsel %vm2855, %v2857, %v2853
        %v2859 = vmul.f32 1.0, %v2858
        %v2860 = vrcp.pop %v2718
        %v2861 = vmul.f32 %v2718, %v2860
        %v2862 = vsub.f32 1.0, %v2861
        %v2863 = vmul.f32 %v2860, %v2862
        %v2864 = vadd.f32 %v2860, %v2863
        %vm2865 = vweird.f32 %v2718
        %vm2866 = vweird.f32 %v2860
        %vm2867 = vmor %vm2865, %vm2866
        %v2868 = vsel %vm2867, %v2860, %v2864
        %v2869 = vand.u32 2147483647, %v2718
        %vm2870 = vcmp.eq.f32.partialorder %v2869, 8.507059e+37
        %v2871 = vand.u32 %v2718, 2147483648
        %v2872 = vor.u32 1.1754944e-38, %v2871
        %v2873 = vsel %vm2870, %v2872, %v2868
        %v2874 = vmul.f32 1.0, %v2873
        %v2875 = vrcp.pop %v2719
        %v2876 = vmul.f32 %v2719, %v2875
        %v2877 = vsub.f32 1.0, %v2876
        %v2878 = vmul.f32 %v2875, %v2877
        %v2879 = vadd.f32 %v2875, %v2878
        %vm2880 = vweird.f32 %v2719
        %vm2881 = vweird.f32 %v2875
        %vm2882 = vmor %vm2880, %vm2881
        %v2883 = vsel %vm2882, %v2875, %v2879
        %v2884 = vand.u32 2147483647, %v2719
        %vm2885 = vcmp.eq.f32.partialorder %v2884, 8.507059e+37
        %v2886 = vand.u32 %v2719, 2147483648
        %v2887 = vor.u32 1.1754944e-38, %v2886
        %v2888 = vsel %vm2885, %v2887, %v2883
        %v2889 = vmul.f32 1.0, %v2888
        %v2890 = vrcp.pop %v2720
        %v2891 = vmul.f32 %v2720, %v2890
        %v2892 = vsub.f32 1.0, %v2891
        %v2893 = vmul.f32 %v2890, %v2892
        %v2894 = vadd.f32 %v2890, %v2893
        %vm2895 = vweird.f32 %v2720
        %vm2896 = vweird.f32 %v2890
        %vm2897 = vmor %vm2895, %vm2896
        %v2898 = vsel %vm2897, %v2890, %v2894
        %v2899 = vand.u32 2147483647, %v2720
        %vm2900 = vcmp.eq.f32.partialorder %v2899, 8.507059e+37
        %v2901 = vand.u32 %v2720, 2147483648
        %v2902 = vor.u32 1.1754944e-38, %v2901
        %v2903 = vsel %vm2900, %v2902, %v2898
        %v2904 = vmul.f32 1.0, %v2903
        %v2905 = vrcp.pop %v2721
        %v2906 = vmul.f32 %v2721, %v2905
        %v2907 = vsub.f32 1.0, %v2906
        %v2908 = vmul.f32 %v2905, %v2907
        %v2909 = vadd.f32 %v2905, %v2908
        %vm2910 = vweird.f32 %v2721
        %vm2911 = vweird.f32 %v2905
        %vm2912 = vmor %vm2910, %vm2911
        %v2913 = vsel %vm2912, %v2905, %v2909
        %v2914 = vand.u32 2147483647, %v2721
        %vm2915 = vcmp.eq.f32.partialorder %v2914, 8.507059e+37
        %v2916 = vand.u32 %v2721, 2147483648
        %v2917 = vor.u32 1.1754944e-38, %v2916
        %v2918 = vsel %vm2915, %v2917, %v2913
        %v2919 = vmul.f32 1.0, %v2918
        %v2920 = vrcp.pop %v2722
        %v2921 = vmul.f32 %v2722, %v2920
        %v2922 = vsub.f32 1.0, %v2921
        %v2923 = vmul.f32 %v2920, %v2922
        %v2924 = vadd.f32 %v2920, %v2923
        %vm2925 = vweird.f32 %v2722
        %vm2926 = vweird.f32 %v2920
        %vm2927 = vmor %vm2925, %vm2926
        %v2928 = vsel %vm2927, %v2920, %v2924
        %v2929 = vand.u32 2147483647, %v2722
        %vm2930 = vcmp.eq.f32.partialorder %v2929, 8.507059e+37
        %v2931 = vand.u32 %v2722, 2147483648
        %v2932 = vor.u32 1.1754944e-38, %v2931
        %v2933 = vsel %vm2930, %v2932, %v2928
        %v2934 = vmul.f32 1.0, %v2933
        %v2935 = vrcp.pop %v2723
        %v2936 = vmul.f32 %v2723, %v2935
        %v2937 = vsub.f32 1.0, %v2936
        %v2938 = vmul.f32 %v2935, %v2937
        %v2939 = vadd.f32 %v2935, %v2938
        %vm2940 = vweird.f32 %v2723
        %vm2941 = vweird.f32 %v2935
        %vm2942 = vmor %vm2940, %vm2941
        %v2943 = vsel %vm2942, %v2935, %v2939
        %v2944 = vand.u32 2147483647, %v2723
        %vm2945 = vcmp.eq.f32.partialorder %v2944, 8.507059e+37
        %v2946 = vand.u32 %v2723, 2147483648
        %v2947 = vor.u32 1.1754944e-38, %v2946
        %v2948 = vsel %vm2945, %v2947, %v2943
        %v2949 = vmul.f32 1.0, %v2948
        %v2950 = vrcp.pop %v2724
        %v2951 = vmul.f32 %v2724, %v2950
        %v2952 = vsub.f32 1.0, %v2951
        %v2953 = vmul.f32 %v2950, %v2952
        %v2954 = vadd.f32 %v2950, %v2953
        %vm2955 = vweird.f32 %v2724
        %vm2956 = vweird.f32 %v2950
        %vm2957 = vmor %vm2955, %vm2956
        %v2958 = vsel %vm2957, %v2950, %v2954
        %v2959 = vand.u32 2147483647, %v2724
        %vm2960 = vcmp.eq.f32.partialorder %v2959, 8.507059e+37
        %v2961 = vand.u32 %v2724, 2147483648
        %v2962 = vor.u32 1.1754944e-38, %v2961
        %v2963 = vsel %vm2960, %v2962, %v2958
        %v2964 = vmul.f32 1.0, %v2963
        %v2981 = vperm.slane %v2645, 3
        %v2982 = vperm.slane %v2645, 7
        %v2983 = vperm.slane %v2646, 3
        %v2984 = vperm.slane %v2646, 7
        %v2985 = vperm.slane %v2647, 3
        %v2986 = vperm.slane %v2647, 7
        %v2987 = vperm.slane %v2648, 3
        %v2988 = vperm.slane %v2648, 7
        %v2989 = vperm.slane %v2649, 3
        %v2990 = vperm.slane %v2649, 7
        %v2991 = vperm.slane %v2650, 3
        %v2992 = vperm.slane %v2650, 7
        %v2993 = vperm.slane %v2651, 3
        %v2994 = vperm.slane %v2651, 7
        %v2995 = vperm.slane %v2652, 3
        %v2996 = vperm.slane %v2652, 7
        %v2997 = vperm.slane %v2653, 3
        %v2998 = vperm.slane %v2653, 7
        %v2999 = vperm.slane %v2654, 3
        %v3000 = vperm.slane %v2654, 7
        %v3001 = vperm.slane %v2655, 3
        %v3002 = vperm.slane %v2655, 7
        %v3003 = vperm.slane %v2656, 3
        %v3004 = vperm.slane %v2656, 7
        %v3005 = vperm.slane %v2657, 3
        %v3006 = vperm.slane %v2657, 7
        %v3007 = vperm.slane %v2658, 3
        %v3008 = vperm.slane %v2658, 7
        %v3009 = vperm.slane %v2659, 3
        %v3010 = vperm.slane %v2659, 7
        %v3011 = vperm.slane %v2660, 3
        %v3012 = vperm.slane %v2660, 7
        %v3013 = vsel %vm1131, %v2985, %v2981
        %v3014 = vsel %vm1133, %v2989, %v3013
        %v3015 = vsel %vm1135, %v2993, %v3014
        %v3016 = vsel %vm1137, %v2997, %v3015
        %v3017 = vsel %vm1139, %v3001, %v3016
        %v3018 = vsel %vm1141, %v3005, %v3017
        %v3019 = vsel %vm1143, %v3009, %v3018
        %v3020 = vsel %vm1131, %v2986, %v2982
        %v3021 = vsel %vm1133, %v2990, %v3020
        %v3022 = vsel %vm1135, %v2994, %v3021
        %v3023 = vsel %vm1137, %v2998, %v3022
        %v3024 = vsel %vm1139, %v3002, %v3023
        %v3025 = vsel %vm1141, %v3006, %v3024
        %v3026 = vsel %vm1143, %v3010, %v3025
        %v3027 = vsel %vm1131, %v2987, %v2983
        %v3028 = vsel %vm1133, %v2991, %v3027
        %v3029 = vsel %vm1135, %v2995, %v3028
        %v3030 = vsel %vm1137, %v2999, %v3029
        %v3031 = vsel %vm1139, %v3003, %v3030
        %v3032 = vsel %vm1141, %v3007, %v3031
        %v3033 = vsel %vm1143, %v3011, %v3032
        %v3034 = vsel %vm1131, %v2988, %v2984
        %v3035 = vsel %vm1133, %v2992, %v3034
        %v3036 = vsel %vm1135, %v2996, %v3035
        %v3037 = vsel %vm1137, %v3000, %v3036
        %v3038 = vsel %vm1139, %v3004, %v3037
        %v3039 = vsel %vm1141, %v3008, %v3038
        %v3040 = vsel %vm1143, %v3012, %v3039
        %v3061 = vperm.slane %v2739, 3
        %v3062 = vperm.slane %v2739, 7
        %v3063 = vperm.slane %v2754, 3
        %v3064 = vperm.slane %v2754, 7
        %v3065 = vperm.slane %v2769, 3
        %v3066 = vperm.slane %v2769, 7
        %v3067 = vperm.slane %v2784, 3
        %v3068 = vperm.slane %v2784, 7
        %v3069 = vperm.slane %v2799, 3
        %v3070 = vperm.slane %v2799, 7
        %v3071 = vperm.slane %v2814, 3
        %v3072 = vperm.slane %v2814, 7
        %v3073 = vperm.slane %v2829, 3
        %v3074 = vperm.slane %v2829, 7
        %v3075 = vperm.slane %v2844, 3
        %v3076 = vperm.slane %v2844, 7
        %v3077 = vperm.slane %v2859, 3
        %v3078 = vperm.slane %v2859, 7
        %v3079 = vperm.slane %v2874, 3
        %v3080 = vperm.slane %v2874, 7
        %v3081 = vperm.slane %v2889, 3
        %v3082 = vperm.slane %v2889, 7
        %v3083 = vperm.slane %v2904, 3
        %v3084 = vperm.slane %v2904, 7
        %v3085 = vperm.slane %v2919, 3
        %v3086 = vperm.slane %v2919, 7
        %v3087 = vperm.slane %v2934, 3
        %v3088 = vperm.slane %v2934, 7
        %v3089 = vperm.slane %v2949, 3
        %v3090 = vperm.slane %v2949, 7
        %v3091 = vperm.slane %v2964, 3
        %v3092 = vperm.slane %v2964, 7
        %v3093 = vsel %vm1131, %v3065, %v3061
        %v3094 = vsel %vm1133, %v3069, %v3093
        %v3095 = vsel %vm1135, %v3073, %v3094
        %v3096 = vsel %vm1137, %v3077, %v3095
        %v3097 = vsel %vm1139, %v3081, %v3096
        %v3098 = vsel %vm1141, %v3085, %v3097
        %v3099 = vsel %vm1143, %v3089, %v3098
        %v3100 = vsel %vm1131, %v3066, %v3062
        %v3101 = vsel %vm1133, %v3070, %v3100
        %v3102 = vsel %vm1135, %v3074, %v3101
        %v3103 = vsel %vm1137, %v3078, %v3102
        %v3104 = vsel %vm1139, %v3082, %v3103
        %v3105 = vsel %vm1141, %v3086, %v3104
        %v3106 = vsel %vm1143, %v3090, %v3105
        %v3107 = vsel %vm1131, %v3067, %v3063
        %v3108 = vsel %vm1133, %v3071, %v3107
        %v3109 = vsel %vm1135, %v3075, %v3108
        %v3110 = vsel %vm1137, %v3079, %v3109
        %v3111 = vsel %vm1139, %v3083, %v3110
        %v3112 = vsel %vm1141, %v3087, %v3111
        %v3113 = vsel %vm1143, %v3091, %v3112
        %v3114 = vsel %vm1131, %v3068, %v3064
        %v3115 = vsel %vm1133, %v3072, %v3114
        %v3116 = vsel %vm1135, %v3076, %v3115
        %v3117 = vsel %vm1137, %v3080, %v3116
        %v3118 = vsel %vm1139, %v3084, %v3117
        %v3119 = vsel %vm1141, %v3088, %v3118
        %v3120 = vsel %vm1143, %v3092, %v3119
        %v3125 = vsel %vm559, %v3019, %v3099
        %v3126 = vsel %vm560, %v3026, %v3106
        %v3127 = vsel %vm561, %v3033, %v3113
        %v3128 = vsel %vm562, %v3040, %v3120
        %v3129 = vmul.f32 %v3126, %v2506
        %v3130 = vmul.f32 %v3125, %v3127
        %v3131 = vadd.f32 %v3129, %v3130
        %v3132 = vtanh.pop %v3131
        %v3133 = vmul.f32 %v3128, %v3132
        %v3134 = vld [vmem:[%s4] sm:$0xff]
        %v3135 = vld [vmem:[%s4 + $0x8] sm:$0xff]
        %v3136 = vld [vmem:[%s4 + $0x10] sm:$0xff]
        %v3137 = vld [vmem:[%s4 + $0x18] sm:$0xff]
        %v3138 = vld [vmem:[%s4 + $0x20] sm:$0xff]
        %v3139 = vld [vmem:[%s4 + $0x28] sm:$0xff]
        %v3140 = vld [vmem:[%s4 + $0x30] sm:$0xff]
        %v3141 = vld [vmem:[%s4 + $0x38] sm:$0xff]
        %v3142 = vld [vmem:[%s4 + $0x40] sm:$0xff]
        %v3143 = vld [vmem:[%s4 + $0x48] sm:$0xff]
        %v3144 = vld [vmem:[%s4 + $0x50] sm:$0xff]
        %v3145 = vld [vmem:[%s4 + $0x58] sm:$0xff]
        %v3146 = vld [vmem:[%s4 + $0x60] sm:$0xff]
        %v3147 = vld [vmem:[%s4 + $0x68] sm:$0xff]
        %v3148 = vld [vmem:[%s4 + $0x70] sm:$0xff]
        %v3149 = vld [vmem:[%s4 + $0x78] sm:$0xff]
        %v3150 = vld [vmem:[%s5] sm:$0x1]
        %v3152 = vperm.slane %v3150, 0
        %3154 = vmatpush.msra.mxu0 %v3149
        %3155 = vmatpush.msra.mxu0 %v3148
        %3156 = vmatpush.msra.mxu0 %v3147
        %3157 = vmatpush.msra.mxu0 %v3146
        %3158 = vmatpush.msra.mxu0 %v3145
        %3159 = vmatpush.msra.mxu0 %v3144
        %3160 = vmatpush.msra.mxu0 %v3143
        %3161 = vmatpush.msra.mxu0 %v3142
        %3162 = vmatpush.msra.mxu0 %v3141
        %3163 = vmatpush.msra.mxu0 %v3140
        %3164 = vmatpush.msra.mxu0 %v3139
        %3165 = vmatpush.msra.mxu0 %v3138
        %3166 = vmatpush.msra.mxu0 %v3137
        %3167 = vmatpush.msra.mxu0 %v3136
        %3168 = vmatpush.msra.mxu0 %v3135
        %3169 = vmatpush.msra.mxu0 %v3134
        %3170 = vmatmul.f32.gmra.mxu0 %v3133
        %v3171 = vpop.f32.mrf.mxu0
        %v3172 = vadd.f32 %v3152, %v3171
        %3173 = vdwg.mxu0
        %vm3174 = vcmask 31744
        %v3175 = vsel %vm3174, %v3172, -inf
        %3176 = vmax.xlane.f32.xlu0 %v3175
        %v3177 = vpop.xlane.xlu0 %3176
        %v3178 = vsub.f32 %v3172, %v3177
        %v3179 = vmul.f32 %v3178, 1.442695
        %v3180 = vpow.pop %v3179
        %v3181 = vsel %vm3174, %v3180, 0.0
        %3182 = vadd.xlane.f32.xlu0 %v3181
        %v3183 = vpop.xlane.xlu0 %3182
        %v3184 = vrcp.pop %v3183
        %v3185 = vmul.f32 %v3180, %v3184
        %v3186 = vmul.f32 %v3185, 0.25
        %v3187 = vld [vmem:[%s250] sm:$0x1]
        %v3188 = vld [vmem:[%s250 + $0x4] sm:$0x1]
        %v3189 = vld [vmem:[%s250 + $0x8] sm:$0x1]
        %v3190 = vld [vmem:[%s250 + $0xc] sm:$0x1]
        %v3191 = vld [vmem:[%s250 + $0x10] sm:$0x1]
        %v3192 = vld [vmem:[%s250 + $0x14] sm:$0x1]
        %v3193 = vld [vmem:[%s250 + $0x18] sm:$0x1]
        %v3194 = vld [vmem:[%s250 + $0x1c] sm:$0x1]
        %3196 = vset.pattern.permute.xlu0 0
        %3197 = vperm.xlu0 %3196, %v3186
        %v3198 = vpop.permute.xlu0 %3197
        %v3199 = vrot.slane %v3198, 1
        %v3200 = vrot.slane %v3198, 2
        %v3201 = vrot.slane %v3198, 3
        %v3202 = vrot.slane %v3198, 4
        %v3203 = vrot.slane %v3198, 5
        %v3204 = vrot.slane %v3198, 6
        %v3205 = vrot.slane %v3198, 7
        %v3214 = vmul.f32 %v3187, %v3198
        %v3215 = vmul.f32 %v3188, %v3199
        %v3216 = vmul.f32 %v3189, %v3200
        %v3217 = vmul.f32 %v3190, %v3201
        %v3218 = vmul.f32 %v3191, %v3202
        %v3219 = vmul.f32 %v3192, %v3203
        %v3220 = vmul.f32 %v3193, %v3204
        %v3221 = vmul.f32 %v3194, %v3205
        %v3222 = vadd.f32 %v3214, 0.0
        %v3223 = vadd.f32 %v3215, 0.0
        %v3224 = vadd.f32 %v3216, 0.0
        %v3225 = vadd.f32 %v3217, 0.0
        %v3226 = vadd.f32 %v3218, 0.0
        %v3227 = vadd.f32 %v3219, 0.0
        %v3228 = vadd.f32 %v3220, 0.0
        %v3229 = vadd.f32 %v3221, 0.0
        %v3230 = vld [vmem:[%s250 + $0x1] sm:$0x1]
        %v3231 = vld [vmem:[%s250 + $0x5] sm:$0x1]
        %v3232 = vld [vmem:[%s250 + $0x9] sm:$0x1]
        %v3233 = vld [vmem:[%s250 + $0xd] sm:$0x1]
        %v3234 = vld [vmem:[%s250 + $0x11] sm:$0x1]
        %v3235 = vld [vmem:[%s250 + $0x15] sm:$0x1]
        %v3236 = vld [vmem:[%s250 + $0x19] sm:$0x1]
        %v3237 = vld [vmem:[%s250 + $0x1d] sm:$0x1]
        %3238 = vset.pattern.permute.xlu0 1
        %3239 = vperm.xlu0 %3238, %v3186
        %v3240 = vpop.permute.xlu0 %3239
        %v3241 = vrot.slane %v3240, 1
        %v3242 = vrot.slane %v3240, 2
        %v3243 = vrot.slane %v3240, 3
        %v3244 = vrot.slane %v3240, 4
        %v3245 = vrot.slane %v3240, 5
        %v3246 = vrot.slane %v3240, 6
        %v3247 = vrot.slane %v3240, 7
        %v3256 = vmul.f32 %v3230, %v3240
        %v3257 = vmul.f32 %v3231, %v3241
        %v3258 = vmul.f32 %v3232, %v3242
        %v3259 = vmul.f32 %v3233, %v3243
        %v3260 = vmul.f32 %v3234, %v3244
        %v3261 = vmul.f32 %v3235, %v3245
        %v3262 = vmul.f32 %v3236, %v3246
        %v3263 = vmul.f32 %v3237, %v3247
        %v3264 = vadd.f32 %v3222, %v3256
        %v3265 = vadd.f32 %v3223, %v3257
        %v3266 = vadd.f32 %v3224, %v3258
        %v3267 = vadd.f32 %v3225, %v3259
        %v3268 = vadd.f32 %v3226, %v3260
        %v3269 = vadd.f32 %v3227, %v3261
        %v3270 = vadd.f32 %v3228, %v3262
        %v3271 = vadd.f32 %v3229, %v3263
        %v3272 = vld [vmem:[%s250 + $0x2] sm:$0x1]
        %v3273 = vld [vmem:[%s250 + $0x6] sm:$0x1]
        %v3274 = vld [vmem:[%s250 + $0xa] sm:$0x1]
        %v3275 = vld [vmem:[%s250 + $0xe] sm:$0x1]
        %v3276 = vld [vmem:[%s250 + $0x12] sm:$0x1]
        %v3277 = vld [vmem:[%s250 + $0x16] sm:$0x1]
        %v3278 = vld [vmem:[%s250 + $0x1a] sm:$0x1]
        %v3279 = vld [vmem:[%s250 + $0x1e] sm:$0x1]
        %3280 = vset.pattern.permute.xlu0 2
        %3281 = vperm.xlu0 %3280, %v3186
        %v3282 = vpop.permute.xlu0 %3281
        %v3283 = vrot.slane %v3282, 1
        %v3284 = vrot.slane %v3282, 2
        %v3285 = vrot.slane %v3282, 3
        %v3286 = vrot.slane %v3282, 4
        %v3287 = vrot.slane %v3282, 5
        %v3288 = vrot.slane %v3282, 6
        %v3289 = vrot.slane %v3282, 7
        %v3298 = vmul.f32 %v3272, %v3282
        %v3299 = vmul.f32 %v3273, %v3283
        %v3300 = vmul.f32 %v3274, %v3284
        %v3301 = vmul.f32 %v3275, %v3285
        %v3302 = vmul.f32 %v3276, %v3286
        %v3303 = vmul.f32 %v3277, %v3287
        %v3304 = vmul.f32 %v3278, %v3288
        %v3305 = vmul.f32 %v3279, %v3289
        %v3306 = vadd.f32 %v3264, %v3298
        %v3307 = vadd.f32 %v3265, %v3299
        %v3308 = vadd.f32 %v3266, %v3300
        %v3309 = vadd.f32 %v3267, %v3301
        %v3310 = vadd.f32 %v3268, %v3302
        %v3311 = vadd.f32 %v3269, %v3303
        %v3312 = vadd.f32 %v3270, %v3304
        %v3313 = vadd.f32 %v3271, %v3305
        %v3314 = vld [vmem:[%s250 + $0x3] sm:$0x1]
        %v3315 = vld [vmem:[%s250 + $0x7] sm:$0x1]
        %v3316 = vld [vmem:[%s250 + $0xb] sm:$0x1]
        %v3317 = vld [vmem:[%s250 + $0xf] sm:$0x1]
        %v3318 = vld [vmem:[%s250 + $0x13] sm:$0x1]
        %v3319 = vld [vmem:[%s250 + $0x17] sm:$0x1]
        %v3320 = vld [vmem:[%s250 + $0x1b] sm:$0x1]
        %v3321 = vld [vmem:[%s250 + $0x1f] sm:$0x1]
        %3322 = vset.pattern.permute.xlu0 3
        %3323 = vperm.xlu0 %3322, %v3186
        %v3324 = vpop.permute.xlu0 %3323
        %v3325 = vrot.slane %v3324, 1
        %v3326 = vrot.slane %v3324, 2
        %v3327 = vrot.slane %v3324, 3
        %v3328 = vrot.slane %v3324, 4
        %v3329 = vrot.slane %v3324, 5
        %v3330 = vrot.slane %v3324, 6
        %v3331 = vrot.slane %v3324, 7
        %v3340 = vmul.f32 %v3314, %v3324
        %v3341 = vmul.f32 %v3315, %v3325
        %v3342 = vmul.f32 %v3316, %v3326
        %v3343 = vmul.f32 %v3317, %v3327
        %v3344 = vmul.f32 %v3318, %v3328
        %v3345 = vmul.f32 %v3319, %v3329
        %v3346 = vmul.f32 %v3320, %v3330
        %v3347 = vmul.f32 %v3321, %v3331
        %v3348 = vadd.f32 %v3306, %v3340
        %v3349 = vadd.f32 %v3307, %v3341
        %v3350 = vadd.f32 %v3308, %v3342
        %v3351 = vadd.f32 %v3309, %v3343
        %v3352 = vadd.f32 %v3310, %v3344
        %v3353 = vadd.f32 %v3311, %v3345
        %v3354 = vadd.f32 %v3312, %v3346
        %v3355 = vadd.f32 %v3313, %v3347
        %v3364 = vrot.slane %v3349, 7
        %v3365 = vsel %vm1131, %v3364, %v3348
        %v3366 = vrot.slane %v3350, 6
        %v3367 = vsel %vm1133, %v3366, %v3365
        %v3368 = vrot.slane %v3351, 5
        %v3369 = vsel %vm1135, %v3368, %v3367
        %v3370 = vrot.slane %v3352, 4
        %v3371 = vsel %vm1137, %v3370, %v3369
        %v3372 = vrot.slane %v3353, 3
        %v3373 = vsel %vm1139, %v3372, %v3371
        %v3374 = vrot.slane %v3354, 2
        %v3375 = vsel %vm1141, %v3374, %v3373
        %v3376 = vrot.slane %v3355, 1
        %v3377 = vsel %vm1143, %v3376, %v3375
        %3379 = vst [vmem:[%s245] sm:$0xff] %v3377
        %s3380 = sand.u32 %s159, 1
        %s3381 = scalar_lea.sflag [#allocation3], %s3380
        %s3382 = sand.u32 %s159, 1
        %s3383 = smul.addr %s3382, 8
        %s3384 = scalar_lea.vmem [#allocation2], %s3383
        // Predicated region
        $region45: #{lstm_aggregation_weights.1} parent=43 // pred_check
          %p3385 = pneg %p169
        $region46: #{lstm_aggregation_weights.1} parent=43 // pred_check_branch
          %3387 = sbr.rel (%p3385) target = $region48
        $region47: #{lstm_aggregation_weights.1} parent=43 // pred_region
          %3389 = vsyncadd %s3381, 0
          %s3390 = smul.addr %s20, 8
          %s3391 = scalar_lea.hbm %s6, %s3390
          %s3393 = sshll.u32 %s3384, 4
          %s3394 = int_to_ptr.vmem [resolvable:$true] %s3393
          %s3395 = sshll.u32 %s3391, 4
          %s3396 = int_to_ptr.hbm [resolvable:$true] %s3395
          %3398 = dma.vmem_to_hbm [thread:$0]  %s3394, 128, %s3396, %s3381
        $region48: #{lstm_aggregation_weights.1} parent=43 // pred_fallthru
          _
      $region44: #{lstm_aggregation_weights.1} parent=5 // pred_fallthru
        _
      %p3399 = scmp.le.s32.totalorder 2, %s15
      // Predicated region
      $region49: #{lstm_aggregation_weights.1} parent=5 // pred_check
        %p3400 = pneg %p3399
      $region50: #{lstm_aggregation_weights.1} parent=5 // pred_check_branch
        %3402 = sbr.rel (%p3400) target = $region52
      $region51: #{lstm_aggregation_weights.1} parent=5 // pred_region
        %s3403 = ssub.s32 %s15, 2
        // Predicated region
        $region53: #{lstm_aggregation_weights.1} parent=51 // pred_check
          %p3404 = pneg %p175
        $region54: #{lstm_aggregation_weights.1} parent=51 // pred_check_branch
          %3406 = sbr.rel (%p3404) target = $region56
        $region55: #{lstm_aggregation_weights.1} parent=51 // pred_region
          %s3407 = sand.u32 %s160, 1
          %s3408 = scalar_lea.sflag [#allocation3], %s3407
          %s3409 = sand.u32 %s160, 1
          %s3410 = smul.addr %s3409, 8
          %s3411 = scalar_lea.vmem [#allocation2], %s3410
          %3413 = dma.done %s3408, 128
        $region56: #{lstm_aggregation_weights.1} parent=51 // pred_fallthru
          _
      $region52: #{lstm_aggregation_weights.1} parent=5 // pred_fallthru
        _
    $region6: #{lstm_aggregation_weights.1} parent=1 // loop_footer
      %s19 = sadd.s32 1, %s15
    $region7: #{lstm_aggregation_weights.1} parent=1 // loop_footer_branch
      %14 = sbr.rel target = $region3
    $region8: #{lstm_aggregation_weights.1} parent=1 // loop_exit
      _
    %3414 = vsyncpa [#allocation3], 1
    %s3415 = scalar_lea.sflag [#allocation3], 1
    %3416 = vsyncpa %s3415, 1

</llo_original>
